<compile_context>
chip_gen: v6e
topology: v6e:2x2x1
jax: 0.10.0
libtpu: 0.0.40
codegen_flags: <defaults>
</compile_context>

<pallas_src>
import functools
import math

import jax
import jax.numpy as jnp
from jax import lax
from jax.experimental import pallas as pl
from jax.experimental.pallas import tpu as pltpu

EPS = 1e-5                               # PyTorch BatchNorm default eps
VMEM_LIMIT_BYTES = 48 * 1024 * 1024      # fits v7x (64 MiB) with headroom; > v5e default
ROW_TILE_CAP = 1024                      # rows per conv grid step (review: bigger tiles)


def _round_up(x, m):
    return ((x + m - 1) // m) * m


def _row_tile(m, cap=ROW_TILE_CAP):
    """Row tile (multiple of 8) for an (m, K) im2col matrix."""
    if m <= cap:
        return _round_up(max(m, 8), 8)
    for t in range(cap, 7, -8):
        if m % t == 0:
            return t
    return cap  # caller pads M up to a multiple of the tile with zero rows


# ----------------------- conv (single contraction + stats) -------------------

def _conv_kernel(a_ref, w_ref, o_ref, s_ref, q_ref):
    """One MXU matmul per tile; emits bf16 activation tile plus per-tile partial
    per-channel sum / sum^2 (8 sublane-group rows, reduced in the wrapper)."""
    y = jnp.dot(a_ref[...], w_ref[...], preferred_element_type=jnp.float32)
    o_ref[...] = y.astype(o_ref.dtype)
    rows, ct = y.shape
    yg = y.reshape(rows // 8, 8, ct)
    s_ref[...] = jnp.sum(yg, axis=0)
    q_ref[...] = jnp.sum(yg * yg, axis=0)


def _flatten_conv_w(w_ocikk):
    """PyTorch (Cout, Cin, kh, kw) -> (kh*kw*Cin, Cout) bf16, tap-major rows."""
    co, ci, kh, kw = w_ocikk.shape
    return (jnp.transpose(w_ocikk, (2, 3, 1, 0))
            .reshape(kh * kw * ci, co).astype(jnp.bfloat16))


def conv2d_im2col(x_nhwc, w_flat, *, kh, kw, stride, pad):
    """Bias-free conv as im2col matmul.  Returns (out (M, Ct) bf16, per-channel
    sum f32, per-channel sum^2 f32, (N, Ho, Wo)).

    NOTE: padded im2col rows are exactly zero and there is no bias folded before
    the stats accumulation, so stats summed over the padded Mp rows equal stats
    over the true M rows (required for exact train-mode BatchNorm)."""
    N, H, W, c_in = x_nhwc.shape
    Ho = (H + 2 * pad - kh) // stride + 1
    Wo = (W + 2 * pad - kw) // stride + 1
    M = N * Ho * Wo
    K = kh * kw * c_in
    Ct = w_flat.shape[1]

    xp = jnp.pad(x_nhwc, ((0, 0), (pad, pad), (pad, pad), (0, 0)))
    cols = [xp[:, i:i + stride * Ho:stride, j:j + stride * Wo:stride, :]
            for i in range(kh) for j in range(kw)]
    a = jnp.concatenate(cols, axis=-1).reshape(M, K).astype(jnp.bfloat16)

    tm = _row_tile(M)
    Mp = _round_up(M, tm)
    if Mp != M:
        a = jnp.pad(a, ((0, Mp - M), (0, 0)))   # zero rows -> exact zero conv rows
    nt = Mp // tm

    out, s, q = pl.pallas_call(
        _conv_kernel,
        out_shape=(jax.ShapeDtypeStruct((Mp, Ct), jnp.bfloat16),
                   jax.ShapeDtypeStruct((nt * 8, Ct), jnp.float32),
                   jax.ShapeDtypeStruct((nt * 8, Ct), jnp.float32)),
        grid=(nt,),
        in_specs=[pl.BlockSpec((tm, K), lambda i: (i, 0)),
                  pl.BlockSpec((K, Ct), lambda i: (0, 0))],
        out_specs=(pl.BlockSpec((tm, Ct), lambda i: (i, 0)),
                   pl.BlockSpec((8, Ct), lambda i: (i, 0)),
                   pl.BlockSpec((8, Ct), lambda i: (i, 0))),
        compiler_params=pltpu.CompilerParams(
            dimension_semantics=("parallel",),
            vmem_limit_bytes=VMEM_LIMIT_BYTES),
    )(a, w_flat)
    return out[:M], jnp.sum(s, axis=0), jnp.sum(q, axis=0), (N, Ho, Wo)


# ------------------ fused BN-apply / affine / residual / ReLU ----------------

def _affine_kernel(*refs, has_res, res_affine, pre_relu, post_relu, want_stats):
    it = iter(refs)
    x_ref = next(it)
    s_ref = next(it)
    b_ref = next(it)
    r_ref = next(it) if has_res else None
    rs_ref = next(it) if (has_res and res_affine) else None
    rb_ref = next(it) if (has_res and res_affine) else None
    o_ref = next(it)
    sum_ref = next(it) if want_stats else None
    sq_ref = next(it) if want_stats else None

    y = x_ref[...].astype(jnp.float32) * s_ref[...] + b_ref[...]
    if pre_relu:
        y = jnp.maximum(y, 0.0)
    if has_res:
        r = r_ref[...].astype(jnp.float32)
        if res_affine:
            r = r * rs_ref[...] + rb_ref[...]
        y = y + r
    if post_relu:
        y = jnp.maximum(y, 0.0)
    o_ref[...] = y.astype(o_ref.dtype)

    if want_stats:
        sum_ref[...] = jnp.sum(y, axis=0, keepdims=True)
        sq_ref[...] = jnp.sum(y * y, axis=0, keepdims=True)


def affine_apply(x2d, scale, shift, *, res=None, res_scale=None, res_shift=None,
                 pre_relu=False, post_relu=False, want_stats=False):
    """y = post_relu( pre_relu(x*scale + shift) + shortcut ) on a lane-dense
    (N, Ho*Wo*C) layout; optionally emits per-column sum / sum^2 of y.
    Single full-array block (rows == batch, small here).
    TODO(synk): tile rows with per-tile partial stats if batch*rows grows."""
    R, CW = x2d.shape
    has_res = res is not None
    res_affine = res_scale is not None

    full = pl.BlockSpec((R, CW), lambda i: (0, 0))
    vec = pl.BlockSpec((1, CW), lambda i: (0, 0))

    inputs = [x2d, scale.reshape(1, CW), shift.reshape(1, CW)]
    in_specs = [full, vec, vec]
    if has_res:
        inputs.append(res)
        in_specs.append(full)
        if res_affine:
            inputs += [res_scale.reshape(1, CW), res_shift.reshape(1, CW)]
            in_specs += [vec, vec]

    kern = functools.partial(_affine_kernel, has_res=has_res, res_affine=res_affine,
                             pre_relu=pre_relu, post_relu=post_relu,
                             want_stats=want_stats)
    params = pltpu.CompilerParams(dimension_semantics=("arbitrary",),
                                  vmem_limit_bytes=VMEM_LIMIT_BYTES)

    if want_stats:
        y, s, q = pl.pallas_call(
            kern,
            out_shape=(jax.ShapeDtypeStruct((R, CW), jnp.bfloat16),
                       jax.ShapeDtypeStruct((1, CW), jnp.float32),
                       jax.ShapeDtypeStruct((1, CW), jnp.float32)),
            grid=(1,),
            in_specs=in_specs,
            out_specs=(full, vec, vec),
            compiler_params=params,
        )(*inputs)
        return y, s[0], q[0]

    return pl.pallas_call(
        kern,
        out_shape=jax.ShapeDtypeStruct((R, CW), jnp.bfloat16),
        grid=(1,),
        in_specs=in_specs,
        out_specs=full,
        compiler_params=params,
    )(*inputs)


def _bn_scale_shift(s, sq, count, gamma, beta):
    """Per-channel scale/shift for train-mode BatchNorm from sum / sum^2."""
    mean = s / count
    var = jnp.maximum(sq / count - mean * mean, 0.0)
    inv = lax.rsqrt(var + EPS)
    scale = gamma * inv
    shift = beta - mean * scale
    return scale, shift


# ------------------------- fused self-attention block -----------------------

def _attention_kernel(x_ref, s_ref, b_ref, wqkv_ref, wo_ref, bo_ref, o_ref, *, scale):
    x = x_ref[0].astype(jnp.float32)                               # (L, C)
    c = x.shape[-1]
    nx = (x * s_ref[...] + b_ref[...]).astype(jnp.bfloat16)        # BN apply (f32 math)
    qkv = jnp.dot(nx, wqkv_ref[...], preferred_element_type=jnp.float32)   # (L, 3C)
    q = qkv[:, :c].astype(jnp.bfloat16)
    k = qkv[:, c:2 * c].astype(jnp.bfloat16)
    v = qkv[:, 2 * c:].astype(jnp.bfloat16)
    # scores: contract channel axis directly (no explicit K transpose)
    s = lax.dot_general(q, k, (((1,), (1,)), ((), ())),
                        preferred_element_type=jnp.float32) * scale
    m = jnp.max(s, axis=-1, keepdims=True)
    p = jnp.exp(s - m)
    p = p * pl.reciprocal(jnp.sum(p, axis=-1, keepdims=True), approx=True)
    av = jnp.dot(p.astype(jnp.bfloat16), v, preferred_element_type=jnp.float32)
    out = x + jnp.dot(av.astype(jnp.bfloat16), wo_ref[...],
                      preferred_element_type=jnp.float32) + bo_ref[...]
    o_ref[0] = out.astype(o_ref.dtype)


def pallas_attention(x_nlc, bn_scale, bn_shift, wqkv, wo, bo):
    N, L, C = x_nlc.shape
    kern = functools.partial(_attention_kernel, scale=1.0 / math.sqrt(C))
    vec = pl.BlockSpec((1, C), lambda b: (0, 0))
    return pl.pallas_call(
        kern,
        out_shape=jax.ShapeDtypeStruct((N, L, C), jnp.bfloat16),
        grid=(N,),
        in_specs=[pl.BlockSpec((1, L, C), lambda b: (b, 0, 0)),
                  vec, vec,
                  pl.BlockSpec((C, 3 * C), lambda b: (0, 0)),
                  pl.BlockSpec((C, C), lambda b: (0, 0)),
                  vec],
        out_specs=pl.BlockSpec((1, L, C), lambda b: (b, 0, 0)),
        compiler_params=pltpu.CompilerParams(
            dimension_semantics=("parallel",),
            vmem_limit_bytes=VMEM_LIMIT_BYTES),
    )(x_nlc, bn_scale.reshape(1, C), bn_shift.reshape(1, C), wqkv, wo,
      bo.reshape(1, C))


# ------------------------------ parameter init -------------------------------

def conv_weight(key, c_in, c_out, k):
    fan_in = c_in * k * k
    return jax.random.normal(key, (c_out, c_in, k, k), jnp.float32) / math.sqrt(fan_in)


def resblock_init(key, c_in, c_out, *, downsample, kernel_size, use_attn):
    ks = jax.random.split(key, 6)
    cfg = {"downsample": downsample, "pad": (kernel_size - 1) // 2,
           "use_attn": use_attn}
    # Conv biases are intentionally omitted: every conv below feeds a train-mode
    # BatchNorm whose batch-mean subtraction cancels a per-channel bias exactly.
    p = {
        "conv1_w": conv_weight(ks[0], c_in, c_out, kernel_size),
        "conv2_w": conv_weight(ks[1], c_out, c_out, kernel_size),
        "bn1_g": jnp.ones((c_out,), jnp.float32),
        "bn1_b": jnp.zeros((c_out,), jnp.float32),
        "bn2_g": jnp.ones((c_out,), jnp.float32),
        "bn2_b": jnp.zeros((c_out,), jnp.float32),
    }
    if downsample:
        p["sc_conv_w"] = conv_weight(ks[2], c_in, c_out, 1)
        p["sc_bn_g"] = jnp.ones((c_out,), jnp.float32)
        p["sc_bn_b"] = jnp.zeros((c_out,), jnp.float32)
    if use_attn:
        p["attn"] = {
            "norm_g": jnp.ones((c_out,), jnp.float32),
            "norm_b": jnp.zeros((c_out,), jnp.float32),
            "wqkv": jax.random.normal(ks[3], (c_out, 3 * c_out),
                                      jnp.float32) / math.sqrt(c_out),
            "wo": jax.random.normal(ks[4], (c_out, c_out),
                                    jnp.float32) / math.sqrt(c_out),
            "out_b": jax.random.normal(ks[5], (c_out,), jnp.float32) * 0.01,
        }
    return cfg, p


def build_model(key, *, dim, in_channels, initial_features, growth_factor,
                kernel_size, stub_kernel_size, layers, attn_layers):
    assert dim == 2  # TODO(synk): dim=3 (Conv3d/BatchNorm3d) variant not implemented.
    keys = jax.random.split(key, 2 * layers + 1)
    config = {"stem": {"pad": (stub_kernel_size - 1) // 2}, "blocks": []}
    params = {
        "stem": {
            "w": conv_weight(keys[0], in_channels, initial_features, stub_kernel_size),
            "bn_g": jnp.ones((initial_features,), jnp.float32),
            "bn_b": jnp.zeros((initial_features,), jnp.float32),
        },
        "blocks": [],
    }
    cur = initial_features
    for layer_idx in range(layers):
        out_c = int(growth_factor * cur)
        use_attn = layer_idx in attn_layers
        c1, p1 = resblock_init(keys[1 + 2 * layer_idx], cur, out_c,
                               downsample=True, kernel_size=kernel_size,
                               use_attn=use_attn)
        c2, p2 = resblock_init(keys[2 + 2 * layer_idx], out_c, out_c,
                               downsample=False, kernel_size=kernel_size,
                               use_attn=use_attn)
        config["blocks"].append((c1, c2))
        params["blocks"].append((p1, p2))
        cur = out_c
    config["out_features"] = cur
    return config, params


# -------------------------------- forward pass -------------------------------

def stem_forward(cfg, p, x_nhwc):
    c0, _, ksz, _ = p["w"].shape
    w = _flatten_conv_w(p["w"])
    h, s, q, (N, Ho, Wo) = conv2d_im2col(x_nhwc, w, kh=ksz, kw=ksz,
                                         stride=2, pad=cfg["pad"])
    M = N * Ho * Wo
    scale, shift = _bn_scale_shift(s, q, M, p["bn_g"], p["bn_b"])
    y = affine_apply(h.reshape(N, Ho * Wo * c0),
                     jnp.tile(scale, Ho * Wo), jnp.tile(shift, Ho * Wo),
                     post_relu=True)
    return y.reshape(N, Ho, Wo, c0)


def resblock_forward(cfg, p, x_nhwc):
    c_out, c_in, ksz, _ = p["conv1_w"].shape
    stride1 = 2 if cfg["downsample"] else 1
    pad = cfg["pad"]

    # conv1 (+ fused 1x1 stride-2 shortcut conv for the downsample path)
    w1 = _flatten_conv_w(p["conv1_w"])                        # (T*Cin, Cout)
    if cfg["downsample"]:
        # shortcut input == centre tap of conv1's patch -> extra output columns
        wsc = p["sc_conv_w"][:, :, 0, 0].T.astype(jnp.bfloat16)        # (Cin, Cout)
        center = (pad * ksz + pad) * c_in
        wsc_full = jnp.zeros((w1.shape[0], c_out), jnp.bfloat16)
        wsc_full = wsc_full.at[center:center + c_in, :].set(wsc)
        wcomb = jnp.concatenate([w1, wsc_full], axis=1)                # (T*Cin, 2*Cout)
    else:
        wcomb = w1

    h, s, q, (N, Ho, Wo) = conv2d_im2col(x_nhwc, wcomb, kh=ksz, kw=ksz,
                                         stride=stride1, pad=pad)
    M = N * Ho * Wo
    HWC = Ho * Wo * c_out

    if cfg["downsample"]:
        h1, sc2d = h[:, :c_out], h[:, c_out:].reshape(N, HWC)
        s1, q1 = s[:c_out], q[:c_out]
        sc_scale, sc_shift = _bn_scale_shift(s[c_out:], q[c_out:], M,
                                             p["sc_bn_g"], p["sc_bn_b"])
        sc_scale = jnp.tile(sc_scale, Ho * Wo)
        sc_shift = jnp.tile(sc_shift, Ho * Wo)
    else:
        h1, s1, q1 = h, s, q
        sc2d = x_nhwc.reshape(N, HWC)          # identity shortcut: plain add
        sc_scale = sc_shift = None

    # bn1 + relu (fused apply), bf16 out feeding conv2's im2col
    bn1_scale, bn1_shift = _bn_scale_shift(s1, q1, M, p["bn1_g"], p["bn1_b"])
    a1 = affine_apply(h1.reshape(N, HWC), jnp.tile(bn1_scale, Ho * Wo),
                      jnp.tile(bn1_shift, Ho * Wo), post_relu=True)

    # conv2 (+ stats), then bn2 + relu + shortcut(-BN) + add + relu in one pass;
    # that same pass emits the batch stats needed by the attention BatchNorm.
    w2 = _flatten_conv_w(p["conv2_w"])
    h2, s2, q2, _ = conv2d_im2col(a1.reshape(N, Ho, Wo, c_out), w2,
                                  kh=ksz, kw=ksz, stride=1, pad=pad)
    bn2_scale, bn2_shift = _bn_scale_shift(s2, q2, M, p["bn2_g"], p["bn2_b"])
    want_stats = cfg["use_attn"]
    out = affine_apply(h2.reshape(N, HWC),
                       jnp.tile(bn2_scale, Ho * Wo), jnp.tile(bn2_shift, Ho * Wo),
                       res=sc2d, res_scale=sc_scale, res_shift=sc_shift,
                       pre_relu=True, post_relu=True, want_stats=want_stats)

    if not want_stats:
        return out.reshape(N, Ho, Wo, c_out)

    y2d, ys, yq = out
    ys = ys.reshape(Ho * Wo, c_out).sum(axis=0)
    yq = yq.reshape(Ho * Wo, c_out).sum(axis=0)
    a = p["attn"]
    n_scale, n_shift = _bn_scale_shift(ys, yq, M, a["norm_g"], a["norm_b"])
    out_nlc = pallas_attention(
        y2d.reshape(N, Ho * Wo, c_out), n_scale, n_shift,
        a["wqkv"].astype(jnp.bfloat16), a["wo"].astype(jnp.bfloat16), a["out_b"])
    return out_nlc.reshape(N, Ho, Wo, c_out)


def resnet_body_forward(config, params, x_nchw, position_emb=None):
    # TODO(synk): position_emb / FeatureWiseAffine path not implemented
    #             (default position_emb_dim=None never exercises it).
    del position_emb
    x = jnp.transpose(x_nchw, (0, 2, 3, 1)).astype(jnp.float32)   # NCHW -> NHWC
    x = stem_forward(config["stem"], params["stem"], x)
    for (c1, c2), (p1, p2) in zip(config["blocks"], params["blocks"]):
        x = resblock_forward(c1, p1, x)
        x = resblock_forward(c2, p2, x)
    return jnp.transpose(x, (0, 3, 1, 2)).astype(jnp.float32)     # back to NCHW


# ------------------------------------ main -----------------------------------

if __name__ == "__main__":
    key = jax.random.PRNGKey(0)
    pkey, xkey = jax.random.split(key)

    # ResNetBody(dim=2, in_channels=4, initial_features=8, growth_factor=2.0,
    #            kernel_size=3, stub_kernel_size=7, layers=2, attn_layers=(1,))
    config, params = build_model(
        pkey, dim=2, in_channels=4, initial_features=8, growth_factor=2.0,
        kernel_size=3, stub_kernel_size=7, layers=2, attn_layers=(1,),
    )

    forward = jax.jit(functools.partial(resnet_body_forward, config))

    x = jax.random.normal(xkey, (2, 4, 16, 16), jnp.float32)  # NCHW, like PyTorch
    out = jax.block_until_ready(forward(params, x))

    # 16 -> stem/2 -> 8 -> layer0/2 -> 4 -> layer1/2 -> 2 ; channels 8*2*2 = 32
    assert out.shape == (2, config["out_features"], 2, 2), out.shape
    assert bool(jnp.all(jnp.isfinite(out)))
    print("KERNEL_OK")
</pallas_src>

<mosaic_0001>
module attributes {stable_mosaic.version = 11 : i64} {
  func.func @_conv_kernel(%arg0: i32, %arg1: memref<128x196xbf16, #tpu.memory_space<vmem>>, %arg2: memref<196x8xbf16, #tpu.memory_space<vmem>>, %arg3: memref<128x8xbf16, #tpu.memory_space<vmem>>, %arg4: memref<8x8xf32, #tpu.memory_space<vmem>>, %arg5: memref<8x8xf32, #tpu.memory_space<vmem>>) attributes {dimension_semantics = [#tpu.dimension_semantics<parallel>], iteration_bounds = array<i64: 1>, scalar_prefetch = 0 : i64, scratch_operands = 0 : i64, tpu.core_type = #tpu.core_type<tc>, window_params = [{transform_indices = @transform_0, window_bounds = array<i64: 128, 196>}, {pipeline_mode = #tpu.pipeline_mode<synchronous>, transform_indices = @transform_1, window_bounds = array<i64: 196, 8>}, {transform_indices = @transform_2, window_bounds = array<i64: 128, 8>}, {transform_indices = @transform_3, window_bounds = array<i64: 8, 8>}, {transform_indices = @transform_4, window_bounds = array<i64: 8, 8>}]} {
    %c0 = arith.constant 0 : index
    %c0_0 = arith.constant 0 : index
    %0 = vector.load %arg1[%c0, %c0_0] : memref<128x196xbf16, #tpu.memory_space<vmem>>, vector<128x196xbf16>
    %c0_1 = arith.constant 0 : index
    %c0_2 = arith.constant 0 : index
    %1 = vector.load %arg2[%c0_1, %c0_2] : memref<196x8xbf16, #tpu.memory_space<vmem>>, vector<196x8xbf16>
    %cst = arith.constant dense<0.000000e+00> : vector<128x8xf32>
    %2 = tpu.matmul %0, %1, %cst {dimension_numbers = #tpu.dot_dimension_numbers<[1], [0], [0], [1], [0, 0, 1, 1], [], []>} : vector<128x196xbf16>, vector<196x8xbf16>, vector<128x8xf32> -> vector<128x8xf32>
    %3 = arith.truncf %2 : vector<128x8xf32> to vector<128x8xbf16>
    %c0_3 = arith.constant 0 : index
    %c0_4 = arith.constant 0 : index
    %4 = vector.load %arg3[%c0_3, %c0_4] : memref<128x8xbf16, #tpu.memory_space<vmem>>, vector<128x8xbf16>
    tpu.vector_store %arg3[%c0_3, %c0_4], %3 {strides = array<i32>} : memref<128x8xbf16, #tpu.memory_space<vmem>>, vector<128x8xbf16>,
    %5 = vector.shape_cast %2 : vector<128x8xf32> to vector<16x8x8xf32>
    %cst_5 = arith.constant dense<0.000000e+00> : vector<8x8xf32>
    %6 = vector.multi_reduction <add>, %5, %cst_5 [0] : vector<16x8x8xf32> to vector<8x8xf32>
    %c0_6 = arith.constant 0 : index
    %c0_7 = arith.constant 0 : index
    %7 = vector.load %arg4[%c0_6, %c0_7] : memref<8x8xf32, #tpu.memory_space<vmem>>, vector<8x8xf32>
    tpu.vector_store %arg4[%c0_6, %c0_7], %6 {strides = array<i32>} : memref<8x8xf32, #tpu.memory_space<vmem>>, vector<8x8xf32>,
    %8 = arith.mulf %5, %5 : vector<16x8x8xf32>
    %cst_8 = arith.constant dense<0.000000e+00> : vector<8x8xf32>
    %9 = vector.multi_reduction <add>, %8, %cst_8 [0] : vector<16x8x8xf32> to vector<8x8xf32>
    %c0_9 = arith.constant 0 : index
    %c0_10 = arith.constant 0 : index
    %10 = vector.load %arg5[%c0_9, %c0_10] : memref<8x8xf32, #tpu.memory_space<vmem>>, vector<8x8xf32>
    tpu.vector_store %arg5[%c0_9, %c0_10], %9 {strides = array<i32>} : memref<8x8xf32, #tpu.memory_space<vmem>>, vector<8x8xf32>,
    return
  }
  func.func @transform_0(%arg0: i32) -> (i32, i32) {
    %c0_i32 = arith.constant 0 : i32
    %c0_i32_0 = arith.constant 0 : i32
    return %arg0, %c0_i32 : i32, i32
  }
  func.func @transform_1(%arg0: i32) -> (i32, i32) {
    %c0_i32 = arith.constant 0 : i32
    %c0_i32_0 = arith.constant 0 : i32
    %c0_i32_1 = arith.constant 0 : i32
    return %c0_i32, %c0_i32_0 : i32, i32
  }
  func.func @transform_2(%arg0: i32) -> (i32, i32) {
    %c0_i32 = arith.constant 0 : i32
    %c0_i32_0 = arith.constant 0 : i32
    return %arg0, %c0_i32 : i32, i32
  }
  func.func @transform_3(%arg0: i32) -> (i32, i32) {
    %c0_i32 = arith.constant 0 : i32
    %c0_i32_0 = arith.constant 0 : i32
    return %arg0, %c0_i32 : i32, i32
  }
  func.func @transform_4(%arg0: i32) -> (i32, i32) {
    %c0_i32 = arith.constant 0 : i32
    %c0_i32_0 = arith.constant 0 : i32
    return %arg0, %c0_i32 : i32, i32
  }
}

module attributes {stable_mosaic.version = 11 : i64} {
  func.func @_affine_kernel(%arg0: i32, %arg1: memref<2x512xbf16, #tpu.memory_space<vmem>>, %arg2: memref<1x512xf32, #tpu.memory_space<vmem>>, %arg3: memref<1x512xf32, #tpu.memory_space<vmem>>, %arg4: memref<2x512xbf16, #tpu.memory_space<vmem>>) attributes {dimension_semantics = [#tpu.dimension_semantics<arbitrary>], iteration_bounds = array<i64: 1>, scalar_prefetch = 0 : i64, scratch_operands = 0 : i64, tpu.core_type = #tpu.core_type<tc>, window_params = [{pipeline_mode = #tpu.pipeline_mode<synchronous>, transform_indices = @transform_0, window_bounds = array<i64: 2, 512>}, {pipeline_mode = #tpu.pipeline_mode<synchronous>, transform_indices = @transform_1, window_bounds = array<i64: 1, 512>}, {pipeline_mode = #tpu.pipeline_mode<synchronous>, transform_indices = @transform_2, window_bounds = array<i64: 1, 512>}, {pipeline_mode = #tpu.pipeline_mode<synchronous>, transform_indices = @transform_3, window_bounds = array<i64: 2, 512>}]} {
    %c0 = arith.constant 0 : index
    %c0_0 = arith.constant 0 : index
    %0 = vector.load %arg1[%c0, %c0_0] : memref<2x512xbf16, #tpu.memory_space<vmem>>, vector<2x512xbf16>
    %1 = arith.extf %0 : vector<2x512xbf16> to vector<2x512xf32>
    %c0_1 = arith.constant 0 : index
    %c0_2 = arith.constant 0 : index
    %2 = vector.load %arg2[%c0_1, %c0_2] : memref<1x512xf32, #tpu.memory_space<vmem>>, vector<1x512xf32>
    %3 = vector.broadcast %2 : vector<1x512xf32> to vector<2x512xf32>
    %4 = arith.mulf %1, %3 : vector<2x512xf32>
    %c0_3 = arith.constant 0 : index
    %c0_4 = arith.constant 0 : index
    %5 = vector.load %arg3[%c0_3, %c0_4] : memref<1x512xf32, #tpu.memory_space<vmem>>, vector<1x512xf32>
    %6 = vector.broadcast %5 : vector<1x512xf32> to vector<2x512xf32>
    %7 = arith.addf %4, %6 : vector<2x512xf32>
    %cst = arith.constant 0.000000e+00 : f32
    %8 = vector.broadcast %cst : f32 to vector<2x512xf32>
    %9 = arith.maximumf %7, %8 : vector<2x512xf32>
    %10 = arith.truncf %9 : vector<2x512xf32> to vector<2x512xbf16>
    %c0_5 = arith.constant 0 : index
    %c0_6 = arith.constant 0 : index
    %11 = vector.load %arg4[%c0_5, %c0_6] : memref<2x512xbf16, #tpu.memory_space<vmem>>, vector<2x512xbf16>
    tpu.vector_store %arg4[%c0_5, %c0_6], %10 {strides = array<i32>} : memref<2x512xbf16, #tpu.memory_space<vmem>>, vector<2x512xbf16>,
    return
  }
  func.func @transform_0(%arg0: i32) -> (i32, i32) {
    %c0_i32 = arith.constant 0 : i32
    %c0_i32_0 = arith.constant 0 : i32
    %c0_i32_1 = arith.constant 0 : i32
    return %c0_i32, %c0_i32_0 : i32, i32
  }
  func.func @transform_1(%arg0: i32) -> (i32, i32) {
    %c0_i32 = arith.constant 0 : i32
    %c0_i32_0 = arith.constant 0 : i32
    %c0_i32_1 = arith.constant 0 : i32
    return %c0_i32, %c0_i32_0 : i32, i32
  }
  func.func @transform_2(%arg0: i32) -> (i32, i32) {
    %c0_i32 = arith.constant 0 : i32
    %c0_i32_0 = arith.constant 0 : i32
    %c0_i32_1 = arith.constant 0 : i32
    return %c0_i32, %c0_i32_0 : i32, i32
  }
  func.func @transform_3(%arg0: i32) -> (i32, i32) {
    %c0_i32 = arith.constant 0 : i32
    %c0_i32_0 = arith.constant 0 : i32
    %c0_i32_1 = arith.constant 0 : i32
    return %c0_i32, %c0_i32_0 : i32, i32
  }
}

module attributes {stable_mosaic.version = 11 : i64} {
  func.func @_conv_kernel(%arg0: i32, %arg1: memref<32x72xbf16, #tpu.memory_space<vmem>>, %arg2: memref<72x32xbf16, #tpu.memory_space<vmem>>, %arg3: memref<32x32xbf16, #tpu.memory_space<vmem>>, %arg4: memref<8x32xf32, #tpu.memory_space<vmem>>, %arg5: memref<8x32xf32, #tpu.memory_space<vmem>>) attributes {dimension_semantics = [#tpu.dimension_semantics<parallel>], iteration_bounds = array<i64: 1>, scalar_prefetch = 0 : i64, scratch_operands = 0 : i64, tpu.core_type = #tpu.core_type<tc>, window_params = [{transform_indices = @transform_0, window_bounds = array<i64: 32, 72>}, {pipeline_mode = #tpu.pipeline_mode<synchronous>, transform_indices = @transform_1, window_bounds = array<i64: 72, 32>}, {transform_indices = @transform_2, window_bounds = array<i64: 32, 32>}, {transform_indices = @transform_3, window_bounds = array<i64: 8, 32>}, {transform_indices = @transform_4, window_bounds = array<i64: 8, 32>}]} {
    %c0 = arith.constant 0 : index
    %c0_0 = arith.constant 0 : index
    %0 = vector.load %arg1[%c0, %c0_0] : memref<32x72xbf16, #tpu.memory_space<vmem>>, vector<32x72xbf16>
    %c0_1 = arith.constant 0 : index
    %c0_2 = arith.constant 0 : index
    %1 = vector.load %arg2[%c0_1, %c0_2] : memref<72x32xbf16, #tpu.memory_space<vmem>>, vector<72x32xbf16>
    %cst = arith.constant dense<0.000000e+00> : vector<32x32xf32>
    %2 = tpu.matmul %0, %1, %cst {dimension_numbers = #tpu.dot_dimension_numbers<[1], [0], [0], [1], [0, 0, 1, 1], [], []>} : vector<32x72xbf16>, vector<72x32xbf16>, vector<32x32xf32> -> vector<32x32xf32>
    %3 = arith.truncf %2 : vector<32x32xf32> to vector<32x32xbf16>
    %c0_3 = arith.constant 0 : index
    %c0_4 = arith.constant 0 : index
    %4 = vector.load %arg3[%c0_3, %c0_4] : memref<32x32xbf16, #tpu.memory_space<vmem>>, vector<32x32xbf16>
    tpu.vector_store %arg3[%c0_3, %c0_4], %3 {strides = array<i32>} : memref<32x32xbf16, #tpu.memory_space<vmem>>, vector<32x32xbf16>,
    %5 = vector.shape_cast %2 : vector<32x32xf32> to vector<4x8x32xf32>
    %cst_5 = arith.constant dense<0.000000e+00> : vector<8x32xf32>
    %6 = vector.multi_reduction <add>, %5, %cst_5 [0] : vector<4x8x32xf32> to vector<8x32xf32>
    %c0_6 = arith.constant 0 : index
    %c0_7 = arith.constant 0 : index
    %7 = vector.load %arg4[%c0_6, %c0_7] : memref<8x32xf32, #tpu.memory_space<vmem>>, vector<8x32xf32>
    tpu.vector_store %arg4[%c0_6, %c0_7], %6 {strides = array<i32>} : memref<8x32xf32, #tpu.memory_space<vmem>>, vector<8x32xf32>,
    %8 = arith.mulf %5, %5 : vector<4x8x32xf32>
    %cst_8 = arith.constant dense<0.000000e+00> : vector<8x32xf32>
    %9 = vector.multi_reduction <add>, %8, %cst_8 [0] : vector<4x8x32xf32> to vector<8x32xf32>
    %c0_9 = arith.constant 0 : index
    %c0_10 = arith.constant 0 : index
    %10 = vector.load %arg5[%c0_9, %c0_10] : memref<8x32xf32, #tpu.memory_space<vmem>>, vector<8x32xf32>
    tpu.vector_store %arg5[%c0_9, %c0_10], %9 {strides = array<i32>} : memref<8x32xf32, #tpu.memory_space<vmem>>, vector<8x32xf32>,
    return
  }
  func.func @transform_0(%arg0: i32) -> (i32, i32) {
    %c0_i32 = arith.constant 0 : i32
    %c0_i32_0 = arith.constant 0 : i32
    return %arg0, %c0_i32 : i32, i32
  }
  func.func @transform_1(%arg0: i32) -> (i32, i32) {
    %c0_i32 = arith.constant 0 : i32
    %c0_i32_0 = arith.constant 0 : i32
    %c0_i32_1 = arith.constant 0 : i32
    return %c0_i32, %c0_i32_0 : i32, i32
  }
  func.func @transform_2(%arg0: i32) -> (i32, i32) {
    %c0_i32 = arith.constant 0 : i32
    %c0_i32_0 = arith.constant 0 : i32
    return %arg0, %c0_i32 : i32, i32
  }
  func.func @transform_3(%arg0: i32) -> (i32, i32) {
    %c0_i32 = arith.constant 0 : i32
    %c0_i32_0 = arith.constant 0 : i32
    return %arg0, %c0_i32 : i32, i32
  }
  func.func @transform_4(%arg0: i32) -> (i32, i32) {
    %c0_i32 = arith.constant 0 : i32
    %c0_i32_0 = arith.constant 0 : i32
    return %arg0, %c0_i32 : i32, i32
  }
}

module attributes {stable_mosaic.version = 11 : i64} {
  func.func @_affine_kernel(%arg0: i32, %arg1: memref<2x256xbf16, #tpu.memory_space<vmem>>, %arg2: memref<1x256xf32, #tpu.memory_space<vmem>>, %arg3: memref<1x256xf32, #tpu.memory_space<vmem>>, %arg4: memref<2x256xbf16, #tpu.memory_space<vmem>>) attributes {dimension_semantics = [#tpu.dimension_semantics<arbitrary>], iteration_bounds = array<i64: 1>, scalar_prefetch = 0 : i64, scratch_operands = 0 : i64, tpu.core_type = #tpu.core_type<tc>, window_params = [{pipeline_mode = #tpu.pipeline_mode<synchronous>, transform_indices = @transform_0, window_bounds = array<i64: 2, 256>}, {pipeline_mode = #tpu.pipeline_mode<synchronous>, transform_indices = @transform_1, window_bounds = array<i64: 1, 256>}, {pipeline_mode = #tpu.pipeline_mode<synchronous>, transform_indices = @transform_2, window_bounds = array<i64: 1, 256>}, {pipeline_mode = #tpu.pipeline_mode<synchronous>, transform_indices = @transform_3, window_bounds = array<i64: 2, 256>}]} {
    %c0 = arith.constant 0 : index
    %c0_0 = arith.constant 0 : index
    %0 = vector.load %arg1[%c0, %c0_0] : memref<2x256xbf16, #tpu.memory_space<vmem>>, vector<2x256xbf16>
    %1 = arith.extf %0 : vector<2x256xbf16> to vector<2x256xf32>
    %c0_1 = arith.constant 0 : index
    %c0_2 = arith.constant 0 : index
    %2 = vector.load %arg2[%c0_1, %c0_2] : memref<1x256xf32, #tpu.memory_space<vmem>>, vector<1x256xf32>
    %3 = vector.broadcast %2 : vector<1x256xf32> to vector<2x256xf32>
    %4 = arith.mulf %1, %3 : vector<2x256xf32>
    %c0_3 = arith.constant 0 : index
    %c0_4 = arith.constant 0 : index
    %5 = vector.load %arg3[%c0_3, %c0_4] : memref<1x256xf32, #tpu.memory_space<vmem>>, vector<1x256xf32>
    %6 = vector.broadcast %5 : vector<1x256xf32> to vector<2x256xf32>
    %7 = arith.addf %4, %6 : vector<2x256xf32>
    %cst = arith.constant 0.000000e+00 : f32
    %8 = vector.broadcast %cst : f32 to vector<2x256xf32>
    %9 = arith.maximumf %7, %8 : vector<2x256xf32>
    %10 = arith.truncf %9 : vector<2x256xf32> to vector<2x256xbf16>
    %c0_5 = arith.constant 0 : index
    %c0_6 = arith.constant 0 : index
    %11 = vector.load %arg4[%c0_5, %c0_6] : memref<2x256xbf16, #tpu.memory_space<vmem>>, vector<2x256xbf16>
    tpu.vector_store %arg4[%c0_5, %c0_6], %10 {strides = array<i32>} : memref<2x256xbf16, #tpu.memory_space<vmem>>, vector<2x256xbf16>,
    return
  }
  func.func @transform_0(%arg0: i32) -> (i32, i32) {
    %c0_i32 = arith.constant 0 : i32
    %c0_i32_0 = arith.constant 0 : i32
    %c0_i32_1 = arith.constant 0 : i32
    return %c0_i32, %c0_i32_0 : i32, i32
  }
  func.func @transform_1(%arg0: i32) -> (i32, i32) {
    %c0_i32 = arith.constant 0 : i32
    %c0_i32_0 = arith.constant 0 : i32
    %c0_i32_1 = arith.constant 0 : i32
    return %c0_i32, %c0_i32_0 : i32, i32
  }
  func.func @transform_2(%arg0: i32) -> (i32, i32) {
    %c0_i32 = arith.constant 0 : i32
    %c0_i32_0 = arith.constant 0 : i32
    %c0_i32_1 = arith.constant 0 : i32
    return %c0_i32, %c0_i32_0 : i32, i32
  }
  func.func @transform_3(%arg0: i32) -> (i32, i32) {
    %c0_i32 = arith.constant 0 : i32
    %c0_i32_0 = arith.constant 0 : i32
    %c0_i32_1 = arith.constant 0 : i32
    return %c0_i32, %c0_i32_0 : i32, i32
  }
}

module attributes {stable_mosaic.version = 11 : i64} {
  func.func @_conv_kernel(%arg0: i32, %arg1: memref<32x144xbf16, #tpu.memory_space<vmem>>, %arg2: memref<144x16xbf16, #tpu.memory_space<vmem>>, %arg3: memref<32x16xbf16, #tpu.memory_space<vmem>>, %arg4: memref<8x16xf32, #tpu.memory_space<vmem>>, %arg5: memref<8x16xf32, #tpu.memory_space<vmem>>) attributes {dimension_semantics = [#tpu.dimension_semantics<parallel>], iteration_bounds = array<i64: 1>, scalar_prefetch = 0 : i64, scratch_operands = 0 : i64, tpu.core_type = #tpu.core_type<tc>, window_params = [{transform_indices = @transform_0, window_bounds = array<i64: 32, 144>}, {pipeline_mode = #tpu.pipeline_mode<synchronous>, transform_indices = @transform_1, window_bounds = array<i64: 144, 16>}, {transform_indices = @transform_2, window_bounds = array<i64: 32, 16>}, {transform_indices = @transform_3, window_bounds = array<i64: 8, 16>}, {transform_indices = @transform_4, window_bounds = array<i64: 8, 16>}]} {
    %c0 = arith.constant 0 : index
    %c0_0 = arith.constant 0 : index
    %0 = vector.load %arg1[%c0, %c0_0] : memref<32x144xbf16, #tpu.memory_space<vmem>>, vector<32x144xbf16>
    %c0_1 = arith.constant 0 : index
    %c0_2 = arith.constant 0 : index
    %1 = vector.load %arg2[%c0_1, %c0_2] : memref<144x16xbf16, #tpu.memory_space<vmem>>, vector<144x16xbf16>
    %cst = arith.constant dense<0.000000e+00> : vector<32x16xf32>
    %2 = tpu.matmul %0, %1, %cst {dimension_numbers = #tpu.dot_dimension_numbers<[1], [0], [0], [1], [0, 0, 1, 1], [], []>} : vector<32x144xbf16>, vector<144x16xbf16>, vector<32x16xf32> -> vector<32x16xf32>
    %3 = arith.truncf %2 : vector<32x16xf32> to vector<32x16xbf16>
    %c0_3 = arith.constant 0 : index
    %c0_4 = arith.constant 0 : index
    %4 = vector.load %arg3[%c0_3, %c0_4] : memref<32x16xbf16, #tpu.memory_space<vmem>>, vector<32x16xbf16>
    tpu.vector_store %arg3[%c0_3, %c0_4], %3 {strides = array<i32>} : memref<32x16xbf16, #tpu.memory_space<vmem>>, vector<32x16xbf16>,
    %5 = vector.shape_cast %2 : vector<32x16xf32> to vector<4x8x16xf32>
    %cst_5 = arith.constant dense<0.000000e+00> : vector<8x16xf32>
    %6 = vector.multi_reduction <add>, %5, %cst_5 [0] : vector<4x8x16xf32> to vector<8x16xf32>
    %c0_6 = arith.constant 0 : index
    %c0_7 = arith.constant 0 : index
    %7 = vector.load %arg4[%c0_6, %c0_7] : memref<8x16xf32, #tpu.memory_space<vmem>>, vector<8x16xf32>
    tpu.vector_store %arg4[%c0_6, %c0_7], %6 {strides = array<i32>} : memref<8x16xf32, #tpu.memory_space<vmem>>, vector<8x16xf32>,
    %8 = arith.mulf %5, %5 : vector<4x8x16xf32>
    %cst_8 = arith.constant dense<0.000000e+00> : vector<8x16xf32>
    %9 = vector.multi_reduction <add>, %8, %cst_8 [0] : vector<4x8x16xf32> to vector<8x16xf32>
    %c0_9 = arith.constant 0 : index
    %c0_10 = arith.constant 0 : index
    %10 = vector.load %arg5[%c0_9, %c0_10] : memref<8x16xf32, #tpu.memory_space<vmem>>, vector<8x16xf32>
    tpu.vector_store %arg5[%c0_9, %c0_10], %9 {strides = array<i32>} : memref<8x16xf32, #tpu.memory_space<vmem>>, vector<8x16xf32>,
    return
  }
  func.func @transform_0(%arg0: i32) -> (i32, i32) {
    %c0_i32 = arith.constant 0 : i32
    %c0_i32_0 = arith.constant 0 : i32
    return %arg0, %c0_i32 : i32, i32
  }
  func.func @transform_1(%arg0: i32) -> (i32, i32) {
    %c0_i32 = arith.constant 0 : i32
    %c0_i32_0 = arith.constant 0 : i32
    %c0_i32_1 = arith.constant 0 : i32
    return %c0_i32, %c0_i32_0 : i32, i32
  }
  func.func @transform_2(%arg0: i32) -> (i32, i32) {
    %c0_i32 = arith.constant 0 : i32
    %c0_i32_0 = arith.constant 0 : i32
    return %arg0, %c0_i32 : i32, i32
  }
  func.func @transform_3(%arg0: i32) -> (i32, i32) {
    %c0_i32 = arith.constant 0 : i32
    %c0_i32_0 = arith.constant 0 : i32
    return %arg0, %c0_i32 : i32, i32
  }
  func.func @transform_4(%arg0: i32) -> (i32, i32) {
    %c0_i32 = arith.constant 0 : i32
    %c0_i32_0 = arith.constant 0 : i32
    return %arg0, %c0_i32 : i32, i32
  }
}

module attributes {stable_mosaic.version = 11 : i64} {
  func.func @_affine_kernel(%arg0: i32, %arg1: memref<2x256xbf16, #tpu.memory_space<vmem>>, %arg2: memref<1x256xf32, #tpu.memory_space<vmem>>, %arg3: memref<1x256xf32, #tpu.memory_space<vmem>>, %arg4: memref<2x256xbf16, #tpu.memory_space<vmem>>, %arg5: memref<1x256xf32, #tpu.memory_space<vmem>>, %arg6: memref<1x256xf32, #tpu.memory_space<vmem>>, %arg7: memref<2x256xbf16, #tpu.memory_space<vmem>>) attributes {dimension_semantics = [#tpu.dimension_semantics<arbitrary>], iteration_bounds = array<i64: 1>, scalar_prefetch = 0 : i64, scratch_operands = 0 : i64, tpu.core_type = #tpu.core_type<tc>, window_params = [{pipeline_mode = #tpu.pipeline_mode<synchronous>, transform_indices = @transform_0, window_bounds = array<i64: 2, 256>}, {pipeline_mode = #tpu.pipeline_mode<synchronous>, transform_indices = @transform_1, window_bounds = array<i64: 1, 256>}, {pipeline_mode = #tpu.pipeline_mode<synchronous>, transform_indices = @transform_2, window_bounds = array<i64: 1, 256>}, {pipeline_mode = #tpu.pipeline_mode<synchronous>, transform_indices = @transform_3, window_bounds = array<i64: 2, 256>}, {pipeline_mode = #tpu.pipeline_mode<synchronous>, transform_indices = @transform_4, window_bounds = array<i64: 1, 256>}, {pipeline_mode = #tpu.pipeline_mode<synchronous>, transform_indices = @transform_5, window_bounds = array<i64: 1, 256>}, {pipeline_mode = #tpu.pipeline_mode<synchronous>, transform_indices = @transform_6, window_bounds = array<i64: 2, 256>}]} {
    %c0 = arith.constant 0 : index
    %c0_0 = arith.constant 0 : index
    %0 = vector.load %arg1[%c0, %c0_0] : memref<2x256xbf16, #tpu.memory_space<vmem>>, vector<2x256xbf16>
    %1 = arith.extf %0 : vector<2x256xbf16> to vector<2x256xf32>
    %c0_1 = arith.constant 0 : index
    %c0_2 = arith.constant 0 : index
    %2 = vector.load %arg2[%c0_1, %c0_2] : memref<1x256xf32, #tpu.memory_space<vmem>>, vector<1x256xf32>
    %3 = vector.broadcast %2 : vector<1x256xf32> to vector<2x256xf32>
    %4 = arith.mulf %1, %3 : vector<2x256xf32>
    %c0_3 = arith.constant 0 : index
    %c0_4 = arith.constant 0 : index
    %5 = vector.load %arg3[%c0_3, %c0_4] : memref<1x256xf32, #tpu.memory_space<vmem>>, vector<1x256xf32>
    %6 = vector.broadcast %5 : vector<1x256xf32> to vector<2x256xf32>
    %7 = arith.addf %4, %6 : vector<2x256xf32>
    %cst = arith.constant 0.000000e+00 : f32
    %8 = vector.broadcast %cst : f32 to vector<2x256xf32>
    %9 = arith.maximumf %7, %8 : vector<2x256xf32>
    %c0_5 = arith.constant 0 : index
    %c0_6 = arith.constant 0 : index
    %10 = vector.load %arg4[%c0_5, %c0_6] : memref<2x256xbf16, #tpu.memory_space<vmem>>, vector<2x256xbf16>
    %11 = arith.extf %10 : vector<2x256xbf16> to vector<2x256xf32>
    %c0_7 = arith.constant 0 : index
    %c0_8 = arith.constant 0 : index
    %12 = vector.load %arg5[%c0_7, %c0_8] : memref<1x256xf32, #tpu.memory_space<vmem>>, vector<1x256xf32>
    %13 = vector.broadcast %12 : vector<1x256xf32> to vector<2x256xf32>
    %14 = arith.mulf %11, %13 : vector<2x256xf32>
    %c0_9 = arith.constant 0 : index
    %c0_10 = arith.constant 0 : index
    %15 = vector.load %arg6[%c0_9, %c0_10] : memref<1x256xf32, #tpu.memory_space<vmem>>, vector<1x256xf32>
    %16 = vector.broadcast %15 : vector<1x256xf32> to vector<2x256xf32>
    %17 = arith.addf %14, %16 : vector<2x256xf32>
    %18 = arith.addf %9, %17 : vector<2x256xf32>
    %cst_11 = arith.constant 0.000000e+00 : f32
    %19 = vector.broadcast %cst_11 : f32 to vector<2x256xf32>
    %20 = arith.maximumf %18, %19 : vector<2x256xf32>
    %21 = arith.truncf %20 : vector<2x256xf32> to vector<2x256xbf16>
    %c0_12 = arith.constant 0 : index
    %c0_13 = arith.constant 0 : index
    %22 = vector.load %arg7[%c0_12, %c0_13] : memref<2x256xbf16, #tpu.memory_space<vmem>>, vector<2x256xbf16>
    tpu.vector_store %arg7[%c0_12, %c0_13], %21 {strides = array<i32>} : memref<2x256xbf16, #tpu.memory_space<vmem>>, vector<2x256xbf16>,
    return
  }
  func.func @transform_0(%arg0: i32) -> (i32, i32) {
    %c0_i32 = arith.constant 0 : i32
    %c0_i32_0 = arith.constant 0 : i32
    %c0_i32_1 = arith.constant 0 : i32
    return %c0_i32, %c0_i32_0 : i32, i32
  }
  func.func @transform_1(%arg0: i32) -> (i32, i32) {
    %c0_i32 = arith.constant 0 : i32
    %c0_i32_0 = arith.constant 0 : i32
    %c0_i32_1 = arith.constant 0 : i32
    return %c0_i32, %c0_i32_0 : i32, i32
  }
  func.func @transform_2(%arg0: i32) -> (i32, i32) {
    %c0_i32 = arith.constant 0 : i32
    %c0_i32_0 = arith.constant 0 : i32
    %c0_i32_1 = arith.constant 0 : i32
    return %c0_i32, %c0_i32_0 : i32, i32
  }
  func.func @transform_3(%arg0: i32) -> (i32, i32) {
    %c0_i32 = arith.constant 0 : i32
    %c0_i32_0 = arith.constant 0 : i32
    %c0_i32_1 = arith.constant 0 : i32
    return %c0_i32, %c0_i32_0 : i32, i32
  }
  func.func @transform_4(%arg0: i32) -> (i32, i32) {
    %c0_i32 = arith.constant 0 : i32
    %c0_i32_0 = arith.constant 0 : i32
    %c0_i32_1 = arith.constant 0 : i32
    return %c0_i32, %c0_i32_0 : i32, i32
  }
  func.func @transform_5(%arg0: i32) -> (i32, i32) {
    %c0_i32 = arith.constant 0 : i32
    %c0_i32_0 = arith.constant 0 : i32
    %c0_i32_1 = arith.constant 0 : i32
    return %c0_i32, %c0_i32_0 : i32, i32
  }
  func.func @transform_6(%arg0: i32) -> (i32, i32) {
    %c0_i32 = arith.constant 0 : i32
    %c0_i32_0 = arith.constant 0 : i32
    %c0_i32_1 = arith.constant 0 : i32
    return %c0_i32, %c0_i32_0 : i32, i32
  }
}

module attributes {stable_mosaic.version = 11 : i64} {
  func.func @_affine_kernel(%arg0: i32, %arg1: memref<2x256xbf16, #tpu.memory_space<vmem>>, %arg2: memref<1x256xf32, #tpu.memory_space<vmem>>, %arg3: memref<1x256xf32, #tpu.memory_space<vmem>>, %arg4: memref<2x256xbf16, #tpu.memory_space<vmem>>, %arg5: memref<2x256xbf16, #tpu.memory_space<vmem>>) attributes {dimension_semantics = [#tpu.dimension_semantics<arbitrary>], iteration_bounds = array<i64: 1>, scalar_prefetch = 0 : i64, scratch_operands = 0 : i64, tpu.core_type = #tpu.core_type<tc>, window_params = [{pipeline_mode = #tpu.pipeline_mode<synchronous>, transform_indices = @transform_0, window_bounds = array<i64: 2, 256>}, {pipeline_mode = #tpu.pipeline_mode<synchronous>, transform_indices = @transform_1, window_bounds = array<i64: 1, 256>}, {pipeline_mode = #tpu.pipeline_mode<synchronous>, transform_indices = @transform_2, window_bounds = array<i64: 1, 256>}, {pipeline_mode = #tpu.pipeline_mode<synchronous>, transform_indices = @transform_3, window_bounds = array<i64: 2, 256>}, {pipeline_mode = #tpu.pipeline_mode<synchronous>, transform_indices = @transform_4, window_bounds = array<i64: 2, 256>}]} {
    %c0 = arith.constant 0 : index
    %c0_0 = arith.constant 0 : index
    %0 = vector.load %arg1[%c0, %c0_0] : memref<2x256xbf16, #tpu.memory_space<vmem>>, vector<2x256xbf16>
    %1 = arith.extf %0 : vector<2x256xbf16> to vector<2x256xf32>
    %c0_1 = arith.constant 0 : index
    %c0_2 = arith.constant 0 : index
    %2 = vector.load %arg2[%c0_1, %c0_2] : memref<1x256xf32, #tpu.memory_space<vmem>>, vector<1x256xf32>
    %3 = vector.broadcast %2 : vector<1x256xf32> to vector<2x256xf32>
    %4 = arith.mulf %1, %3 : vector<2x256xf32>
    %c0_3 = arith.constant 0 : index
    %c0_4 = arith.constant 0 : index
    %5 = vector.load %arg3[%c0_3, %c0_4] : memref<1x256xf32, #tpu.memory_space<vmem>>, vector<1x256xf32>
    %6 = vector.broadcast %5 : vector<1x256xf32> to vector<2x256xf32>
    %7 = arith.addf %4, %6 : vector<2x256xf32>
    %cst = arith.constant 0.000000e+00 : f32
    %8 = vector.broadcast %cst : f32 to vector<2x256xf32>
    %9 = arith.maximumf %7, %8 : vector<2x256xf32>
    %c0_5 = arith.constant 0 : index
    %c0_6 = arith.constant 0 : index
    %10 = vector.load %arg4[%c0_5, %c0_6] : memref<2x256xbf16, #tpu.memory_space<vmem>>, vector<2x256xbf16>
    %11 = arith.extf %10 : vector<2x256xbf16> to vector<2x256xf32>
    %12 = arith.addf %9, %11 : vector<2x256xf32>
    %cst_7 = arith.constant 0.000000e+00 : f32
    %13 = vector.broadcast %cst_7 : f32 to vector<2x256xf32>
    %14 = arith.maximumf %12, %13 : vector<2x256xf32>
    %15 = arith.truncf %14 : vector<2x256xf32> to vector<2x256xbf16>
    %c0_8 = arith.constant 0 : index
    %c0_9 = arith.constant 0 : index
    %16 = vector.load %arg5[%c0_8, %c0_9] : memref<2x256xbf16, #tpu.memory_space<vmem>>, vector<2x256xbf16>
    tpu.vector_store %arg5[%c0_8, %c0_9], %15 {strides = array<i32>} : memref<2x256xbf16, #tpu.memory_space<vmem>>, vector<2x256xbf16>,
    return
  }
  func.func @transform_0(%arg0: i32) -> (i32, i32) {
    %c0_i32 = arith.constant 0 : i32
    %c0_i32_0 = arith.constant 0 : i32
    %c0_i32_1 = arith.constant 0 : i32
    return %c0_i32, %c0_i32_0 : i32, i32
  }
  func.func @transform_1(%arg0: i32) -> (i32, i32) {
    %c0_i32 = arith.constant 0 : i32
    %c0_i32_0 = arith.constant 0 : i32
    %c0_i32_1 = arith.constant 0 : i32
    return %c0_i32, %c0_i32_0 : i32, i32
  }
  func.func @transform_2(%arg0: i32) -> (i32, i32) {
    %c0_i32 = arith.constant 0 : i32
    %c0_i32_0 = arith.constant 0 : i32
    %c0_i32_1 = arith.constant 0 : i32
    return %c0_i32, %c0_i32_0 : i32, i32
  }
  func.func @transform_3(%arg0: i32) -> (i32, i32) {
    %c0_i32 = arith.constant 0 : i32
    %c0_i32_0 = arith.constant 0 : i32
    %c0_i32_1 = arith.constant 0 : i32
    return %c0_i32, %c0_i32_0 : i32, i32
  }
  func.func @transform_4(%arg0: i32) -> (i32, i32) {
    %c0_i32 = arith.constant 0 : i32
    %c0_i32_0 = arith.constant 0 : i32
    %c0_i32_1 = arith.constant 0 : i32
    return %c0_i32, %c0_i32_0 : i32, i32
  }
}

module attributes {stable_mosaic.version = 11 : i64} {
  func.func @_conv_kernel(%arg0: i32, %arg1: memref<8x144xbf16, #tpu.memory_space<vmem>>, %arg2: memref<144x64xbf16, #tpu.memory_space<vmem>>, %arg3: memref<8x64xbf16, #tpu.memory_space<vmem>>, %arg4: memref<8x64xf32, #tpu.memory_space<vmem>>, %arg5: memref<8x64xf32, #tpu.memory_space<vmem>>) attributes {dimension_semantics = [#tpu.dimension_semantics<parallel>], iteration_bounds = array<i64: 1>, scalar_prefetch = 0 : i64, scratch_operands = 0 : i64, tpu.core_type = #tpu.core_type<tc>, window_params = [{transform_indices = @transform_0, window_bounds = array<i64: 8, 144>}, {pipeline_mode = #tpu.pipeline_mode<synchronous>, transform_indices = @transform_1, window_bounds = array<i64: 144, 64>}, {transform_indices = @transform_2, window_bounds = array<i64: 8, 64>}, {transform_indices = @transform_3, window_bounds = array<i64: 8, 64>}, {transform_indices = @transform_4, window_bounds = array<i64: 8, 64>}]} {
    %c0 = arith.constant 0 : index
    %c0_0 = arith.constant 0 : index
    %0 = vector.load %arg1[%c0, %c0_0] : memref<8x144xbf16, #tpu.memory_space<vmem>>, vector<8x144xbf16>
    %c0_1 = arith.constant 0 : index
    %c0_2 = arith.constant 0 : index
    %1 = vector.load %arg2[%c0_1, %c0_2] : memref<144x64xbf16, #tpu.memory_space<vmem>>, vector<144x64xbf16>
    %cst = arith.constant dense<0.000000e+00> : vector<8x64xf32>
    %2 = tpu.matmul %0, %1, %cst {dimension_numbers = #tpu.dot_dimension_numbers<[1], [0], [0], [1], [0, 0, 1, 1], [], []>} : vector<8x144xbf16>, vector<144x64xbf16>, vector<8x64xf32> -> vector<8x64xf32>
    %3 = arith.truncf %2 : vector<8x64xf32> to vector<8x64xbf16>
    %c0_3 = arith.constant 0 : index
    %c0_4 = arith.constant 0 : index
    %4 = vector.load %arg3[%c0_3, %c0_4] : memref<8x64xbf16, #tpu.memory_space<vmem>>, vector<8x64xbf16>
    tpu.vector_store %arg3[%c0_3, %c0_4], %3 {strides = array<i32>} : memref<8x64xbf16, #tpu.memory_space<vmem>>, vector<8x64xbf16>,
    %5 = vector.shape_cast %2 : vector<8x64xf32> to vector<1x8x64xf32>
    %cst_5 = arith.constant dense<0.000000e+00> : vector<8x64xf32>
    %6 = vector.multi_reduction <add>, %5, %cst_5 [0] : vector<1x8x64xf32> to vector<8x64xf32>
    %c0_6 = arith.constant 0 : index
    %c0_7 = arith.constant 0 : index
    %7 = vector.load %arg4[%c0_6, %c0_7] : memref<8x64xf32, #tpu.memory_space<vmem>>, vector<8x64xf32>
    tpu.vector_store %arg4[%c0_6, %c0_7], %6 {strides = array<i32>} : memref<8x64xf32, #tpu.memory_space<vmem>>, vector<8x64xf32>,
    %8 = arith.mulf %5, %5 : vector<1x8x64xf32>
    %cst_8 = arith.constant dense<0.000000e+00> : vector<8x64xf32>
    %9 = vector.multi_reduction <add>, %8, %cst_8 [0] : vector<1x8x64xf32> to vector<8x64xf32>
    %c0_9 = arith.constant 0 : index
    %c0_10 = arith.constant 0 : index
    %10 = vector.load %arg5[%c0_9, %c0_10] : memref<8x64xf32, #tpu.memory_space<vmem>>, vector<8x64xf32>
    tpu.vector_store %arg5[%c0_9, %c0_10], %9 {strides = array<i32>} : memref<8x64xf32, #tpu.memory_space<vmem>>, vector<8x64xf32>,
    return
  }
  func.func @transform_0(%arg0: i32) -> (i32, i32) {
    %c0_i32 = arith.constant 0 : i32
    %c0_i32_0 = arith.constant 0 : i32
    return %arg0, %c0_i32 : i32, i32
  }
  func.func @transform_1(%arg0: i32) -> (i32, i32) {
    %c0_i32 = arith.constant 0 : i32
    %c0_i32_0 = arith.constant 0 : i32
    %c0_i32_1 = arith.constant 0 : i32
    return %c0_i32, %c0_i32_0 : i32, i32
  }
  func.func @transform_2(%arg0: i32) -> (i32, i32) {
    %c0_i32 = arith.constant 0 : i32
    %c0_i32_0 = arith.constant 0 : i32
    return %arg0, %c0_i32 : i32, i32
  }
  func.func @transform_3(%arg0: i32) -> (i32, i32) {
    %c0_i32 = arith.constant 0 : i32
    %c0_i32_0 = arith.constant 0 : i32
    return %arg0, %c0_i32 : i32, i32
  }
  func.func @transform_4(%arg0: i32) -> (i32, i32) {
    %c0_i32 = arith.constant 0 : i32
    %c0_i32_0 = arith.constant 0 : i32
    return %arg0, %c0_i32 : i32, i32
  }
}

module attributes {stable_mosaic.version = 11 : i64} {
  func.func @_affine_kernel(%arg0: i32, %arg1: memref<2x128xbf16, #tpu.memory_space<vmem>>, %arg2: memref<1x128xf32, #tpu.memory_space<vmem>>, %arg3: memref<1x128xf32, #tpu.memory_space<vmem>>, %arg4: memref<2x128xbf16, #tpu.memory_space<vmem>>) attributes {dimension_semantics = [#tpu.dimension_semantics<arbitrary>], iteration_bounds = array<i64: 1>, scalar_prefetch = 0 : i64, scratch_operands = 0 : i64, tpu.core_type = #tpu.core_type<tc>, window_params = [{pipeline_mode = #tpu.pipeline_mode<synchronous>, transform_indices = @transform_0, window_bounds = array<i64: 2, 128>}, {pipeline_mode = #tpu.pipeline_mode<synchronous>, transform_indices = @transform_1, window_bounds = array<i64: 1, 128>}, {pipeline_mode = #tpu.pipeline_mode<synchronous>, transform_indices = @transform_2, window_bounds = array<i64: 1, 128>}, {pipeline_mode = #tpu.pipeline_mode<synchronous>, transform_indices = @transform_3, window_bounds = array<i64: 2, 128>}]} {
    %c0 = arith.constant 0 : index
    %c0_0 = arith.constant 0 : index
    %0 = vector.load %arg1[%c0, %c0_0] : memref<2x128xbf16, #tpu.memory_space<vmem>>, vector<2x128xbf16>
    %1 = arith.extf %0 : vector<2x128xbf16> to vector<2x128xf32>
    %c0_1 = arith.constant 0 : index
    %c0_2 = arith.constant 0 : index
    %2 = vector.load %arg2[%c0_1, %c0_2] : memref<1x128xf32, #tpu.memory_space<vmem>>, vector<1x128xf32>
    %3 = vector.broadcast %2 : vector<1x128xf32> to vector<2x128xf32>
    %4 = arith.mulf %1, %3 : vector<2x128xf32>
    %c0_3 = arith.constant 0 : index
    %c0_4 = arith.constant 0 : index
    %5 = vector.load %arg3[%c0_3, %c0_4] : memref<1x128xf32, #tpu.memory_space<vmem>>, vector<1x128xf32>
    %6 = vector.broadcast %5 : vector<1x128xf32> to vector<2x128xf32>
    %7 = arith.addf %4, %6 : vector<2x128xf32>
    %cst = arith.constant 0.000000e+00 : f32
    %8 = vector.broadcast %cst : f32 to vector<2x128xf32>
    %9 = arith.maximumf %7, %8 : vector<2x128xf32>
    %10 = arith.truncf %9 : vector<2x128xf32> to vector<2x128xbf16>
    %c0_5 = arith.constant 0 : index
    %c0_6 = arith.constant 0 : index
    %11 = vector.load %arg4[%c0_5, %c0_6] : memref<2x128xbf16, #tpu.memory_space<vmem>>, vector<2x128xbf16>
    tpu.vector_store %arg4[%c0_5, %c0_6], %10 {strides = array<i32>} : memref<2x128xbf16, #tpu.memory_space<vmem>>, vector<2x128xbf16>,
    return
  }
  func.func @transform_0(%arg0: i32) -> (i32, i32) {
    %c0_i32 = arith.constant 0 : i32
    %c0_i32_0 = arith.constant 0 : i32
    %c0_i32_1 = arith.constant 0 : i32
    return %c0_i32, %c0_i32_0 : i32, i32
  }
  func.func @transform_1(%arg0: i32) -> (i32, i32) {
    %c0_i32 = arith.constant 0 : i32
    %c0_i32_0 = arith.constant 0 : i32
    %c0_i32_1 = arith.constant 0 : i32
    return %c0_i32, %c0_i32_0 : i32, i32
  }
  func.func @transform_2(%arg0: i32) -> (i32, i32) {
    %c0_i32 = arith.constant 0 : i32
    %c0_i32_0 = arith.constant 0 : i32
    %c0_i32_1 = arith.constant 0 : i32
    return %c0_i32, %c0_i32_0 : i32, i32
  }
  func.func @transform_3(%arg0: i32) -> (i32, i32) {
    %c0_i32 = arith.constant 0 : i32
    %c0_i32_0 = arith.constant 0 : i32
    %c0_i32_1 = arith.constant 0 : i32
    return %c0_i32, %c0_i32_0 : i32, i32
  }
}

module attributes {stable_mosaic.version = 11 : i64} {
  func.func @_conv_kernel(%arg0: i32, %arg1: memref<8x288xbf16, #tpu.memory_space<vmem>>, %arg2: memref<288x32xbf16, #tpu.memory_space<vmem>>, %arg3: memref<8x32xbf16, #tpu.memory_space<vmem>>, %arg4: memref<8x32xf32, #tpu.memory_space<vmem>>, %arg5: memref<8x32xf32, #tpu.memory_space<vmem>>) attributes {dimension_semantics = [#tpu.dimension_semantics<parallel>], iteration_bounds = array<i64: 1>, scalar_prefetch = 0 : i64, scratch_operands = 0 : i64, tpu.core_type = #tpu.core_type<tc>, window_params = [{transform_indices = @transform_0, window_bounds = array<i64: 8, 288>}, {pipeline_mode = #tpu.pipeline_mode<synchronous>, transform_indices = @transform_1, window_bounds = array<i64: 288, 32>}, {transform_indices = @transform_2, window_bounds = array<i64: 8, 32>}, {transform_indices = @transform_3, window_bounds = array<i64: 8, 32>}, {transform_indices = @transform_4, window_bounds = array<i64: 8, 32>}]} {
    %c0 = arith.constant 0 : index
    %c0_0 = arith.constant 0 : index
    %0 = vector.load %arg1[%c0, %c0_0] : memref<8x288xbf16, #tpu.memory_space<vmem>>, vector<8x288xbf16>
    %c0_1 = arith.constant 0 : index
    %c0_2 = arith.constant 0 : index
    %1 = vector.load %arg2[%c0_1, %c0_2] : memref<288x32xbf16, #tpu.memory_space<vmem>>, vector<288x32xbf16>
    %cst = arith.constant dense<0.000000e+00> : vector<8x32xf32>
    %2 = tpu.matmul %0, %1, %cst {dimension_numbers = #tpu.dot_dimension_numbers<[1], [0], [0], [1], [0, 0, 1, 1], [], []>} : vector<8x288xbf16>, vector<288x32xbf16>, vector<8x32xf32> -> vector<8x32xf32>
    %3 = arith.truncf %2 : vector<8x32xf32> to vector<8x32xbf16>
    %c0_3 = arith.constant 0 : index
    %c0_4 = arith.constant 0 : index
    %4 = vector.load %arg3[%c0_3, %c0_4] : memref<8x32xbf16, #tpu.memory_space<vmem>>, vector<8x32xbf16>
    tpu.vector_store %arg3[%c0_3, %c0_4], %3 {strides = array<i32>} : memref<8x32xbf16, #tpu.memory_space<vmem>>, vector<8x32xbf16>,
    %5 = vector.shape_cast %2 : vector<8x32xf32> to vector<1x8x32xf32>
    %cst_5 = arith.constant dense<0.000000e+00> : vector<8x32xf32>
    %6 = vector.multi_reduction <add>, %5, %cst_5 [0] : vector<1x8x32xf32> to vector<8x32xf32>
    %c0_6 = arith.constant 0 : index
    %c0_7 = arith.constant 0 : index
    %7 = vector.load %arg4[%c0_6, %c0_7] : memref<8x32xf32, #tpu.memory_space<vmem>>, vector<8x32xf32>
    tpu.vector_store %arg4[%c0_6, %c0_7], %6 {strides = array<i32>} : memref<8x32xf32, #tpu.memory_space<vmem>>, vector<8x32xf32>,
    %8 = arith.mulf %5, %5 : vector<1x8x32xf32>
    %cst_8 = arith.constant dense<0.000000e+00> : vector<8x32xf32>
    %9 = vector.multi_reduction <add>, %8, %cst_8 [0] : vector<1x8x32xf32> to vector<8x32xf32>
    %c0_9 = arith.constant 0 : index
    %c0_10 = arith.constant 0 : index
    %10 = vector.load %arg5[%c0_9, %c0_10] : memref<8x32xf32, #tpu.memory_space<vmem>>, vector<8x32xf32>
    tpu.vector_store %arg5[%c0_9, %c0_10], %9 {strides = array<i32>} : memref<8x32xf32, #tpu.memory_space<vmem>>, vector<8x32xf32>,
    return
  }
  func.func @transform_0(%arg0: i32) -> (i32, i32) {
    %c0_i32 = arith.constant 0 : i32
    %c0_i32_0 = arith.constant 0 : i32
    return %arg0, %c0_i32 : i32, i32
  }
  func.func @transform_1(%arg0: i32) -> (i32, i32) {
    %c0_i32 = arith.constant 0 : i32
    %c0_i32_0 = arith.constant 0 : i32
    %c0_i32_1 = arith.constant 0 : i32
    return %c0_i32, %c0_i32_0 : i32, i32
  }
  func.func @transform_2(%arg0: i32) -> (i32, i32) {
    %c0_i32 = arith.constant 0 : i32
    %c0_i32_0 = arith.constant 0 : i32
    return %arg0, %c0_i32 : i32, i32
  }
  func.func @transform_3(%arg0: i32) -> (i32, i32) {
    %c0_i32 = arith.constant 0 : i32
    %c0_i32_0 = arith.constant 0 : i32
    return %arg0, %c0_i32 : i32, i32
  }
  func.func @transform_4(%arg0: i32) -> (i32, i32) {
    %c0_i32 = arith.constant 0 : i32
    %c0_i32_0 = arith.constant 0 : i32
    return %arg0, %c0_i32 : i32, i32
  }
}

module attributes {stable_mosaic.version = 11 : i64} {
  func.func @_affine_kernel(%arg0: i32, %arg1: memref<2x128xbf16, #tpu.memory_space<vmem>>, %arg2: memref<1x128xf32, #tpu.memory_space<vmem>>, %arg3: memref<1x128xf32, #tpu.memory_space<vmem>>, %arg4: memref<2x128xbf16, #tpu.memory_space<vmem>>, %arg5: memref<1x128xf32, #tpu.memory_space<vmem>>, %arg6: memref<1x128xf32, #tpu.memory_space<vmem>>, %arg7: memref<2x128xbf16, #tpu.memory_space<vmem>>, %arg8: memref<1x128xf32, #tpu.memory_space<vmem>>, %arg9: memref<1x128xf32, #tpu.memory_space<vmem>>) attributes {dimension_semantics = [#tpu.dimension_semantics<arbitrary>], iteration_bounds = array<i64: 1>, scalar_prefetch = 0 : i64, scratch_operands = 0 : i64, tpu.core_type = #tpu.core_type<tc>, window_params = [{pipeline_mode = #tpu.pipeline_mode<synchronous>, transform_indices = @transform_0, window_bounds = array<i64: 2, 128>}, {pipeline_mode = #tpu.pipeline_mode<synchronous>, transform_indices = @transform_1, window_bounds = array<i64: 1, 128>}, {pipeline_mode = #tpu.pipeline_mode<synchronous>, transform_indices = @transform_2, window_bounds = array<i64: 1, 128>}, {pipeline_mode = #tpu.pipeline_mode<synchronous>, transform_indices = @transform_3, window_bounds = array<i64: 2, 128>}, {pipeline_mode = #tpu.pipeline_mode<synchronous>, transform_indices = @transform_4, window_bounds = array<i64: 1, 128>}, {pipeline_mode = #tpu.pipeline_mode<synchronous>, transform_indices = @transform_5, window_bounds = array<i64: 1, 128>}, {pipeline_mode = #tpu.pipeline_mode<synchronous>, transform_indices = @transform_6, window_bounds = array<i64: 2, 128>}, {pipeline_mode = #tpu.pipeline_mode<synchronous>, transform_indices = @transform_7, window_bounds = array<i64: 1, 128>}, {pipeline_mode = #tpu.pipeline_mode<synchronous>, transform_indices = @transform_8, window_bounds = array<i64: 1, 128>}]} {
    %c0 = arith.constant 0 : index
    %c0_0 = arith.constant 0 : index
    %0 = vector.load %arg1[%c0, %c0_0] : memref<2x128xbf16, #tpu.memory_space<vmem>>, vector<2x128xbf16>
    %1 = arith.extf %0 : vector<2x128xbf16> to vector<2x128xf32>
    %c0_1 = arith.constant 0 : index
    %c0_2 = arith.constant 0 : index
    %2 = vector.load %arg2[%c0_1, %c0_2] : memref<1x128xf32, #tpu.memory_space<vmem>>, vector<1x128xf32>
    %3 = vector.broadcast %2 : vector<1x128xf32> to vector<2x128xf32>
    %4 = arith.mulf %1, %3 : vector<2x128xf32>
    %c0_3 = arith.constant 0 : index
    %c0_4 = arith.constant 0 : index
    %5 = vector.load %arg3[%c0_3, %c0_4] : memref<1x128xf32, #tpu.memory_space<vmem>>, vector<1x128xf32>
    %6 = vector.broadcast %5 : vector<1x128xf32> to vector<2x128xf32>
    %7 = arith.addf %4, %6 : vector<2x128xf32>
    %cst = arith.constant 0.000000e+00 : f32
    %8 = vector.broadcast %cst : f32 to vector<2x128xf32>
    %9 = arith.maximumf %7, %8 : vector<2x128xf32>
    %c0_5 = arith.constant 0 : index
    %c0_6 = arith.constant 0 : index
    %10 = vector.load %arg4[%c0_5, %c0_6] : memref<2x128xbf16, #tpu.memory_space<vmem>>, vector<2x128xbf16>
    %11 = arith.extf %10 : vector<2x128xbf16> to vector<2x128xf32>
    %c0_7 = arith.constant 0 : index
    %c0_8 = arith.constant 0 : index
    %12 = vector.load %arg5[%c0_7, %c0_8] : memref<1x128xf32, #tpu.memory_space<vmem>>, vector<1x128xf32>
    %13 = vector.broadcast %12 : vector<1x128xf32> to vector<2x128xf32>
    %14 = arith.mulf %11, %13 : vector<2x128xf32>
    %c0_9 = arith.constant 0 : index
    %c0_10 = arith.constant 0 : index
    %15 = vector.load %arg6[%c0_9, %c0_10] : memref<1x128xf32, #tpu.memory_space<vmem>>, vector<1x128xf32>
    %16 = vector.broadcast %15 : vector<1x128xf32> to vector<2x128xf32>
    %17 = arith.addf %14, %16 : vector<2x128xf32>
    %18 = arith.addf %9, %17 : vector<2x128xf32>
    %cst_11 = arith.constant 0.000000e+00 : f32
    %19 = vector.broadcast %cst_11 : f32 to vector<2x128xf32>
    %20 = arith.maximumf %18, %19 : vector<2x128xf32>
    %21 = arith.truncf %20 : vector<2x128xf32> to vector<2x128xbf16>
    %c0_12 = arith.constant 0 : index
    %c0_13 = arith.constant 0 : index
    %22 = vector.load %arg7[%c0_12, %c0_13] : memref<2x128xbf16, #tpu.memory_space<vmem>>, vector<2x128xbf16>
    tpu.vector_store %arg7[%c0_12, %c0_13], %21 {strides = array<i32>} : memref<2x128xbf16, #tpu.memory_space<vmem>>, vector<2x128xbf16>,
    %cst_14 = arith.constant dense<0.000000e+00> : vector<128xf32>
    %23 = vector.multi_reduction <add>, %20, %cst_14 [0] : vector<2x128xf32> to vector<128xf32>
    %24 = vector.shape_cast %23 : vector<128xf32> to vector<1x128xf32>
    %c0_15 = arith.constant 0 : index
    %c0_16 = arith.constant 0 : index
    %25 = vector.load %arg8[%c0_15, %c0_16] : memref<1x128xf32, #tpu.memory_space<vmem>>, vector<1x128xf32>
    tpu.vector_store %arg8[%c0_15, %c0_16], %24 {strides = array<i32>} : memref<1x128xf32, #tpu.memory_space<vmem>>, vector<1x128xf32>,
    %26 = arith.mulf %20, %20 : vector<2x128xf32>
    %cst_17 = arith.constant dense<0.000000e+00> : vector<128xf32>
    %27 = vector.multi_reduction <add>, %26, %cst_17 [0] : vector<2x128xf32> to vector<128xf32>
    %28 = vector.shape_cast %27 : vector<128xf32> to vector<1x128xf32>
    %c0_18 = arith.constant 0 : index
    %c0_19 = arith.constant 0 : index
    %29 = vector.load %arg9[%c0_18, %c0_19] : memref<1x128xf32, #tpu.memory_space<vmem>>, vector<1x128xf32>
    tpu.vector_store %arg9[%c0_18, %c0_19], %28 {strides = array<i32>} : memref<1x128xf32, #tpu.memory_space<vmem>>, vector<1x128xf32>,
    return
  }
  func.func @transform_0(%arg0: i32) -> (i32, i32) {
    %c0_i32 = arith.constant 0 : i32
    %c0_i32_0 = arith.constant 0 : i32
    %c0_i32_1 = arith.constant 0 : i32
    return %c0_i32, %c0_i32_0 : i32, i32
  }
  func.func @transform_1(%arg0: i32) -> (i32, i32) {
    %c0_i32 = arith.constant 0 : i32
    %c0_i32_0 = arith.constant 0 : i32
    %c0_i32_1 = arith.constant 0 : i32
    return %c0_i32, %c0_i32_0 : i32, i32
  }
  func.func @transform_2(%arg0: i32) -> (i32, i32) {
    %c0_i32 = arith.constant 0 : i32
    %c0_i32_0 = arith.constant 0 : i32
    %c0_i32_1 = arith.constant 0 : i32
    return %c0_i32, %c0_i32_0 : i32, i32
  }
  func.func @transform_3(%arg0: i32) -> (i32, i32) {
    %c0_i32 = arith.constant 0 : i32
    %c0_i32_0 = arith.constant 0 : i32
    %c0_i32_1 = arith.constant 0 : i32
    return %c0_i32, %c0_i32_0 : i32, i32
  }
  func.func @transform_4(%arg0: i32) -> (i32, i32) {
    %c0_i32 = arith.constant 0 : i32
    %c0_i32_0 = arith.constant 0 : i32
    %c0_i32_1 = arith.constant 0 : i32
    return %c0_i32, %c0_i32_0 : i32, i32
  }
  func.func @transform_5(%arg0: i32) -> (i32, i32) {
    %c0_i32 = arith.constant 0 : i32
    %c0_i32_0 = arith.constant 0 : i32
    %c0_i32_1 = arith.constant 0 : i32
    return %c0_i32, %c0_i32_0 : i32, i32
  }
  func.func @transform_6(%arg0: i32) -> (i32, i32) {
    %c0_i32 = arith.constant 0 : i32
    %c0_i32_0 = arith.constant 0 : i32
    %c0_i32_1 = arith.constant 0 : i32
    return %c0_i32, %c0_i32_0 : i32, i32
  }
  func.func @transform_7(%arg0: i32) -> (i32, i32) {
    %c0_i32 = arith.constant 0 : i32
    %c0_i32_0 = arith.constant 0 : i32
    %c0_i32_1 = arith.constant 0 : i32
    return %c0_i32, %c0_i32_0 : i32, i32
  }
  func.func @transform_8(%arg0: i32) -> (i32, i32) {
    %c0_i32 = arith.constant 0 : i32
    %c0_i32_0 = arith.constant 0 : i32
    %c0_i32_1 = arith.constant 0 : i32
    return %c0_i32, %c0_i32_0 : i32, i32
  }
}

module attributes {stable_mosaic.version = 11 : i64} {
  func.func @_attention_kernel(%arg0: i32, %arg1: memref<1x4x32xbf16, #tpu.memory_space<vmem>>, %arg2: memref<1x32xf32, #tpu.memory_space<vmem>>, %arg3: memref<1x32xf32, #tpu.memory_space<vmem>>, %arg4: memref<32x96xbf16, #tpu.memory_space<vmem>>, %arg5: memref<32x32xbf16, #tpu.memory_space<vmem>>, %arg6: memref<1x32xf32, #tpu.memory_space<vmem>>, %arg7: memref<1x4x32xbf16, #tpu.memory_space<vmem>>) attributes {dimension_semantics = [#tpu.dimension_semantics<parallel>], iteration_bounds = array<i64: 2>, scalar_prefetch = 0 : i64, scratch_operands = 0 : i64, tpu.core_type = #tpu.core_type<tc>, window_params = [{transform_indices = @transform_0, window_bounds = array<i64: 1, 4, 32>}, {pipeline_mode = #tpu.pipeline_mode<synchronous>, transform_indices = @transform_1, window_bounds = array<i64: 1, 32>}, {pipeline_mode = #tpu.pipeline_mode<synchronous>, transform_indices = @transform_2, window_bounds = array<i64: 1, 32>}, {pipeline_mode = #tpu.pipeline_mode<synchronous>, transform_indices = @transform_3, window_bounds = array<i64: 32, 96>}, {pipeline_mode = #tpu.pipeline_mode<synchronous>, transform_indices = @transform_4, window_bounds = array<i64: 32, 32>}, {pipeline_mode = #tpu.pipeline_mode<synchronous>, transform_indices = @transform_5, window_bounds = array<i64: 1, 32>}, {transform_indices = @transform_6, window_bounds = array<i64: 1, 4, 32>}]} {
    %c0 = arith.constant 0 : index
    %c0_0 = arith.constant 0 : index
    %c0_1 = arith.constant 0 : index
    %0 = vector.load %arg1[%c0, %c0_0, %c0_1] : memref<1x4x32xbf16, #tpu.memory_space<vmem>>, vector<1x4x32xbf16>
    %1 = vector.shape_cast %0 : vector<1x4x32xbf16> to vector<4x32xbf16>
    %2 = arith.extf %1 : vector<4x32xbf16> to vector<4x32xf32>
    %c0_2 = arith.constant 0 : index
    %c0_3 = arith.constant 0 : index
    %3 = vector.load %arg2[%c0_2, %c0_3] : memref<1x32xf32, #tpu.memory_space<vmem>>, vector<1x32xf32>
    %4 = vector.broadcast %3 : vector<1x32xf32> to vector<4x32xf32>
    %5 = arith.mulf %2, %4 : vector<4x32xf32>
    %c0_4 = arith.constant 0 : index
    %c0_5 = arith.constant 0 : index
    %6 = vector.load %arg3[%c0_4, %c0_5] : memref<1x32xf32, #tpu.memory_space<vmem>>, vector<1x32xf32>
    %7 = vector.broadcast %6 : vector<1x32xf32> to vector<4x32xf32>
    %8 = arith.addf %5, %7 : vector<4x32xf32>
    %9 = arith.truncf %8 : vector<4x32xf32> to vector<4x32xbf16>
    %c0_6 = arith.constant 0 : index
    %c0_7 = arith.constant 0 : index
    %10 = vector.load %arg4[%c0_6, %c0_7] : memref<32x96xbf16, #tpu.memory_space<vmem>>, vector<32x96xbf16>
    %cst = arith.constant dense<0.000000e+00> : vector<4x96xf32>
    %11 = tpu.matmul %9, %10, %cst {dimension_numbers = #tpu.dot_dimension_numbers<[1], [0], [0], [1], [0, 0, 1, 1], [], []>} : vector<4x32xbf16>, vector<32x96xbf16>, vector<4x96xf32> -> vector<4x96xf32>
    %12 = vector.extract_strided_slice %11 {offsets = [0, 0], sizes = [4, 32], strides = [1, 1]} : vector<4x96xf32> to vector<4x32xf32>
    %13 = arith.truncf %12 : vector<4x32xf32> to vector<4x32xbf16>
    %14 = vector.extract_strided_slice %11 {offsets = [0, 32], sizes = [4, 32], strides = [1, 1]} : vector<4x96xf32> to vector<4x32xf32>
    %15 = arith.truncf %14 : vector<4x32xf32> to vector<4x32xbf16>
    %16 = vector.extract_strided_slice %11 {offsets = [0, 64], sizes = [4, 32], strides = [1, 1]} : vector<4x96xf32> to vector<4x32xf32>
    %17 = arith.truncf %16 : vector<4x32xf32> to vector<4x32xbf16>
    %cst_8 = arith.constant dense<0.000000e+00> : vector<4x4xf32>
    %18 = tpu.matmul %13, %15, %cst_8 {dimension_numbers = #tpu.dot_dimension_numbers<[1], [1], [0], [0], [0, 0, 1, 0], [], []>} : vector<4x32xbf16>, vector<4x32xbf16>, vector<4x4xf32> -> vector<4x4xf32>
    %cst_9 = arith.constant 0.176776692 : f32
    %19 = vector.broadcast %cst_9 : f32 to vector<4x4xf32>
    %20 = arith.mulf %18, %19 : vector<4x4xf32>
    %cst_10 = arith.constant dense<0xFF800000> : vector<4xf32>
    %21 = vector.multi_reduction <maximumf>, %20, %cst_10 [1] : vector<4x4xf32> to vector<4xf32>
    %22 = vector.shape_cast %21 : vector<4xf32> to vector<4x1xf32>
    %23 = vector.broadcast %22 : vector<4x1xf32> to vector<4x4xf32>
    %24 = arith.subf %20, %23 : vector<4x4xf32>
    %25 = math.exp %24 : vector<4x4xf32>
    %cst_11 = arith.constant dense<0.000000e+00> : vector<4xf32>
    %26 = vector.multi_reduction <add>, %25, %cst_11 [1] : vector<4x4xf32> to vector<4xf32>
    %27 = vector.shape_cast %26 : vector<4xf32> to vector<4x1xf32>
    %28 = tpu.reciprocal %27 {approx = true} : vector<4x1xf32> -> vector<4x1xf32>
    %29 = vector.broadcast %28 : vector<4x1xf32> to vector<4x4xf32>
    %30 = arith.mulf %25, %29 : vector<4x4xf32>
    %31 = arith.truncf %30 : vector<4x4xf32> to vector<4x4xbf16>
    %cst_12 = arith.constant dense<0.000000e+00> : vector<4x32xf32>
    %32 = tpu.matmul %31, %17, %cst_12 {dimension_numbers = #tpu.dot_dimension_numbers<[1], [0], [0], [1], [0, 0, 1, 1], [], []>} : vector<4x4xbf16>, vector<4x32xbf16>, vector<4x32xf32> -> vector<4x32xf32>
    %33 = arith.truncf %32 : vector<4x32xf32> to vector<4x32xbf16>
    %c0_13 = arith.constant 0 : index
    %c0_14 = arith.constant 0 : index
    %34 = vector.load %arg5[%c0_13, %c0_14] : memref<32x32xbf16, #tpu.memory_space<vmem>>, vector<32x32xbf16>
    %cst_15 = arith.constant dense<0.000000e+00> : vector<4x32xf32>
    %35 = tpu.matmul %33, %34, %cst_15 {dimension_numbers = #tpu.dot_dimension_numbers<[1], [0], [0], [1], [0, 0, 1, 1], [], []>} : vector<4x32xbf16>, vector<32x32xbf16>, vector<4x32xf32> -> vector<4x32xf32>
    %36 = arith.addf %2, %35 : vector<4x32xf32>
    %c0_16 = arith.constant 0 : index
    %c0_17 = arith.constant 0 : index
    %37 = vector.load %arg6[%c0_16, %c0_17] : memref<1x32xf32, #tpu.memory_space<vmem>>, vector<1x32xf32>
    %38 = vector.broadcast %37 : vector<1x32xf32> to vector<4x32xf32>
    %39 = arith.addf %36, %38 : vector<4x32xf32>
    %40 = arith.truncf %39 : vector<4x32xf32> to vector<4x32xbf16>
    %c0_18 = arith.constant 0 : index
    %c0_19 = arith.constant 0 : index
    %c0_20 = arith.constant 0 : index
    %41 = vector.load %arg7[%c0_18, %c0_19, %c0_20] : memref<1x4x32xbf16, #tpu.memory_space<vmem>>, vector<1x4x32xbf16>
    %42 = vector.shape_cast %41 : vector<1x4x32xbf16> to vector<4x32xbf16>
    %43 = vector.shape_cast %40 : vector<4x32xbf16> to vector<1x4x32xbf16>
    tpu.vector_store %arg7[%c0_18, %c0_19, %c0_20], %43 {strides = array<i32>} : memref<1x4x32xbf16, #tpu.memory_space<vmem>>, vector<1x4x32xbf16>,
    return
  }
  func.func @transform_0(%arg0: i32) -> (i32, i32, i32) {
    %c0_i32 = arith.constant 0 : i32
    %c0_i32_0 = arith.constant 0 : i32
    %c0_i32_1 = arith.constant 0 : i32
    return %arg0, %c0_i32, %c0_i32_0 : i32, i32, i32
  }
  func.func @transform_1(%arg0: i32) -> (i32, i32) {
    %c0_i32 = arith.constant 0 : i32
    %c0_i32_0 = arith.constant 0 : i32
    %c0_i32_1 = arith.constant 0 : i32
    return %c0_i32, %c0_i32_0 : i32, i32
  }
  func.func @transform_2(%arg0: i32) -> (i32, i32) {
    %c0_i32 = arith.constant 0 : i32
    %c0_i32_0 = arith.constant 0 : i32
    %c0_i32_1 = arith.constant 0 : i32
    return %c0_i32, %c0_i32_0 : i32, i32
  }
  func.func @transform_3(%arg0: i32) -> (i32, i32) {
    %c0_i32 = arith.constant 0 : i32
    %c0_i32_0 = arith.constant 0 : i32
    %c0_i32_1 = arith.constant 0 : i32
    return %c0_i32, %c0_i32_0 : i32, i32
  }
  func.func @transform_4(%arg0: i32) -> (i32, i32) {
    %c0_i32 = arith.constant 0 : i32
    %c0_i32_0 = arith.constant 0 : i32
    %c0_i32_1 = arith.constant 0 : i32
    return %c0_i32, %c0_i32_0 : i32, i32
  }
  func.func @transform_5(%arg0: i32) -> (i32, i32) {
    %c0_i32 = arith.constant 0 : i32
    %c0_i32_0 = arith.constant 0 : i32
    %c0_i32_1 = arith.constant 0 : i32
    return %c0_i32, %c0_i32_0 : i32, i32
  }
  func.func @transform_6(%arg0: i32) -> (i32, i32, i32) {
    %c0_i32 = arith.constant 0 : i32
    %c0_i32_0 = arith.constant 0 : i32
    %c0_i32_1 = arith.constant 0 : i32
    return %arg0, %c0_i32, %c0_i32_0 : i32, i32, i32
  }
}

module attributes {stable_mosaic.version = 11 : i64} {
  func.func @_affine_kernel(%arg0: i32, %arg1: memref<2x128xbf16, #tpu.memory_space<vmem>>, %arg2: memref<1x128xf32, #tpu.memory_space<vmem>>, %arg3: memref<1x128xf32, #tpu.memory_space<vmem>>, %arg4: memref<2x128xbf16, #tpu.memory_space<vmem>>, %arg5: memref<2x128xbf16, #tpu.memory_space<vmem>>, %arg6: memref<1x128xf32, #tpu.memory_space<vmem>>, %arg7: memref<1x128xf32, #tpu.memory_space<vmem>>) attributes {dimension_semantics = [#tpu.dimension_semantics<arbitrary>], iteration_bounds = array<i64: 1>, scalar_prefetch = 0 : i64, scratch_operands = 0 : i64, tpu.core_type = #tpu.core_type<tc>, window_params = [{pipeline_mode = #tpu.pipeline_mode<synchronous>, transform_indices = @transform_0, window_bounds = array<i64: 2, 128>}, {pipeline_mode = #tpu.pipeline_mode<synchronous>, transform_indices = @transform_1, window_bounds = array<i64: 1, 128>}, {pipeline_mode = #tpu.pipeline_mode<synchronous>, transform_indices = @transform_2, window_bounds = array<i64: 1, 128>}, {pipeline_mode = #tpu.pipeline_mode<synchronous>, transform_indices = @transform_3, window_bounds = array<i64: 2, 128>}, {pipeline_mode = #tpu.pipeline_mode<synchronous>, transform_indices = @transform_4, window_bounds = array<i64: 2, 128>}, {pipeline_mode = #tpu.pipeline_mode<synchronous>, transform_indices = @transform_5, window_bounds = array<i64: 1, 128>}, {pipeline_mode = #tpu.pipeline_mode<synchronous>, transform_indices = @transform_6, window_bounds = array<i64: 1, 128>}]} {
    %c0 = arith.constant 0 : index
    %c0_0 = arith.constant 0 : index
    %0 = vector.load %arg1[%c0, %c0_0] : memref<2x128xbf16, #tpu.memory_space<vmem>>, vector<2x128xbf16>
    %1 = arith.extf %0 : vector<2x128xbf16> to vector<2x128xf32>
    %c0_1 = arith.constant 0 : index
    %c0_2 = arith.constant 0 : index
    %2 = vector.load %arg2[%c0_1, %c0_2] : memref<1x128xf32, #tpu.memory_space<vmem>>, vector<1x128xf32>
    %3 = vector.broadcast %2 : vector<1x128xf32> to vector<2x128xf32>
    %4 = arith.mulf %1, %3 : vector<2x128xf32>
    %c0_3 = arith.constant 0 : index
    %c0_4 = arith.constant 0 : index
    %5 = vector.load %arg3[%c0_3, %c0_4] : memref<1x128xf32, #tpu.memory_space<vmem>>, vector<1x128xf32>
    %6 = vector.broadcast %5 : vector<1x128xf32> to vector<2x128xf32>
    %7 = arith.addf %4, %6 : vector<2x128xf32>
    %cst = arith.constant 0.000000e+00 : f32
    %8 = vector.broadcast %cst : f32 to vector<2x128xf32>
    %9 = arith.maximumf %7, %8 : vector<2x128xf32>
    %c0_5 = arith.constant 0 : index
    %c0_6 = arith.constant 0 : index
    %10 = vector.load %arg4[%c0_5, %c0_6] : memref<2x128xbf16, #tpu.memory_space<vmem>>, vector<2x128xbf16>
    %11 = arith.extf %10 : vector<2x128xbf16> to vector<2x128xf32>
    %12 = arith.addf %9, %11 : vector<2x128xf32>
    %cst_7 = arith.constant 0.000000e+00 : f32
    %13 = vector.broadcast %cst_7 : f32 to vector<2x128xf32>
    %14 = arith.maximumf %12, %13 : vector<2x128xf32>
    %15 = arith.truncf %14 : vector<2x128xf32> to vector<2x128xbf16>
    %c0_8 = arith.constant 0 : index
    %c0_9 = arith.constant 0 : index
    %16 = vector.load %arg5[%c0_8, %c0_9] : memref<2x128xbf16, #tpu.memory_space<vmem>>, vector<2x128xbf16>
    tpu.vector_store %arg5[%c0_8, %c0_9], %15 {strides = array<i32>} : memref<2x128xbf16, #tpu.memory_space<vmem>>, vector<2x128xbf16>,
    %cst_10 = arith.constant dense<0.000000e+00> : vector<128xf32>
    %17 = vector.multi_reduction <add>, %14, %cst_10 [0] : vector<2x128xf32> to vector<128xf32>
    %18 = vector.shape_cast %17 : vector<128xf32> to vector<1x128xf32>
    %c0_11 = arith.constant 0 : index
    %c0_12 = arith.constant 0 : index
    %19 = vector.load %arg6[%c0_11, %c0_12] : memref<1x128xf32, #tpu.memory_space<vmem>>, vector<1x128xf32>
    tpu.vector_store %arg6[%c0_11, %c0_12], %18 {strides = array<i32>} : memref<1x128xf32, #tpu.memory_space<vmem>>, vector<1x128xf32>,
    %20 = arith.mulf %14, %14 : vector<2x128xf32>
    %cst_13 = arith.constant dense<0.000000e+00> : vector<128xf32>
    %21 = vector.multi_reduction <add>, %20, %cst_13 [0] : vector<2x128xf32> to vector<128xf32>
    %22 = vector.shape_cast %21 : vector<128xf32> to vector<1x128xf32>
    %c0_14 = arith.constant 0 : index
    %c0_15 = arith.constant 0 : index
    %23 = vector.load %arg7[%c0_14, %c0_15] : memref<1x128xf32, #tpu.memory_space<vmem>>, vector<1x128xf32>
    tpu.vector_store %arg7[%c0_14, %c0_15], %22 {strides = array<i32>} : memref<1x128xf32, #tpu.memory_space<vmem>>, vector<1x128xf32>,
    return
  }
  func.func @transform_0(%arg0: i32) -> (i32, i32) {
    %c0_i32 = arith.constant 0 : i32
    %c0_i32_0 = arith.constant 0 : i32
    %c0_i32_1 = arith.constant 0 : i32
    return %c0_i32, %c0_i32_0 : i32, i32
  }
  func.func @transform_1(%arg0: i32) -> (i32, i32) {
    %c0_i32 = arith.constant 0 : i32
    %c0_i32_0 = arith.constant 0 : i32
    %c0_i32_1 = arith.constant 0 : i32
    return %c0_i32, %c0_i32_0 : i32, i32
  }
  func.func @transform_2(%arg0: i32) -> (i32, i32) {
    %c0_i32 = arith.constant 0 : i32
    %c0_i32_0 = arith.constant 0 : i32
    %c0_i32_1 = arith.constant 0 : i32
    return %c0_i32, %c0_i32_0 : i32, i32
  }
  func.func @transform_3(%arg0: i32) -> (i32, i32) {
    %c0_i32 = arith.constant 0 : i32
    %c0_i32_0 = arith.constant 0 : i32
    %c0_i32_1 = arith.constant 0 : i32
    return %c0_i32, %c0_i32_0 : i32, i32
  }
  func.func @transform_4(%arg0: i32) -> (i32, i32) {
    %c0_i32 = arith.constant 0 : i32
    %c0_i32_0 = arith.constant 0 : i32
    %c0_i32_1 = arith.constant 0 : i32
    return %c0_i32, %c0_i32_0 : i32, i32
  }
  func.func @transform_5(%arg0: i32) -> (i32, i32) {
    %c0_i32 = arith.constant 0 : i32
    %c0_i32_0 = arith.constant 0 : i32
    %c0_i32_1 = arith.constant 0 : i32
    return %c0_i32, %c0_i32_0 : i32, i32
  }
  func.func @transform_6(%arg0: i32) -> (i32, i32) {
    %c0_i32 = arith.constant 0 : i32
    %c0_i32_0 = arith.constant 0 : i32
    %c0_i32_1 = arith.constant 0 : i32
    return %c0_i32, %c0_i32_0 : i32, i32
  }
}

</mosaic_0001>

<llo_original>
// kernel: tile.113
$region0: #{tile.113}
  #allocation0 [shape = 's32[1]{0}', space=sflag, size = 0x4, scoped, tag = 'scoped memory for tile.113']
  %s0 = inlined_call_operand.vmem [shape: f32[8], index: 0, kind: input, shape index: {}]
  %s1 = inlined_call_operand.vmem [shape: f32[64,8], index: 1, kind: output, shape index: {}]
  // Predicated region
  $region2: #{tile.113} parent=0 // pred_check
    _
  $region3: #{tile.113} parent=0 // pred_check_branch
    %3 = sbr.rel (0) target = $region5
  $region4: #{tile.113} parent=0 // pred_region
    _
  $region5: #{tile.113} parent=0 // pred_fallthru
    _
  %v4 = vld [vmem:[%s0] ss:$0 sm:$0xff]
  %5 = vst [vmem:[%s1] sm:$0xff] %v4
  %s6 = scalar_lea.vmem %s1, 8
  %7 = vst [vmem:[%s6] sm:$0xff] %v4
  %s8 = scalar_lea.vmem %s1, 16
  %9 = vst [vmem:[%s8] sm:$0xff] %v4
  %s10 = scalar_lea.vmem %s1, 24
  %11 = vst [vmem:[%s10] sm:$0xff] %v4
  %s12 = scalar_lea.vmem %s1, 32
  %13 = vst [vmem:[%s12] sm:$0xff] %v4
  %s14 = scalar_lea.vmem %s1, 40
  %15 = vst [vmem:[%s14] sm:$0xff] %v4
  %s16 = scalar_lea.vmem %s1, 48
  %17 = vst [vmem:[%s16] sm:$0xff] %v4
  %s18 = scalar_lea.vmem %s1, 56
  %19 = vst [vmem:[%s18] sm:$0xff] %v4

// kernel: tile.118
$region0: #{tile.118}
  %s0 = inlined_call_operand.vmem [shape: f32[64,8], index: 0, kind: input, shape index: {}]
  %s1 = inlined_call_operand.vmem [shape: f32[1,512], index: 1, kind: output, shape index: {}]
  $region1: #{tile.118} parent=0
    #allocation0 [shape = 'u8[16384]{0}', space=vmem, size = 0x4000, scoped, tag = 'scoped mem for output reshape']
    %s2 = smov 3
    %v3 = vld [vmem:[%s0] ss:$16 sm:%s2]
    %s4 = smov 12
    %v5 = vld [vmem:[%s0] ss:$16 sm:%s4]
    %vm6 = vcmask 1043458
    %v7 = vsel %vm6, %v5, %v3
    %vm8 = vcmask 64512
    %9 = vst.msk [vmem:[#allocation0] ss:$8 sm:$0xf] %vm8, %v7
    %s10 = scalar_lea.vmem %s0, 15
    %s11 = smov 3
    %v12 = vld [vmem:[%s10] ss:$16 sm:%s11]
    %s13 = scalar_lea.vmem %s0, 15
    %s14 = smov 12
    %v15 = vld [vmem:[%s13] ss:$16 sm:%s14]
    %vm16 = vcmask 1043458
    %v17 = vsel %vm16, %v15, %v12
    %18 = vrot.lane.b32.xlu0 %v17, 120
    %v19 = vpop.permute.xlu0 %18
    %vm20 = vcmask 1048512
    %21 = vst.msk [vmem:[#allocation0] ss:$8 sm:$0xf] %vm20, %v19
    %s22 = scalar_lea.vmem %s0, 14
    %s23 = smov 3
    %v24 = vld [vmem:[%s22] ss:$16 sm:%s23]
    %s25 = scalar_lea.vmem %s0, 14
    %s26 = smov 12
    %v27 = vld [vmem:[%s25] ss:$16 sm:%s26]
    %vm28 = vcmask 1043458
    %v29 = vsel %vm28, %v27, %v24
    %30 = vrot.lane.b32.xlu0 %v29, 112
    %v31 = vpop.permute.xlu0 %30
    %vm32 = vcmask 982912
    %33 = vst.msk [vmem:[#allocation0] ss:$8 sm:$0xf] %vm32, %v31
    %s34 = scalar_lea.vmem %s0, 13
    %s35 = smov 3
    %v36 = vld [vmem:[%s34] ss:$16 sm:%s35]
    %s37 = scalar_lea.vmem %s0, 13
    %s38 = smov 12
    %v39 = vld [vmem:[%s37] ss:$16 sm:%s38]
    %vm40 = vcmask 1043458
    %v41 = vsel %vm40, %v39, %v36
    %42 = vrot.lane.b32.xlu0 %v41, 104
    %v43 = vpop.permute.xlu0 %42
    %vm44 = vcmask 917312
    %45 = vst.msk [vmem:[#allocation0] ss:$8 sm:$0xf] %vm44, %v43
    %s46 = scalar_lea.vmem %s0, 12
    %s47 = smov 3
    %v48 = vld [vmem:[%s46] ss:$16 sm:%s47]
    %s49 = scalar_lea.vmem %s0, 12
    %s50 = smov 12
    %v51 = vld [vmem:[%s49] ss:$16 sm:%s50]
    %vm52 = vcmask 1043458
    %v53 = vsel %vm52, %v51, %v48
    %54 = vrot.lane.b32.xlu0 %v53, 96
    %v55 = vpop.permute.xlu0 %54
    %vm56 = vcmask 851712
    %57 = vst.msk [vmem:[#allocation0] ss:$8 sm:$0xf] %vm56, %v55
    %s58 = scalar_lea.vmem %s0, 11
    %s59 = smov 3
    %v60 = vld [vmem:[%s58] ss:$16 sm:%s59]
    %s61 = scalar_lea.vmem %s0, 11
    %s62 = smov 12
    %v63 = vld [vmem:[%s61] ss:$16 sm:%s62]
    %vm64 = vcmask 1043458
    %v65 = vsel %vm64, %v63, %v60
    %66 = vrot.lane.b32.xlu0 %v65, 88
    %v67 = vpop.permute.xlu0 %66
    %vm68 = vcmask 786112
    %69 = vst.msk [vmem:[#allocation0] ss:$8 sm:$0xf] %vm68, %v67
    %s70 = scalar_lea.vmem %s0, 10
    %s71 = smov 3
    %v72 = vld [vmem:[%s70] ss:$16 sm:%s71]
    %s73 = scalar_lea.vmem %s0, 10
    %s74 = smov 12
    %v75 = vld [vmem:[%s73] ss:$16 sm:%s74]
    %vm76 = vcmask 1043458
    %v77 = vsel %vm76, %v75, %v72
    %78 = vrot.lane.b32.xlu0 %v77, 80
    %v79 = vpop.permute.xlu0 %78
    %vm80 = vcmask 720512
    %81 = vst.msk [vmem:[#allocation0] ss:$8 sm:$0xf] %vm80, %v79
    %s82 = scalar_lea.vmem %s0, 9
    %s83 = smov 3
    %v84 = vld [vmem:[%s82] ss:$16 sm:%s83]
    %s85 = scalar_lea.vmem %s0, 9
    %s86 = smov 12
    %v87 = vld [vmem:[%s85] ss:$16 sm:%s86]
    %vm88 = vcmask 1043458
    %v89 = vsel %vm88, %v87, %v84
    %90 = vrot.lane.b32.xlu0 %v89, 72
    %v91 = vpop.permute.xlu0 %90
    %vm92 = vcmask 654912
    %93 = vst.msk [vmem:[#allocation0] ss:$8 sm:$0xf] %vm92, %v91
    %s94 = scalar_lea.vmem %s0, 8
    %s95 = smov 3
    %v96 = vld [vmem:[%s94] ss:$16 sm:%s95]
    %s97 = scalar_lea.vmem %s0, 8
    %s98 = smov 12
    %v99 = vld [vmem:[%s97] ss:$16 sm:%s98]
    %vm100 = vcmask 1043458
    %v101 = vsel %vm100, %v99, %v96
    %102 = vrot.lane.b32.xlu0 %v101, 64
    %v103 = vpop.permute.xlu0 %102
    %vm104 = vcmask 589312
    %105 = vst.msk [vmem:[#allocation0] ss:$8 sm:$0xf] %vm104, %v103
    %s106 = scalar_lea.vmem %s0, 7
    %s107 = smov 3
    %v108 = vld [vmem:[%s106] ss:$16 sm:%s107]
    %s109 = scalar_lea.vmem %s0, 7
    %s110 = smov 12
    %v111 = vld [vmem:[%s109] ss:$16 sm:%s110]
    %vm112 = vcmask 1043458
    %v113 = vsel %vm112, %v111, %v108
    %114 = vrot.lane.b32.xlu0 %v113, 56
    %v115 = vpop.permute.xlu0 %114
    %vm116 = vcmask 523712
    %117 = vst.msk [vmem:[#allocation0] ss:$8 sm:$0xf] %vm116, %v115
    %s118 = scalar_lea.vmem %s0, 6
    %s119 = smov 3
    %v120 = vld [vmem:[%s118] ss:$16 sm:%s119]
    %s121 = scalar_lea.vmem %s0, 6
    %s122 = smov 12
    %v123 = vld [vmem:[%s121] ss:$16 sm:%s122]
    %vm124 = vcmask 1043458
    %v125 = vsel %vm124, %v123, %v120
    %126 = vrot.lane.b32.xlu0 %v125, 48
    %v127 = vpop.permute.xlu0 %126
    %vm128 = vcmask 458112
    %129 = vst.msk [vmem:[#allocation0] ss:$8 sm:$0xf] %vm128, %v127
    %s130 = scalar_lea.vmem %s0, 5
    %s131 = smov 3
    %v132 = vld [vmem:[%s130] ss:$16 sm:%s131]
    %s133 = scalar_lea.vmem %s0, 5
    %s134 = smov 12
    %v135 = vld [vmem:[%s133] ss:$16 sm:%s134]
    %vm136 = vcmask 1043458
    %v137 = vsel %vm136, %v135, %v132
    %138 = vrot.lane.b32.xlu0 %v137, 40
    %v139 = vpop.permute.xlu0 %138
    %vm140 = vcmask 392512
    %141 = vst.msk [vmem:[#allocation0] ss:$8 sm:$0xf] %vm140, %v139
    %s142 = scalar_lea.vmem %s0, 4
    %s143 = smov 3
    %v144 = vld [vmem:[%s142] ss:$16 sm:%s143]
    %s145 = scalar_lea.vmem %s0, 4
    %s146 = smov 12
    %v147 = vld [vmem:[%s145] ss:$16 sm:%s146]
    %vm148 = vcmask 1043458
    %v149 = vsel %vm148, %v147, %v144
    %150 = vrot.lane.b32.xlu0 %v149, 32
    %v151 = vpop.permute.xlu0 %150
    %vm152 = vcmask 326912
    %153 = vst.msk [vmem:[#allocation0] ss:$8 sm:$0xf] %vm152, %v151
    %s154 = scalar_lea.vmem %s0, 3
    %s155 = smov 3
    %v156 = vld [vmem:[%s154] ss:$16 sm:%s155]
    %s157 = scalar_lea.vmem %s0, 3
    %s158 = smov 12
    %v159 = vld [vmem:[%s157] ss:$16 sm:%s158]
    %vm160 = vcmask 1043458
    %v161 = vsel %vm160, %v159, %v156
    %162 = vrot.lane.b32.xlu0 %v161, 24
    %v163 = vpop.permute.xlu0 %162
    %vm164 = vcmask 261312
    %165 = vst.msk [vmem:[#allocation0] ss:$8 sm:$0xf] %vm164, %v163
    %s166 = scalar_lea.vmem %s0, 2
    %s167 = smov 3
    %v168 = vld [vmem:[%s166] ss:$16 sm:%s167]
    %s169 = scalar_lea.vmem %s0, 2
    %s170 = smov 12
    %v171 = vld [vmem:[%s169] ss:$16 sm:%s170]
    %vm172 = vcmask 1043458
    %v173 = vsel %vm172, %v171, %v168
    %174 = vrot.lane.b32.xlu0 %v173, 16
    %v175 = vpop.permute.xlu0 %174
    %vm176 = vcmask 195712
    %177 = vst.msk [vmem:[#allocation0] ss:$8 sm:$0xf] %vm176, %v175
    %s178 = scalar_lea.vmem %s0, 1
    %s179 = smov 3
    %v180 = vld [vmem:[%s178] ss:$16 sm:%s179]
    %s181 = scalar_lea.vmem %s0, 1
    %s182 = smov 12
    %v183 = vld [vmem:[%s181] ss:$16 sm:%s182]
    %vm184 = vcmask 1043458
    %v185 = vsel %vm184, %v183, %v180
    %186 = vrot.lane.b32.xlu0 %v185, 8
    %v187 = vpop.permute.xlu0 %186
    %vm188 = vcmask 130112
    %189 = vst.msk [vmem:[#allocation0] ss:$8 sm:$0xf] %vm188, %v187
    %s191 = sshll.u32 1, 1
    %s192 = ssub.s32 %s191, 1
    %v194 = vld [vmem:[#allocation0] sm:%s192]
    %s195 = sshll.u32 1, 1
    %s196 = ssub.s32 %s195, 1
    %197 = vst [vmem:[%s1] sm:%s196] %v194
    %s198 = scalar_lea.vmem [#allocation0], 8
    %v199 = vld [vmem:[%s198] sm:%s192]
    %s200 = sshll.u32 1, 1
    %s201 = ssub.s32 %s200, 1
    %s202 = scalar_lea.vmem %s1, 1
    %203 = vst [vmem:[%s202] sm:%s201] %v199
    %s204 = scalar_lea.vmem [#allocation0], 16
    %v205 = vld [vmem:[%s204] sm:%s192]
    %s206 = sshll.u32 1, 1
    %s207 = ssub.s32 %s206, 1
    %s208 = smul.addr 1, 2
    %s209 = scalar_lea.vmem %s1, %s208
    %210 = vst [vmem:[%s209] sm:%s207] %v205
    %s211 = scalar_lea.vmem [#allocation0], 24
    %v212 = vld [vmem:[%s211] sm:%s192]
    %s213 = sshll.u32 1, 1
    %s214 = ssub.s32 %s213, 1
    %s215 = smul.addr 1, 3
    %s216 = scalar_lea.vmem %s1, %s215
    %217 = vst [vmem:[%s216] sm:%s214] %v212

// kernel: resnet_body_forward.21
$region0: #{resnet_body_forward.21}
  #allocation0 [shape = 'u32[]', space=smem, size = 0x4, offset = 0x4, fixed_abs, tag = 'smem constant byte address 0x4 - core index']
  #allocation1 [shape = 'u32[144,128]{1,0:T(1,128)}', space=vmem, size = 0x12000, scoped, tag = 'internal scratch']
  %s0 = inlined_call_operand.vmem [shape: bf16[2,512], index: 0, kind: input, shape index: {}]
  %s1 = inlined_call_operand.vmem [shape: f32[1,512], index: 1, kind: input, shape index: {}]
  %s2 = inlined_call_operand.vmem [shape: f32[1,512], index: 2, kind: input, shape index: {}]
  %s3 = inlined_call_operand.vmem [shape: bf16[2,512], index: 3, kind: output, shape index: {}]
  %s4 = sld [smem:[#allocation0]]
  $region22: #{resnet_body_forward.21} parent=0
    _
  %s6 = ssub.s32 1, %s4
  %s7 = scalar_select 0, %s6, %s4
  // Predicated region
  $region2: #{resnet_body_forward.21} parent=0 // pred_check
    _
  $region3: #{resnet_body_forward.21} parent=0 // pred_check_branch
    %9 = sbr.rel (0) target = $region5
  $region4: #{resnet_body_forward.21} parent=0 // pred_region
    _
  $region5: #{resnet_body_forward.21} parent=0 // pred_fallthru
    _
  // Predicated region
  $region6: #{resnet_body_forward.21} parent=0 // pred_check
    _
  $region7: #{resnet_body_forward.21} parent=0 // pred_check_branch
    %11 = sbr.rel (0) target = $region9
  $region8: #{resnet_body_forward.21} parent=0 // pred_region
    _
  $region9: #{resnet_body_forward.21} parent=0 // pred_fallthru
    _
  // Predicated region
  $region10: #{resnet_body_forward.21} parent=0 // pred_check
    _
  $region11: #{resnet_body_forward.21} parent=0 // pred_check_branch
    %13 = sbr.rel (0) target = $region13
  $region12: #{resnet_body_forward.21} parent=0 // pred_region
    _
  $region13: #{resnet_body_forward.21} parent=0 // pred_fallthru
    _
  %v14 = vld [vmem:[%s0] sm:$0xf]
  %v15 = vunpack.c.l.bf16 %v14
  %v16 = vld [vmem:[%s1] sm:$0xf]
  %v18 = vlaneseq
  %v19 = vshrl.u32 %v18, 7
  %v20 = vsub.s32 0, %v19
  %v21 = vrot.slane %v16, %v20
  %v22 = vlaneseq
  %v23 = vshrl.u32 %v22, 7
  %v24 = vsub.s32 1, %v23
  %v25 = vrot.slane %v16, %v24
  %v26 = vlaneseq
  %v27 = vshrl.u32 %v26, 7
  %v28 = vsub.s32 2, %v27
  %v29 = vrot.slane %v16, %v28
  %v30 = vlaneseq
  %v31 = vshrl.u32 %v30, 7
  %v32 = vsub.s32 3, %v31
  %v33 = vrot.slane %v16, %v32
  %v34 = vcombine.low %v21, %v25
  %v35 = vcombine.low %v29, %v33
  %v37 = vunpack.c.l.s4 1983009808
  %v38 = vunpack.c.0.s8 %v37
  %v39 = vlaneseq
  %v40 = vshrl.u32 %v39, 7
  %v41 = vsub.s32 %v38, %v40
  %v42 = vrot.slane %v34, %v41
  %v44 = vunpack.c.l.s4 1983009808
  %v45 = vunpack.c.0.s8 %v44
  %v46 = vlaneseq
  %v47 = vshrl.u32 %v46, 7
  %v48 = vsub.s32 %v45, %v47
  %v49 = vrot.slane %v35, %v48
  %v50 = vcombine.low %v42, %v49
  %v52 = vmul.f32 %v15, %v50
  %v53 = vld [vmem:[%s2] sm:$0xf]
  %v55 = vlaneseq
  %v56 = vshrl.u32 %v55, 7
  %v57 = vsub.s32 0, %v56
  %v58 = vrot.slane %v53, %v57
  %v59 = vlaneseq
  %v60 = vshrl.u32 %v59, 7
  %v61 = vsub.s32 1, %v60
  %v62 = vrot.slane %v53, %v61
  %v63 = vlaneseq
  %v64 = vshrl.u32 %v63, 7
  %v65 = vsub.s32 2, %v64
  %v66 = vrot.slane %v53, %v65
  %v67 = vlaneseq
  %v68 = vshrl.u32 %v67, 7
  %v69 = vsub.s32 3, %v68
  %v70 = vrot.slane %v53, %v69
  %v71 = vcombine.low %v58, %v62
  %v72 = vcombine.low %v66, %v70
  %v74 = vunpack.c.l.s4 1983009808
  %v75 = vunpack.c.0.s8 %v74
  %v76 = vlaneseq
  %v77 = vshrl.u32 %v76, 7
  %v78 = vsub.s32 %v75, %v77
  %v79 = vrot.slane %v71, %v78
  %v81 = vunpack.c.l.s4 1983009808
  %v82 = vunpack.c.0.s8 %v81
  %v83 = vlaneseq
  %v84 = vshrl.u32 %v83, 7
  %v85 = vsub.s32 %v82, %v84
  %v86 = vrot.slane %v72, %v85
  %v87 = vcombine.low %v79, %v86
  %v89 = vadd.f32 %v52, %v87
  %v90 = vmax.f32 %v89, 0.0
  %v92 = vcombine.high %v90, %v90
  %v94 = vunpack.c.l.s4 1983009808
  %v95 = vunpack.c.0.s8 %v94
  %v96 = vlaneseq
  %v97 = vshrl.u32 %v96, 7
  %v98 = vsub.s32 %v95, %v97
  %v99 = vrot.slane %v90, %v98
  %v101 = vunpack.c.l.s4 1983009808
  %v102 = vunpack.c.0.s8 %v101
  %v103 = vlaneseq
  %v104 = vshrl.u32 %v103, 7
  %v105 = vsub.s32 %v102, %v104
  %v106 = vrot.slane %v92, %v105
  %v107 = vcombine.high %v99, %v99
  %v108 = vcombine.high %v106, %v106
  %v113 = vpack.c.bf16 %v99, %v99
  %v114 = vpack.c.bf16 %v107, %v107
  %v115 = vpack.c.bf16 %v106, %v106
  %v116 = vpack.c.bf16 %v108, %v108
  %v121 = vcombine.low %v113, %v114
  %v122 = vcombine.low %v115, %v116
  %v124 = vunpack.c.l.s4 1966171168
  %v125 = vunpack.c.0.s8 %v124
  %v126 = vlaneseq
  %v127 = vshrl.u32 %v126, 7
  %v128 = vsub.s32 %v125, %v127
  %v129 = vrot.slane %v121, %v128
  %v131 = vunpack.c.l.s4 1966171168
  %v132 = vunpack.c.0.s8 %v131
  %v133 = vlaneseq
  %v134 = vshrl.u32 %v133, 7
  %v135 = vsub.s32 %v132, %v134
  %v136 = vrot.slane %v122, %v135
  %v137 = vcombine.low %v129, %v136
  %v139 = vunpack.c.l.s4 1966171168
  %v140 = vunpack.c.0.s8 %v139
  %v141 = vlaneseq
  %v142 = vshrl.u32 %v141, 7
  %v143 = vsub.s32 %v140, %v142
  %v144 = vrot.slane %v137, %v143
  %146 = vst [vmem:[%s3] sm:$0xf] %v144
  // Predicated region
  $region14: #{resnet_body_forward.21} parent=0 // pred_check
    _
  $region15: #{resnet_body_forward.21} parent=0 // pred_check_branch
    %148 = sbr.rel (0) target = $region17
  $region16: #{resnet_body_forward.21} parent=0 // pred_region
    _
  $region17: #{resnet_body_forward.21} parent=0 // pred_fallthru
    _
  // Predicated region
  $region18: #{resnet_body_forward.21} parent=0 // pred_check
    _
  $region19: #{resnet_body_forward.21} parent=0 // pred_check_branch
    %150 = sbr.rel (0) target = $region21
  $region20: #{resnet_body_forward.21} parent=0 // pred_region
    _
  $region21: #{resnet_body_forward.21} parent=0 // pred_fallthru
    _

// kernel: resnet_body_forward.20
$region0: #{resnet_body_forward.20}
  #allocation0 [shape = 'u32[]', space=smem, size = 0x4, offset = 0x4, fixed_abs, tag = 'smem constant byte address 0x4 - core index']
  #allocation1 [shape = 'u32[144,128]{1,0:T(1,128)}', space=vmem, size = 0x12000, scoped, tag = 'internal scratch']
  %s0 = inlined_call_operand.vmem [shape: bf16[128,196], index: 0, kind: input, shape index: {}]
  %s1 = inlined_call_operand.vmem [shape: bf16[196,8], index: 1, kind: input, shape index: {}]
  %s2 = inlined_call_operand.vmem [shape: bf16[128,8], index: 2, kind: output, shape index: {0}]
  %s3 = inlined_call_operand.vmem [shape: f32[8,8], index: 3, kind: output, shape index: {1}]
  %s4 = inlined_call_operand.vmem [shape: f32[8,8], index: 4, kind: output, shape index: {2}]
  %5 = xla_tuple %s2, %s3, %s4
  %s6 = sld [smem:[#allocation0]]
  $region34: #{resnet_body_forward.20} parent=0
    _
  %s8 = ssub.s32 1, %s6
  %s9 = scalar_select 0, %s8, %s6
  // Predicated region
  $region2: #{resnet_body_forward.20} parent=0 // pred_check
    _
  $region3: #{resnet_body_forward.20} parent=0 // pred_check_branch
    %11 = sbr.rel (0) target = $region5
  $region4: #{resnet_body_forward.20} parent=0 // pred_region
    _
  $region5: #{resnet_body_forward.20} parent=0 // pred_fallthru
    _
  // Predicated region
  $region6: #{resnet_body_forward.20} parent=0 // pred_check
    _
  $region7: #{resnet_body_forward.20} parent=0 // pred_check_branch
    %13 = sbr.rel (0) target = $region9
  $region8: #{resnet_body_forward.20} parent=0 // pred_region
    _
  $region9: #{resnet_body_forward.20} parent=0 // pred_fallthru
    _
  %v15 = vld [vmem:[%s0] sm:$0xff]
  %v16 = vld [vmem:[%s0 + $0x8] sm:$0xff]
  %v17 = vld [vmem:[%s0 + $0x10] sm:$0xff]
  %v18 = vld [vmem:[%s0 + $0x18] sm:$0xff]
  %v19 = vld [vmem:[%s0 + $0x20] sm:$0xff]
  %v20 = vld [vmem:[%s0 + $0x28] sm:$0xff]
  %v21 = vld [vmem:[%s0 + $0x30] sm:$0xff]
  %v22 = vld [vmem:[%s0 + $0x38] sm:$0xff]
  %v23 = vld [vmem:[%s0 + $0x40] sm:$0xff]
  %v24 = vld [vmem:[%s0 + $0x48] sm:$0xff]
  %v25 = vld [vmem:[%s0 + $0x50] sm:$0xff]
  %v26 = vld [vmem:[%s0 + $0x58] sm:$0xff]
  %v27 = vld [vmem:[%s0 + $0x60] sm:$0xff]
  %v28 = vld [vmem:[%s0 + $0x68] sm:$0xff]
  %v29 = vld [vmem:[%s0 + $0x70] sm:$0xff]
  %v30 = vld [vmem:[%s0 + $0x78] sm:$0xff]
  %v31 = vld [vmem:[%s1] sm:$0xf]
  %v32 = vld [vmem:[%s1 + $0x4] sm:$0xf]
  %v33 = vld [vmem:[%s1 + $0x8] sm:$0xf]
  %v34 = vld [vmem:[%s1 + $0xc] sm:$0xf]
  %v35 = vld [vmem:[%s1 + $0x10] sm:$0xf]
  %v36 = vld [vmem:[%s1 + $0x14] sm:$0xf]
  %v37 = vld [vmem:[%s1 + $0x18] sm:$0xf]
  %v38 = vld [vmem:[%s1 + $0x1c] sm:$0xf]
  %v39 = vld [vmem:[%s1 + $0x20] sm:$0xf]
  %v40 = vld [vmem:[%s1 + $0x24] sm:$0xf]
  %v41 = vld [vmem:[%s1 + $0x28] sm:$0xf]
  %v42 = vld [vmem:[%s1 + $0x2c] sm:$0xf]
  %v43 = vld [vmem:[%s1 + $0x30] sm:$0xf]
  %v44 = vld [vmem:[%s1 + $0x34] sm:$0xf]
  %v45 = vld [vmem:[%s1 + $0x38] sm:$0xf]
  %v46 = vld [vmem:[%s1 + $0x3c] sm:$0xf]
  %v47 = vld [vmem:[%s1 + $0x40] sm:$0xf]
  %v48 = vld [vmem:[%s1 + $0x44] sm:$0xf]
  %v49 = vld [vmem:[%s1 + $0x48] sm:$0xf]
  %v50 = vld [vmem:[%s1 + $0x4c] sm:$0xf]
  %v51 = vld [vmem:[%s1 + $0x50] sm:$0xf]
  %v52 = vld [vmem:[%s1 + $0x54] sm:$0xf]
  %v53 = vld [vmem:[%s1 + $0x58] sm:$0xf]
  %v54 = vld [vmem:[%s1 + $0x5c] sm:$0xf]
  %v55 = vld [vmem:[%s1 + $0x60] sm:$0x3]
  %v72 = vunpack.c.l.b16 %v15
  %v73 = vunpack.c.h.b16 %v15
  %v74 = vunpack.c.l.b16 %v16
  %v75 = vunpack.c.h.b16 %v16
  %v76 = vunpack.c.l.b16 %v17
  %v77 = vunpack.c.h.b16 %v17
  %v78 = vunpack.c.l.b16 %v18
  %v79 = vunpack.c.h.b16 %v18
  %v80 = vunpack.c.l.b16 %v19
  %v81 = vunpack.c.h.b16 %v19
  %v82 = vunpack.c.l.b16 %v20
  %v83 = vunpack.c.h.b16 %v20
  %v84 = vunpack.c.l.b16 %v21
  %v85 = vunpack.c.h.b16 %v21
  %v86 = vunpack.c.l.b16 %v22
  %v87 = vunpack.c.h.b16 %v22
  %v88 = vunpack.c.l.b16 %v23
  %v89 = vunpack.c.h.b16 %v23
  %v90 = vunpack.c.l.b16 %v24
  %v91 = vunpack.c.h.b16 %v24
  %v92 = vunpack.c.l.b16 %v25
  %v93 = vunpack.c.h.b16 %v25
  %v94 = vunpack.c.l.b16 %v26
  %v95 = vunpack.c.h.b16 %v26
  %v96 = vunpack.c.l.b16 %v27
  %v97 = vunpack.c.h.b16 %v27
  %v98 = vunpack.c.l.b16 %v28
  %v99 = vunpack.c.h.b16 %v28
  %v100 = vunpack.c.l.b16 %v29
  %v101 = vunpack.c.h.b16 %v29
  %v102 = vunpack.c.l.b16 %v30
  %v103 = vunpack.c.h.b16 %v30
  %v104 = vpack.c.b16 %v74, %v72
  %v105 = vpack.c.b16 %v75, %v73
  %v106 = vpack.c.b16 %v78, %v76
  %v107 = vpack.c.b16 %v79, %v77
  %v108 = vpack.c.b16 %v82, %v80
  %v109 = vpack.c.b16 %v83, %v81
  %v110 = vpack.c.b16 %v86, %v84
  %v111 = vpack.c.b16 %v87, %v85
  %v112 = vpack.c.b16 %v90, %v88
  %v113 = vpack.c.b16 %v91, %v89
  %v114 = vpack.c.b16 %v94, %v92
  %v115 = vpack.c.b16 %v95, %v93
  %v116 = vpack.c.b16 %v98, %v96
  %v117 = vpack.c.b16 %v99, %v97
  %v118 = vpack.c.b16 %v102, %v100
  %v119 = vpack.c.b16 %v103, %v101
  %v153 = vunpack.c.l.b16 %v31
  %v154 = vunpack.c.l.b16 %v32
  %v155 = vunpack.c.l.b16 %v33
  %v156 = vunpack.c.l.b16 %v34
  %v157 = vunpack.c.l.b16 %v35
  %v158 = vunpack.c.l.b16 %v36
  %v159 = vunpack.c.l.b16 %v37
  %v160 = vunpack.c.l.b16 %v38
  %v161 = vunpack.c.l.b16 %v39
  %v162 = vunpack.c.l.b16 %v40
  %v163 = vunpack.c.l.b16 %v41
  %v164 = vunpack.c.l.b16 %v42
  %v165 = vunpack.c.l.b16 %v43
  %v166 = vunpack.c.l.b16 %v44
  %v167 = vunpack.c.l.b16 %v45
  %v168 = vunpack.c.l.b16 %v46
  %v169 = vunpack.c.l.b16 %v47
  %v170 = vunpack.c.l.b16 %v48
  %v171 = vunpack.c.l.b16 %v49
  %v172 = vunpack.c.l.b16 %v50
  %v173 = vunpack.c.l.b16 %v51
  %v174 = vunpack.c.l.b16 %v52
  %v175 = vunpack.c.l.b16 %v53
  %v176 = vunpack.c.l.b16 %v54
  %v177 = vunpack.c.l.b16 %v55
  %v178 = vpack.c.b16 %v154, %v153
  %v179 = vpack.c.b16 %v156, %v155
  %v180 = vpack.c.b16 %v158, %v157
  %v181 = vpack.c.b16 %v160, %v159
  %v182 = vpack.c.b16 %v162, %v161
  %v183 = vpack.c.b16 %v164, %v163
  %v184 = vpack.c.b16 %v166, %v165
  %v185 = vpack.c.b16 %v168, %v167
  %v186 = vpack.c.b16 %v170, %v169
  %v187 = vpack.c.b16 %v172, %v171
  %v188 = vpack.c.b16 %v174, %v173
  %v189 = vpack.c.b16 %v176, %v175
  %v190 = vpack.c.b16 %v177, %v177
  %vm203 = vcmask 556032
  %v205 = vsel %vm203, %v105, 0
  %v208 = vsel %vm203, %v107, 0
  %v211 = vsel %vm203, %v109, 0
  %v214 = vsel %vm203, %v111, 0
  %v217 = vsel %vm203, %v113, 0
  %v220 = vsel %vm203, %v115, 0
  %v223 = vsel %vm203, %v117, 0
  %v226 = vsel %vm203, %v119, 0
  %vm228 = vcmask 1041408
  %v230 = vsel %vm228, %v190, 0
  %232 = vmatprep.subr.bf16.mxu0 0
  %233 = vmatpush1.bf16.msra.mxu0 %v185
  %234 = vmatprep.subr.bf16.mxu0 0
  %235 = vmatpush1.bf16.msra.mxu0 %v184
  %236 = vmatprep.subr.bf16.mxu0 0
  %237 = vmatpush1.bf16.msra.mxu0 %v183
  %238 = vmatprep.subr.bf16.mxu0 0
  %239 = vmatpush1.bf16.msra.mxu0 %v182
  %240 = vmatprep.subr.bf16.mxu0 0
  %241 = vmatpush1.bf16.msra.mxu0 %v181
  %242 = vmatprep.subr.bf16.mxu0 0
  %243 = vmatpush1.bf16.msra.mxu0 %v180
  %244 = vmatprep.subr.bf16.mxu0 0
  %245 = vmatpush1.bf16.msra.mxu0 %v179
  %246 = vmatprep.subr.bf16.mxu0 0
  %247 = vmatpush1.bf16.msra.mxu0 %v178
  %248 = vmatprep.subr.bf16.mxu0 0
  %249 = vmatpush2.bf16.msra.mxu0 0
  %250 = vmatprep.subr.bf16.mxu0 0
  %251 = vmatpush2.bf16.msra.mxu0 0
  %252 = vmatprep.subr.bf16.mxu0 0
  %253 = vmatpush2.bf16.msra.mxu0 0
  %254 = vmatprep.subr.bf16.mxu0 0
  %255 = vmatpush2.bf16.msra.mxu0 %v230
  %256 = vmatprep.subr.bf16.mxu0 0
  %257 = vmatpush2.bf16.msra.mxu0 %v189
  %258 = vmatprep.subr.bf16.mxu0 0
  %259 = vmatpush2.bf16.msra.mxu0 %v188
  %260 = vmatprep.subr.bf16.mxu0 0
  %261 = vmatpush2.bf16.msra.mxu0 %v187
  %262 = vmatprep.subr.bf16.mxu0 0
  %263 = vmatpush2.bf16.msra.mxu0 %v186
  %264 = vmatprep.mubr.bf16.mxu0 %v205
  %265 = vmatmul.mubr.bf16.gmra.mxu0 %v104
  %v266 = vpop.f32.mrf.mxu0
  %v267 = vadd.f32 0.0, %v266
  %v268 = vpop.f32.mrf.mxu0
  %v269 = vpop.f32.mrf.mxu0
  %v270 = vadd.f32 0.0, %v269
  %v271 = vpop.f32.mrf.mxu0
  %272 = vmatprep.mubr.bf16.mxu0 %v208
  %273 = vmatmul.mubr.bf16.gmra.mxu0 %v106
  %v274 = vpop.f32.mrf.mxu0
  %v275 = vadd.f32 0.0, %v274
  %v276 = vpop.f32.mrf.mxu0
  %v277 = vpop.f32.mrf.mxu0
  %v278 = vadd.f32 0.0, %v277
  %v279 = vpop.f32.mrf.mxu0
  %280 = vmatprep.mubr.bf16.mxu0 %v211
  %281 = vmatmul.mubr.bf16.gmra.mxu0 %v108
  %v282 = vpop.f32.mrf.mxu0
  %v283 = vadd.f32 0.0, %v282
  %v284 = vpop.f32.mrf.mxu0
  %v285 = vpop.f32.mrf.mxu0
  %v286 = vadd.f32 0.0, %v285
  %v287 = vpop.f32.mrf.mxu0
  %288 = vmatprep.mubr.bf16.mxu0 %v214
  %289 = vmatmul.mubr.bf16.gmra.mxu0 %v110
  %v290 = vpop.f32.mrf.mxu0
  %v291 = vadd.f32 0.0, %v290
  %v292 = vpop.f32.mrf.mxu0
  %v293 = vpop.f32.mrf.mxu0
  %v294 = vadd.f32 0.0, %v293
  %v295 = vpop.f32.mrf.mxu0
  %296 = vmatprep.mubr.bf16.mxu0 %v217
  %297 = vmatmul.mubr.bf16.gmra.mxu0 %v112
  %v298 = vpop.f32.mrf.mxu0
  %v299 = vadd.f32 0.0, %v298
  %v300 = vpop.f32.mrf.mxu0
  %v301 = vpop.f32.mrf.mxu0
  %v302 = vadd.f32 0.0, %v301
  %v303 = vpop.f32.mrf.mxu0
  %304 = vmatprep.mubr.bf16.mxu0 %v220
  %305 = vmatmul.mubr.bf16.gmra.mxu0 %v114
  %v306 = vpop.f32.mrf.mxu0
  %v307 = vadd.f32 0.0, %v306
  %v308 = vpop.f32.mrf.mxu0
  %v309 = vpop.f32.mrf.mxu0
  %v310 = vadd.f32 0.0, %v309
  %v311 = vpop.f32.mrf.mxu0
  %312 = vmatprep.mubr.bf16.mxu0 %v223
  %313 = vmatmul.mubr.bf16.gmra.mxu0 %v116
  %v314 = vpop.f32.mrf.mxu0
  %v315 = vadd.f32 0.0, %v314
  %v316 = vpop.f32.mrf.mxu0
  %v317 = vpop.f32.mrf.mxu0
  %v318 = vadd.f32 0.0, %v317
  %v319 = vpop.f32.mrf.mxu0
  %320 = vmatprep.mubr.bf16.mxu0 %v226
  %321 = vmatmul.mubr.bf16.gmra.mxu0 %v118
  %v322 = vpop.f32.mrf.mxu0
  %v323 = vadd.f32 0.0, %v322
  %v324 = vpop.f32.mrf.mxu0
  %v325 = vpop.f32.mrf.mxu0
  %v326 = vadd.f32 0.0, %v325
  %v327 = vpop.f32.mrf.mxu0
  %328 = vdwg.mxu0
  %v329 = vpack.c.bf16 %v270, %v267
  %v330 = vpack.c.bf16 %v278, %v275
  %v331 = vpack.c.bf16 %v286, %v283
  %v332 = vpack.c.bf16 %v294, %v291
  %v333 = vpack.c.bf16 %v302, %v299
  %v334 = vpack.c.bf16 %v310, %v307
  %v335 = vpack.c.bf16 %v318, %v315
  %v336 = vpack.c.bf16 %v326, %v323
  %v345 = vunpack.c.l.b16 %v329
  %v346 = vunpack.c.h.b16 %v329
  %v347 = vunpack.c.l.b16 %v330
  %v348 = vunpack.c.h.b16 %v330
  %v349 = vunpack.c.l.b16 %v331
  %v350 = vunpack.c.h.b16 %v331
  %v351 = vunpack.c.l.b16 %v332
  %v352 = vunpack.c.h.b16 %v332
  %v353 = vunpack.c.l.b16 %v333
  %v354 = vunpack.c.h.b16 %v333
  %v355 = vunpack.c.l.b16 %v334
  %v356 = vunpack.c.h.b16 %v334
  %v357 = vunpack.c.l.b16 %v335
  %v358 = vunpack.c.h.b16 %v335
  %v359 = vunpack.c.l.b16 %v336
  %v360 = vunpack.c.h.b16 %v336
  %v361 = vpack.c.b16 %v345, %v345
  %v362 = vpack.c.b16 %v346, %v346
  %v363 = vpack.c.b16 %v347, %v347
  %v364 = vpack.c.b16 %v348, %v348
  %v365 = vpack.c.b16 %v349, %v349
  %v366 = vpack.c.b16 %v350, %v350
  %v367 = vpack.c.b16 %v351, %v351
  %v368 = vpack.c.b16 %v352, %v352
  %v369 = vpack.c.b16 %v353, %v353
  %v370 = vpack.c.b16 %v354, %v354
  %v371 = vpack.c.b16 %v355, %v355
  %v372 = vpack.c.b16 %v356, %v356
  %v373 = vpack.c.b16 %v357, %v357
  %v374 = vpack.c.b16 %v358, %v358
  %v375 = vpack.c.b16 %v359, %v359
  %v376 = vpack.c.b16 %v360, %v360
  %vm393 = vcmask 60416
  %394 = vst.msk [vmem:[%s2] sm:$0xf] %vm393, %v361
  %395 = vst.msk [vmem:[%s2 + $0x4] sm:$0xf] %vm393, %v362
  %396 = vst.msk [vmem:[%s2 + $0x8] sm:$0xf] %vm393, %v363
  %397 = vst.msk [vmem:[%s2 + $0xc] sm:$0xf] %vm393, %v364
  %398 = vst.msk [vmem:[%s2 + $0x10] sm:$0xf] %vm393, %v365
  %399 = vst.msk [vmem:[%s2 + $0x14] sm:$0xf] %vm393, %v366
  %400 = vst.msk [vmem:[%s2 + $0x18] sm:$0xf] %vm393, %v367
  %401 = vst.msk [vmem:[%s2 + $0x1c] sm:$0xf] %vm393, %v368
  %402 = vst.msk [vmem:[%s2 + $0x20] sm:$0xf] %vm393, %v369
  %403 = vst.msk [vmem:[%s2 + $0x24] sm:$0xf] %vm393, %v370
  %404 = vst.msk [vmem:[%s2 + $0x28] sm:$0xf] %vm393, %v371
  %405 = vst.msk [vmem:[%s2 + $0x2c] sm:$0xf] %vm393, %v372
  %406 = vst.msk [vmem:[%s2 + $0x30] sm:$0xf] %vm393, %v373
  %407 = vst.msk [vmem:[%s2 + $0x34] sm:$0xf] %vm393, %v374
  %408 = vst.msk [vmem:[%s2 + $0x38] sm:$0xf] %vm393, %v375
  %409 = vst.msk [vmem:[%s2 + $0x3c] sm:$0xf] %vm393, %v376
  %vm410 = vcmask 64512
  %v411 = vsel %vm410, %v267, 0.0
  %v412 = vsel %vm410, %v270, 0.0
  %v413 = vadd.f32 %v411, %v412
  %v414 = vsel %vm410, %v275, 0.0
  %v415 = vadd.f32 %v413, %v414
  %v416 = vsel %vm410, %v278, 0.0
  %v417 = vadd.f32 %v415, %v416
  %v418 = vsel %vm410, %v283, 0.0
  %v419 = vadd.f32 %v417, %v418
  %v420 = vsel %vm410, %v286, 0.0
  %v421 = vadd.f32 %v419, %v420
  %v422 = vsel %vm410, %v291, 0.0
  %v423 = vadd.f32 %v421, %v422
  %v424 = vsel %vm410, %v294, 0.0
  %v425 = vadd.f32 %v423, %v424
  %v426 = vsel %vm410, %v299, 0.0
  %v427 = vadd.f32 %v425, %v426
  %v428 = vsel %vm410, %v302, 0.0
  %v429 = vadd.f32 %v427, %v428
  %v430 = vsel %vm410, %v307, 0.0
  %v431 = vadd.f32 %v429, %v430
  %v432 = vsel %vm410, %v310, 0.0
  %v433 = vadd.f32 %v431, %v432
  %v434 = vsel %vm410, %v315, 0.0
  %v435 = vadd.f32 %v433, %v434
  %v436 = vsel %vm410, %v318, 0.0
  %v437 = vadd.f32 %v435, %v436
  %v438 = vsel %vm410, %v323, 0.0
  %v439 = vadd.f32 %v437, %v438
  %v440 = vsel %vm410, %v326, 0.0
  %v441 = vadd.f32 %v439, %v440
  %442 = vst.msk [vmem:[%s3] sm:$0xff] %vm410, %v441
  %v443 = vmul.f32 %v267, %v267
  %v444 = vmul.f32 %v270, %v270
  %v445 = vmul.f32 %v275, %v275
  %v446 = vmul.f32 %v278, %v278
  %v447 = vmul.f32 %v283, %v283
  %v448 = vmul.f32 %v286, %v286
  %v449 = vmul.f32 %v291, %v291
  %v450 = vmul.f32 %v294, %v294
  %v451 = vmul.f32 %v299, %v299
  %v452 = vmul.f32 %v302, %v302
  %v453 = vmul.f32 %v307, %v307
  %v454 = vmul.f32 %v310, %v310
  %v455 = vmul.f32 %v315, %v315
  %v456 = vmul.f32 %v318, %v318
  %v457 = vmul.f32 %v323, %v323
  %v458 = vmul.f32 %v326, %v326
  %v459 = vsel %vm410, %v443, 0.0
  %v460 = vsel %vm410, %v444, 0.0
  %v461 = vadd.f32 %v459, %v460
  %v462 = vsel %vm410, %v445, 0.0
  %v463 = vadd.f32 %v461, %v462
  %v464 = vsel %vm410, %v446, 0.0
  %v465 = vadd.f32 %v463, %v464
  %v466 = vsel %vm410, %v447, 0.0
  %v467 = vadd.f32 %v465, %v466
  %v468 = vsel %vm410, %v448, 0.0
  %v469 = vadd.f32 %v467, %v468
  %v470 = vsel %vm410, %v449, 0.0
  %v471 = vadd.f32 %v469, %v470
  %v472 = vsel %vm410, %v450, 0.0
  %v473 = vadd.f32 %v471, %v472
  %v474 = vsel %vm410, %v451, 0.0
  %v475 = vadd.f32 %v473, %v474
  %v476 = vsel %vm410, %v452, 0.0
  %v477 = vadd.f32 %v475, %v476
  %v478 = vsel %vm410, %v453, 0.0
  %v479 = vadd.f32 %v477, %v478
  %v480 = vsel %vm410, %v454, 0.0
  %v481 = vadd.f32 %v479, %v480
  %v482 = vsel %vm410, %v455, 0.0
  %v483 = vadd.f32 %v481, %v482
  %v484 = vsel %vm410, %v456, 0.0
  %v485 = vadd.f32 %v483, %v484
  %v486 = vsel %vm410, %v457, 0.0
  %v487 = vadd.f32 %v485, %v486
  %v488 = vsel %vm410, %v458, 0.0
  %v489 = vadd.f32 %v487, %v488
  %490 = vst.msk [vmem:[%s4] sm:$0xff] %vm410, %v489
  // Predicated region
  $region10: #{resnet_body_forward.20} parent=0 // pred_check
    _
  $region11: #{resnet_body_forward.20} parent=0 // pred_check_branch
    %492 = sbr.rel (0) target = $region13
  $region12: #{resnet_body_forward.20} parent=0 // pred_region
    _
  $region13: #{resnet_body_forward.20} parent=0 // pred_fallthru
    _
  // Predicated region
  $region14: #{resnet_body_forward.20} parent=0 // pred_check
    _
  $region15: #{resnet_body_forward.20} parent=0 // pred_check_branch
    %494 = sbr.rel (0) target = $region17
  $region16: #{resnet_body_forward.20} parent=0 // pred_region
    _
  $region17: #{resnet_body_forward.20} parent=0 // pred_fallthru
    _
  // Predicated region
  $region18: #{resnet_body_forward.20} parent=0 // pred_check
    _
  $region19: #{resnet_body_forward.20} parent=0 // pred_check_branch
    %496 = sbr.rel (0) target = $region21
  $region20: #{resnet_body_forward.20} parent=0 // pred_region
    _
  $region21: #{resnet_body_forward.20} parent=0 // pred_fallthru
    _
  // Predicated region
  $region22: #{resnet_body_forward.20} parent=0 // pred_check
    _
  $region23: #{resnet_body_forward.20} parent=0 // pred_check_branch
    %498 = sbr.rel (0) target = $region25
  $region24: #{resnet_body_forward.20} parent=0 // pred_region
    _
  $region25: #{resnet_body_forward.20} parent=0 // pred_fallthru
    _
  // Predicated region
  $region26: #{resnet_body_forward.20} parent=0 // pred_check
    _
  $region27: #{resnet_body_forward.20} parent=0 // pred_check_branch
    %500 = sbr.rel (0) target = $region29
  $region28: #{resnet_body_forward.20} parent=0 // pred_region
    _
  $region29: #{resnet_body_forward.20} parent=0 // pred_fallthru
    _
  // Predicated region
  $region30: #{resnet_body_forward.20} parent=0 // pred_check
    _
  $region31: #{resnet_body_forward.20} parent=0 // pred_check_branch
    %502 = sbr.rel (0) target = $region33
  $region32: #{resnet_body_forward.20} parent=0 // pred_region
    _
  $region33: #{resnet_body_forward.20} parent=0 // pred_fallthru
    _

// kernel: tile.131
$region0: #{tile.131}
  #allocation0 [shape = 's32[1]{0}', space=sflag, size = 0x4, scoped, tag = 'scoped memory for tile.131']
  %s0 = inlined_call_operand.vmem [shape: f32[16], index: 0, kind: input, shape index: {}]
  %s1 = inlined_call_operand.vmem [shape: f32[16,16], index: 1, kind: output, shape index: {}]
  // Predicated region
  $region2: #{tile.131} parent=0 // pred_check
    _
  $region3: #{tile.131} parent=0 // pred_check_branch
    %3 = sbr.rel (0) target = $region5
  $region4: #{tile.131} parent=0 // pred_region
    _
  $region5: #{tile.131} parent=0 // pred_fallthru
    _
  %v4 = vld [vmem:[%s0] ss:$0 sm:$0xff]
  %5 = vst [vmem:[%s1] sm:$0xff] %v4
  %s6 = scalar_lea.vmem %s1, 8
  %7 = vst [vmem:[%s6] sm:$0xff] %v4

// kernel: tile.136
$region0: #{tile.136}
  %s0 = inlined_call_operand.vmem [shape: f32[16,16], index: 0, kind: input, shape index: {}]
  %s1 = inlined_call_operand.vmem [shape: f32[1,256], index: 1, kind: output, shape index: {}]
  $region1: #{tile.136} parent=0
    #allocation0 [shape = 'u8[8192]{0}', space=vmem, size = 0x2000, scoped, tag = 'scoped mem for output reshape']
    %s2 = smov 3
    %v3 = vld [vmem:[%s0] ss:$8 sm:%s2]
    %vm4 = vcmask 130048
    %5 = vst.msk [vmem:[#allocation0] ss:$8 sm:$0x3] %vm4, %v3
    %s6 = scalar_lea.vmem %s0, 7
    %s7 = smov 3
    %v8 = vld [vmem:[%s6] ss:$8 sm:%s7]
    %9 = vrot.lane.b32.xlu0 %v8, 112
    %v10 = vpop.permute.xlu0 %9
    %vm11 = vcmask 1048448
    %12 = vst.msk [vmem:[#allocation0] ss:$8 sm:$0x3] %vm11, %v10
    %s13 = scalar_lea.vmem %s0, 6
    %s14 = smov 3
    %v15 = vld [vmem:[%s13] ss:$8 sm:%s14]
    %16 = vrot.lane.b32.xlu0 %v15, 96
    %v17 = vpop.permute.xlu0 %16
    %vm18 = vcmask 917248
    %19 = vst.msk [vmem:[#allocation0] ss:$8 sm:$0x3] %vm18, %v17
    %s20 = scalar_lea.vmem %s0, 5
    %s21 = smov 3
    %v22 = vld [vmem:[%s20] ss:$8 sm:%s21]
    %23 = vrot.lane.b32.xlu0 %v22, 80
    %v24 = vpop.permute.xlu0 %23
    %vm25 = vcmask 786048
    %26 = vst.msk [vmem:[#allocation0] ss:$8 sm:$0x3] %vm25, %v24
    %s27 = scalar_lea.vmem %s0, 4
    %s28 = smov 3
    %v29 = vld [vmem:[%s27] ss:$8 sm:%s28]
    %30 = vrot.lane.b32.xlu0 %v29, 64
    %v31 = vpop.permute.xlu0 %30
    %vm32 = vcmask 654848
    %33 = vst.msk [vmem:[#allocation0] ss:$8 sm:$0x3] %vm32, %v31
    %s34 = scalar_lea.vmem %s0, 3
    %s35 = smov 3
    %v36 = vld [vmem:[%s34] ss:$8 sm:%s35]
    %37 = vrot.lane.b32.xlu0 %v36, 48
    %v38 = vpop.permute.xlu0 %37
    %vm39 = vcmask 523648
    %40 = vst.msk [vmem:[#allocation0] ss:$8 sm:$0x3] %vm39, %v38
    %s41 = scalar_lea.vmem %s0, 2
    %s42 = smov 3
    %v43 = vld [vmem:[%s41] ss:$8 sm:%s42]
    %44 = vrot.lane.b32.xlu0 %v43, 32
    %v45 = vpop.permute.xlu0 %44
    %vm46 = vcmask 392448
    %47 = vst.msk [vmem:[#allocation0] ss:$8 sm:$0x3] %vm46, %v45
    %s48 = scalar_lea.vmem %s0, 1
    %s49 = smov 3
    %v50 = vld [vmem:[%s48] ss:$8 sm:%s49]
    %51 = vrot.lane.b32.xlu0 %v50, 16
    %v52 = vpop.permute.xlu0 %51
    %vm53 = vcmask 261248
    %54 = vst.msk [vmem:[#allocation0] ss:$8 sm:$0x3] %vm53, %v52
    %s56 = sshll.u32 1, 1
    %s57 = ssub.s32 %s56, 1
    %v59 = vld [vmem:[#allocation0] sm:%s57]
    %s60 = sshll.u32 1, 1
    %s61 = ssub.s32 %s60, 1
    %62 = vst [vmem:[%s1] sm:%s61] %v59
    %s63 = scalar_lea.vmem [#allocation0], 8
    %v64 = vld [vmem:[%s63] sm:%s57]
    %s65 = sshll.u32 1, 1
    %s66 = ssub.s32 %s65, 1
    %s67 = scalar_lea.vmem %s1, 1
    %68 = vst [vmem:[%s67] sm:%s66] %v64

// kernel: resnet_body_forward.22
$region0: #{resnet_body_forward.22}
  #allocation0 [shape = 'u32[]', space=smem, size = 0x4, offset = 0x4, fixed_abs, tag = 'smem constant byte address 0x4 - core index']
  #allocation1 [shape = 'u32[144,128]{1,0:T(1,128)}', space=vmem, size = 0x12000, scoped, tag = 'internal scratch']
  %s0 = inlined_call_operand.vmem [shape: bf16[32,72], index: 0, kind: input, shape index: {}]
  %s1 = inlined_call_operand.vmem [shape: bf16[72,32], index: 1, kind: input, shape index: {}]
  %s2 = inlined_call_operand.vmem [shape: bf16[32,32], index: 2, kind: output, shape index: {0}]
  %s3 = inlined_call_operand.vmem [shape: f32[8,32], index: 3, kind: output, shape index: {1}]
  %s4 = inlined_call_operand.vmem [shape: f32[8,32], index: 4, kind: output, shape index: {2}]
  %5 = xla_tuple %s2, %s3, %s4
  %s6 = sld [smem:[#allocation0]]
  $region34: #{resnet_body_forward.22} parent=0
    _
  %s8 = ssub.s32 1, %s6
  %s9 = scalar_select 0, %s8, %s6
  // Predicated region
  $region2: #{resnet_body_forward.22} parent=0 // pred_check
    _
  $region3: #{resnet_body_forward.22} parent=0 // pred_check_branch
    %11 = sbr.rel (0) target = $region5
  $region4: #{resnet_body_forward.22} parent=0 // pred_region
    _
  $region5: #{resnet_body_forward.22} parent=0 // pred_fallthru
    _
  // Predicated region
  $region6: #{resnet_body_forward.22} parent=0 // pred_check
    _
  $region7: #{resnet_body_forward.22} parent=0 // pred_check_branch
    %13 = sbr.rel (0) target = $region9
  $region8: #{resnet_body_forward.22} parent=0 // pred_region
    _
  $region9: #{resnet_body_forward.22} parent=0 // pred_fallthru
    _
  %v15 = vld [vmem:[%s0] sm:$0xf]
  %v16 = vld [vmem:[%s0 + $0x4] sm:$0xf]
  %v17 = vld [vmem:[%s0 + $0x8] sm:$0xf]
  %v18 = vld [vmem:[%s0 + $0xc] sm:$0xf]
  %v19 = vld [vmem:[%s1] sm:$0xf]
  %v20 = vld [vmem:[%s1 + $0x4] sm:$0xf]
  %v21 = vld [vmem:[%s1 + $0x8] sm:$0xf]
  %v22 = vld [vmem:[%s1 + $0xc] sm:$0xf]
  %v23 = vld [vmem:[%s1 + $0x10] sm:$0xf]
  %v24 = vld [vmem:[%s1 + $0x14] sm:$0xf]
  %v25 = vld [vmem:[%s1 + $0x18] sm:$0xf]
  %v26 = vld [vmem:[%s1 + $0x1c] sm:$0xf]
  %v27 = vld [vmem:[%s1 + $0x20] sm:$0xf]
  %v32 = vunpack.c.l.b16 %v15
  %v33 = vunpack.c.l.b16 %v16
  %v34 = vunpack.c.l.b16 %v17
  %v35 = vunpack.c.l.b16 %v18
  %v36 = vpack.c.b16 %v33, %v32
  %v37 = vpack.c.b16 %v35, %v34
  %v47 = vunpack.c.l.b16 %v19
  %v48 = vunpack.c.l.b16 %v20
  %v49 = vunpack.c.l.b16 %v21
  %v50 = vunpack.c.l.b16 %v22
  %v51 = vunpack.c.l.b16 %v23
  %v52 = vunpack.c.l.b16 %v24
  %v53 = vunpack.c.l.b16 %v25
  %v54 = vunpack.c.l.b16 %v26
  %v55 = vunpack.c.l.b16 %v27
  %v56 = vpack.c.b16 %v48, %v47
  %v57 = vpack.c.b16 %v50, %v49
  %v58 = vpack.c.b16 %v52, %v51
  %v59 = vpack.c.b16 %v54, %v53
  %v60 = vpack.c.b16 %v55, %v55
  %vm65 = vcmask 588800
  %v67 = vsel %vm65, %v36, 0
  %v70 = vsel %vm65, %v37, 0
  %vm72 = vcmask 1043456
  %v74 = vsel %vm72, %v60, 0
  %76 = vmatprep.subr.bf16.mxu0 0
  %77 = vmatpush1.bf16.msra.mxu0 0
  %78 = vmatprep.subr.bf16.mxu0 0
  %79 = vmatpush1.bf16.msra.mxu0 0
  %80 = vmatprep.subr.bf16.mxu0 0
  %81 = vmatpush1.bf16.msra.mxu0 0
  %82 = vmatprep.subr.bf16.mxu0 0
  %83 = vmatpush1.bf16.msra.mxu0 %v74
  %84 = vmatprep.subr.bf16.mxu0 0
  %85 = vmatpush1.bf16.msra.mxu0 %v59
  %86 = vmatprep.subr.bf16.mxu0 0
  %87 = vmatpush1.bf16.msra.mxu0 %v58
  %88 = vmatprep.subr.bf16.mxu0 0
  %89 = vmatpush1.bf16.msra.mxu0 %v57
  %90 = vmatprep.subr.bf16.mxu0 0
  %91 = vmatpush1.bf16.msra.mxu0 %v56
  %92 = vmatprep.subr.bf16.mxu0 0
  %93 = vmatpush2.bf16.msra.mxu0 0
  %94 = vmatprep.subr.bf16.mxu0 0
  %95 = vmatpush2.bf16.msra.mxu0 0
  %96 = vmatprep.subr.bf16.mxu0 0
  %97 = vmatpush2.bf16.msra.mxu0 0
  %98 = vmatprep.subr.bf16.mxu0 0
  %99 = vmatpush2.bf16.msra.mxu0 0
  %100 = vmatprep.subr.bf16.mxu0 0
  %101 = vmatpush2.bf16.msra.mxu0 0
  %102 = vmatprep.subr.bf16.mxu0 0
  %103 = vmatpush2.bf16.msra.mxu0 0
  %104 = vmatprep.subr.bf16.mxu0 0
  %105 = vmatpush2.bf16.msra.mxu0 0
  %106 = vmatprep.subr.bf16.mxu0 0
  %107 = vmatpush2.bf16.msra.mxu0 0
  %108 = vmatprep.mubr.bf16.mxu0 0
  %109 = vmatmul.mubr.bf16.gmra.mxu0 %v67
  %v110 = vpop.f32.mrf.mxu0
  %v111 = vadd.f32 0.0, %v110
  %v112 = vpop.f32.mrf.mxu0
  %v113 = vpop.f32.mrf.mxu0
  %v114 = vadd.f32 0.0, %v113
  %v115 = vpop.f32.mrf.mxu0
  %116 = vmatprep.mubr.bf16.mxu0 0
  %117 = vmatmul.mubr.bf16.gmra.mxu0 %v70
  %v118 = vpop.f32.mrf.mxu0
  %v119 = vadd.f32 0.0, %v118
  %v120 = vpop.f32.mrf.mxu0
  %v121 = vpop.f32.mrf.mxu0
  %v122 = vadd.f32 0.0, %v121
  %v123 = vpop.f32.mrf.mxu0
  %124 = vdwg.mxu0
  %v125 = vpack.c.bf16 %v114, %v111
  %v126 = vpack.c.bf16 %v122, %v119
  %v129 = vunpack.c.l.b16 %v125
  %v130 = vunpack.c.h.b16 %v125
  %v131 = vunpack.c.l.b16 %v126
  %v132 = vunpack.c.h.b16 %v126
  %v133 = vpack.c.b16 %v129, %v129
  %v134 = vpack.c.b16 %v130, %v130
  %v135 = vpack.c.b16 %v131, %v131
  %v136 = vpack.c.b16 %v132, %v132
  %vm141 = vcmask 257024
  %142 = vst.msk [vmem:[%s2] sm:$0xf] %vm141, %v133
  %143 = vst.msk [vmem:[%s2 + $0x4] sm:$0xf] %vm141, %v134
  %144 = vst.msk [vmem:[%s2 + $0x8] sm:$0xf] %vm141, %v135
  %145 = vst.msk [vmem:[%s2 + $0xc] sm:$0xf] %vm141, %v136
  %vm146 = vcmask 261120
  %v147 = vsel %vm146, %v111, 0.0
  %v148 = vsel %vm146, %v114, 0.0
  %v149 = vadd.f32 %v147, %v148
  %v150 = vsel %vm146, %v119, 0.0
  %v151 = vadd.f32 %v149, %v150
  %v152 = vsel %vm146, %v122, 0.0
  %v153 = vadd.f32 %v151, %v152
  %154 = vst.msk [vmem:[%s3] sm:$0xff] %vm146, %v153
  %v155 = vmul.f32 %v111, %v111
  %v156 = vmul.f32 %v114, %v114
  %v157 = vmul.f32 %v119, %v119
  %v158 = vmul.f32 %v122, %v122
  %v159 = vsel %vm146, %v155, 0.0
  %v160 = vsel %vm146, %v156, 0.0
  %v161 = vadd.f32 %v159, %v160
  %v162 = vsel %vm146, %v157, 0.0
  %v163 = vadd.f32 %v161, %v162
  %v164 = vsel %vm146, %v158, 0.0
  %v165 = vadd.f32 %v163, %v164
  %166 = vst.msk [vmem:[%s4] sm:$0xff] %vm146, %v165
  // Predicated region
  $region10: #{resnet_body_forward.22} parent=0 // pred_check
    _
  $region11: #{resnet_body_forward.22} parent=0 // pred_check_branch
    %168 = sbr.rel (0) target = $region13
  $region12: #{resnet_body_forward.22} parent=0 // pred_region
    _
  $region13: #{resnet_body_forward.22} parent=0 // pred_fallthru
    _
  // Predicated region
  $region14: #{resnet_body_forward.22} parent=0 // pred_check
    _
  $region15: #{resnet_body_forward.22} parent=0 // pred_check_branch
    %170 = sbr.rel (0) target = $region17
  $region16: #{resnet_body_forward.22} parent=0 // pred_region
    _
  $region17: #{resnet_body_forward.22} parent=0 // pred_fallthru
    _
  // Predicated region
  $region18: #{resnet_body_forward.22} parent=0 // pred_check
    _
  $region19: #{resnet_body_forward.22} parent=0 // pred_check_branch
    %172 = sbr.rel (0) target = $region21
  $region20: #{resnet_body_forward.22} parent=0 // pred_region
    _
  $region21: #{resnet_body_forward.22} parent=0 // pred_fallthru
    _
  // Predicated region
  $region22: #{resnet_body_forward.22} parent=0 // pred_check
    _
  $region23: #{resnet_body_forward.22} parent=0 // pred_check_branch
    %174 = sbr.rel (0) target = $region25
  $region24: #{resnet_body_forward.22} parent=0 // pred_region
    _
  $region25: #{resnet_body_forward.22} parent=0 // pred_fallthru
    _
  // Predicated region
  $region26: #{resnet_body_forward.22} parent=0 // pred_check
    _
  $region27: #{resnet_body_forward.22} parent=0 // pred_check_branch
    %176 = sbr.rel (0) target = $region29
  $region28: #{resnet_body_forward.22} parent=0 // pred_region
    _
  $region29: #{resnet_body_forward.22} parent=0 // pred_fallthru
    _
  // Predicated region
  $region30: #{resnet_body_forward.22} parent=0 // pred_check
    _
  $region31: #{resnet_body_forward.22} parent=0 // pred_check_branch
    %178 = sbr.rel (0) target = $region33
  $region32: #{resnet_body_forward.22} parent=0 // pred_region
    _
  $region33: #{resnet_body_forward.22} parent=0 // pred_fallthru
    _

// kernel: resnet_body_forward.23
$region0: #{resnet_body_forward.23}
  #allocation0 [shape = 'u32[]', space=smem, size = 0x4, offset = 0x4, fixed_abs, tag = 'smem constant byte address 0x4 - core index']
  #allocation1 [shape = 'u32[144,128]{1,0:T(1,128)}', space=vmem, size = 0x12000, scoped, tag = 'internal scratch']
  %s0 = inlined_call_operand.vmem [shape: bf16[2,256], index: 0, kind: input, shape index: {}]
  %s1 = inlined_call_operand.vmem [shape: f32[1,256], index: 1, kind: input, shape index: {}]
  %s2 = inlined_call_operand.vmem [shape: f32[1,256], index: 2, kind: input, shape index: {}]
  %s3 = inlined_call_operand.vmem [shape: bf16[2,256], index: 3, kind: output, shape index: {}]
  %s4 = sld [smem:[#allocation0]]
  $region22: #{resnet_body_forward.23} parent=0
    _
  %s6 = ssub.s32 1, %s4
  %s7 = scalar_select 0, %s6, %s4
  // Predicated region
  $region2: #{resnet_body_forward.23} parent=0 // pred_check
    _
  $region3: #{resnet_body_forward.23} parent=0 // pred_check_branch
    %9 = sbr.rel (0) target = $region5
  $region4: #{resnet_body_forward.23} parent=0 // pred_region
    _
  $region5: #{resnet_body_forward.23} parent=0 // pred_fallthru
    _
  // Predicated region
  $region6: #{resnet_body_forward.23} parent=0 // pred_check
    _
  $region7: #{resnet_body_forward.23} parent=0 // pred_check_branch
    %11 = sbr.rel (0) target = $region9
  $region8: #{resnet_body_forward.23} parent=0 // pred_region
    _
  $region9: #{resnet_body_forward.23} parent=0 // pred_fallthru
    _
  // Predicated region
  $region10: #{resnet_body_forward.23} parent=0 // pred_check
    _
  $region11: #{resnet_body_forward.23} parent=0 // pred_check_branch
    %13 = sbr.rel (0) target = $region13
  $region12: #{resnet_body_forward.23} parent=0 // pred_region
    _
  $region13: #{resnet_body_forward.23} parent=0 // pred_fallthru
    _
  %v14 = vld [vmem:[%s0] sm:$0x3]
  %v15 = vunpack.c.l.bf16 %v14
  %v16 = vld [vmem:[%s1] sm:$0x3]
  %v18 = vlaneseq
  %v19 = vshrl.u32 %v18, 7
  %v20 = vsub.s32 0, %v19
  %v21 = vrot.slane %v16, %v20
  %v22 = vlaneseq
  %v23 = vshrl.u32 %v22, 7
  %v24 = vsub.s32 1, %v23
  %v25 = vrot.slane %v16, %v24
  %v26 = vcombine.low %v21, %v25
  %v28 = vunpack.c.l.s4 1983009808
  %v29 = vunpack.c.0.s8 %v28
  %v30 = vlaneseq
  %v31 = vshrl.u32 %v30, 7
  %v32 = vsub.s32 %v29, %v31
  %v33 = vrot.slane %v26, %v32
  %v35 = vmul.f32 %v15, %v33
  %v36 = vld [vmem:[%s2] sm:$0x3]
  %v38 = vlaneseq
  %v39 = vshrl.u32 %v38, 7
  %v40 = vsub.s32 0, %v39
  %v41 = vrot.slane %v36, %v40
  %v42 = vlaneseq
  %v43 = vshrl.u32 %v42, 7
  %v44 = vsub.s32 1, %v43
  %v45 = vrot.slane %v36, %v44
  %v46 = vcombine.low %v41, %v45
  %v48 = vunpack.c.l.s4 1983009808
  %v49 = vunpack.c.0.s8 %v48
  %v50 = vlaneseq
  %v51 = vshrl.u32 %v50, 7
  %v52 = vsub.s32 %v49, %v51
  %v53 = vrot.slane %v46, %v52
  %v55 = vadd.f32 %v35, %v53
  %v56 = vmax.f32 %v55, 0.0
  %v59 = vunpack.c.l.s4 1983009808
  %v60 = vunpack.c.0.s8 %v59
  %v61 = vlaneseq
  %v62 = vshrl.u32 %v61, 7
  %v63 = vsub.s32 %v60, %v62
  %v64 = vrot.slane %v56, %v63
  %v65 = vcombine.high %v64, %v64
  %v68 = vpack.c.bf16 %v64, %v64
  %v69 = vpack.c.bf16 %v65, %v65
  %v72 = vcombine.low %v68, %v69
  %v74 = vunpack.c.l.s4 1966171168
  %v75 = vunpack.c.0.s8 %v74
  %v76 = vlaneseq
  %v77 = vshrl.u32 %v76, 7
  %v78 = vsub.s32 %v75, %v77
  %v79 = vrot.slane %v72, %v78
  %v81 = vunpack.c.l.s4 1966171168
  %v82 = vunpack.c.0.s8 %v81
  %v83 = vlaneseq
  %v84 = vshrl.u32 %v83, 7
  %v85 = vsub.s32 %v82, %v84
  %v86 = vrot.slane %v79, %v85
  %88 = vst [vmem:[%s3] sm:$0x3] %v86
  // Predicated region
  $region14: #{resnet_body_forward.23} parent=0 // pred_check
    _
  $region15: #{resnet_body_forward.23} parent=0 // pred_check_branch
    %90 = sbr.rel (0) target = $region17
  $region16: #{resnet_body_forward.23} parent=0 // pred_region
    _
  $region17: #{resnet_body_forward.23} parent=0 // pred_fallthru
    _
  // Predicated region
  $region18: #{resnet_body_forward.23} parent=0 // pred_check
    _
  $region19: #{resnet_body_forward.23} parent=0 // pred_check_branch
    %92 = sbr.rel (0) target = $region21
  $region20: #{resnet_body_forward.23} parent=0 // pred_region
    _
  $region21: #{resnet_body_forward.23} parent=0 // pred_fallthru
    _

// kernel: resnet_body_forward.24
$region0: #{resnet_body_forward.24}
  #allocation0 [shape = 'u32[]', space=smem, size = 0x4, offset = 0x4, fixed_abs, tag = 'smem constant byte address 0x4 - core index']
  #allocation1 [shape = 'u32[144,128]{1,0:T(1,128)}', space=vmem, size = 0x12000, scoped, tag = 'internal scratch']
  %s0 = inlined_call_operand.vmem [shape: bf16[32,144], index: 0, kind: input, shape index: {}]
  %s1 = inlined_call_operand.vmem [shape: bf16[144,16], index: 1, kind: input, shape index: {}]
  %s2 = inlined_call_operand.vmem [shape: bf16[32,16], index: 2, kind: output, shape index: {0}]
  %s3 = inlined_call_operand.vmem [shape: f32[8,16], index: 3, kind: output, shape index: {1}]
  %s4 = inlined_call_operand.vmem [shape: f32[8,16], index: 4, kind: output, shape index: {2}]
  %5 = xla_tuple %s2, %s3, %s4
  %s6 = sld [smem:[#allocation0]]
  $region34: #{resnet_body_forward.24} parent=0
    _
  %s8 = ssub.s32 1, %s6
  %s9 = scalar_select 0, %s8, %s6
  // Predicated region
  $region2: #{resnet_body_forward.24} parent=0 // pred_check
    _
  $region3: #{resnet_body_forward.24} parent=0 // pred_check_branch
    %11 = sbr.rel (0) target = $region5
  $region4: #{resnet_body_forward.24} parent=0 // pred_region
    _
  $region5: #{resnet_body_forward.24} parent=0 // pred_fallthru
    _
  // Predicated region
  $region6: #{resnet_body_forward.24} parent=0 // pred_check
    _
  $region7: #{resnet_body_forward.24} parent=0 // pred_check_branch
    %13 = sbr.rel (0) target = $region9
  $region8: #{resnet_body_forward.24} parent=0 // pred_region
    _
  $region9: #{resnet_body_forward.24} parent=0 // pred_fallthru
    _
  %v15 = vld [vmem:[%s0] sm:$0xff]
  %v16 = vld [vmem:[%s0 + $0x8] sm:$0xff]
  %v17 = vld [vmem:[%s0 + $0x10] sm:$0xff]
  %v18 = vld [vmem:[%s0 + $0x18] sm:$0xff]
  %v19 = vld [vmem:[%s1] sm:$0xf]
  %v20 = vld [vmem:[%s1 + $0x4] sm:$0xf]
  %v21 = vld [vmem:[%s1 + $0x8] sm:$0xf]
  %v22 = vld [vmem:[%s1 + $0xc] sm:$0xf]
  %v23 = vld [vmem:[%s1 + $0x10] sm:$0xf]
  %v24 = vld [vmem:[%s1 + $0x14] sm:$0xf]
  %v25 = vld [vmem:[%s1 + $0x18] sm:$0xf]
  %v26 = vld [vmem:[%s1 + $0x1c] sm:$0xf]
  %v27 = vld [vmem:[%s1 + $0x20] sm:$0xf]
  %v28 = vld [vmem:[%s1 + $0x24] sm:$0xf]
  %v29 = vld [vmem:[%s1 + $0x28] sm:$0xf]
  %v30 = vld [vmem:[%s1 + $0x2c] sm:$0xf]
  %v31 = vld [vmem:[%s1 + $0x30] sm:$0xf]
  %v32 = vld [vmem:[%s1 + $0x34] sm:$0xf]
  %v33 = vld [vmem:[%s1 + $0x38] sm:$0xf]
  %v34 = vld [vmem:[%s1 + $0x3c] sm:$0xf]
  %v35 = vld [vmem:[%s1 + $0x40] sm:$0xf]
  %v36 = vld [vmem:[%s1 + $0x44] sm:$0xf]
  %v41 = vunpack.c.l.b16 %v15
  %v42 = vunpack.c.h.b16 %v15
  %v43 = vunpack.c.l.b16 %v16
  %v44 = vunpack.c.h.b16 %v16
  %v45 = vunpack.c.l.b16 %v17
  %v46 = vunpack.c.h.b16 %v17
  %v47 = vunpack.c.l.b16 %v18
  %v48 = vunpack.c.h.b16 %v18
  %v49 = vpack.c.b16 %v43, %v41
  %v50 = vpack.c.b16 %v44, %v42
  %v51 = vpack.c.b16 %v47, %v45
  %v52 = vpack.c.b16 %v48, %v46
  %v73 = vunpack.c.l.b16 %v19
  %v74 = vunpack.c.l.b16 %v20
  %v75 = vunpack.c.l.b16 %v21
  %v76 = vunpack.c.l.b16 %v22
  %v77 = vunpack.c.l.b16 %v23
  %v78 = vunpack.c.l.b16 %v24
  %v79 = vunpack.c.l.b16 %v25
  %v80 = vunpack.c.l.b16 %v26
  %v81 = vunpack.c.l.b16 %v27
  %v82 = vunpack.c.l.b16 %v28
  %v83 = vunpack.c.l.b16 %v29
  %v84 = vunpack.c.l.b16 %v30
  %v85 = vunpack.c.l.b16 %v31
  %v86 = vunpack.c.l.b16 %v32
  %v87 = vunpack.c.l.b16 %v33
  %v88 = vunpack.c.l.b16 %v34
  %v89 = vunpack.c.l.b16 %v35
  %v90 = vunpack.c.l.b16 %v36
  %v91 = vpack.c.b16 %v74, %v73
  %v92 = vpack.c.b16 %v76, %v75
  %v93 = vpack.c.b16 %v78, %v77
  %v94 = vpack.c.b16 %v80, %v79
  %v95 = vpack.c.b16 %v82, %v81
  %v96 = vpack.c.b16 %v84, %v83
  %v97 = vpack.c.b16 %v86, %v85
  %v98 = vpack.c.b16 %v88, %v87
  %v99 = vpack.c.b16 %v90, %v89
  %vm109 = vcmask 130048
  %v111 = vsel %vm109, %v50, 0
  %v114 = vsel %vm109, %v52, 0
  %116 = vmatprep.subr.bf16.mxu0 0
  %117 = vmatpush1.bf16.msra.mxu0 %v98
  %118 = vmatprep.subr.bf16.mxu0 0
  %119 = vmatpush1.bf16.msra.mxu0 %v97
  %120 = vmatprep.subr.bf16.mxu0 0
  %121 = vmatpush1.bf16.msra.mxu0 %v96
  %122 = vmatprep.subr.bf16.mxu0 0
  %123 = vmatpush1.bf16.msra.mxu0 %v95
  %124 = vmatprep.subr.bf16.mxu0 0
  %125 = vmatpush1.bf16.msra.mxu0 %v94
  %126 = vmatprep.subr.bf16.mxu0 0
  %127 = vmatpush1.bf16.msra.mxu0 %v93
  %128 = vmatprep.subr.bf16.mxu0 0
  %129 = vmatpush1.bf16.msra.mxu0 %v92
  %130 = vmatprep.subr.bf16.mxu0 0
  %131 = vmatpush1.bf16.msra.mxu0 %v91
  %132 = vmatprep.subr.bf16.mxu0 0
  %133 = vmatpush2.bf16.msra.mxu0 0
  %134 = vmatprep.subr.bf16.mxu0 0
  %135 = vmatpush2.bf16.msra.mxu0 0
  %136 = vmatprep.subr.bf16.mxu0 0
  %137 = vmatpush2.bf16.msra.mxu0 0
  %138 = vmatprep.subr.bf16.mxu0 0
  %139 = vmatpush2.bf16.msra.mxu0 0
  %140 = vmatprep.subr.bf16.mxu0 0
  %141 = vmatpush2.bf16.msra.mxu0 0
  %142 = vmatprep.subr.bf16.mxu0 0
  %143 = vmatpush2.bf16.msra.mxu0 0
  %144 = vmatprep.subr.bf16.mxu0 0
  %145 = vmatpush2.bf16.msra.mxu0 0
  %146 = vmatprep.subr.bf16.mxu0 0
  %147 = vmatpush2.bf16.msra.mxu0 %v99
  %148 = vmatprep.mubr.bf16.mxu0 %v111
  %149 = vmatmul.mubr.bf16.gmra.mxu0 %v49
  %v150 = vpop.f32.mrf.mxu0
  %v151 = vadd.f32 0.0, %v150
  %v152 = vpop.f32.mrf.mxu0
  %v153 = vpop.f32.mrf.mxu0
  %v154 = vadd.f32 0.0, %v153
  %v155 = vpop.f32.mrf.mxu0
  %156 = vmatprep.mubr.bf16.mxu0 %v114
  %157 = vmatmul.mubr.bf16.gmra.mxu0 %v51
  %v158 = vpop.f32.mrf.mxu0
  %v159 = vadd.f32 0.0, %v158
  %v160 = vpop.f32.mrf.mxu0
  %v161 = vpop.f32.mrf.mxu0
  %v162 = vadd.f32 0.0, %v161
  %v163 = vpop.f32.mrf.mxu0
  %164 = vdwg.mxu0
  %v165 = vpack.c.bf16 %v154, %v151
  %v166 = vpack.c.bf16 %v162, %v159
  %v169 = vunpack.c.l.b16 %v165
  %v170 = vunpack.c.h.b16 %v165
  %v171 = vunpack.c.l.b16 %v166
  %v172 = vunpack.c.h.b16 %v166
  %v173 = vpack.c.b16 %v169, %v169
  %v174 = vpack.c.b16 %v170, %v170
  %v175 = vpack.c.b16 %v171, %v171
  %v176 = vpack.c.b16 %v172, %v172
  %vm181 = vcmask 125952
  %182 = vst.msk [vmem:[%s2] sm:$0xf] %vm181, %v173
  %183 = vst.msk [vmem:[%s2 + $0x4] sm:$0xf] %vm181, %v174
  %184 = vst.msk [vmem:[%s2 + $0x8] sm:$0xf] %vm181, %v175
  %185 = vst.msk [vmem:[%s2 + $0xc] sm:$0xf] %vm181, %v176
  %v186 = vsel %vm109, %v151, 0.0
  %v187 = vsel %vm109, %v154, 0.0
  %v188 = vadd.f32 %v186, %v187
  %v189 = vsel %vm109, %v159, 0.0
  %v190 = vadd.f32 %v188, %v189
  %v191 = vsel %vm109, %v162, 0.0
  %v192 = vadd.f32 %v190, %v191
  %193 = vst.msk [vmem:[%s3] sm:$0xff] %vm109, %v192
  %v194 = vmul.f32 %v151, %v151
  %v195 = vmul.f32 %v154, %v154
  %v196 = vmul.f32 %v159, %v159
  %v197 = vmul.f32 %v162, %v162
  %v198 = vsel %vm109, %v194, 0.0
  %v199 = vsel %vm109, %v195, 0.0
  %v200 = vadd.f32 %v198, %v199
  %v201 = vsel %vm109, %v196, 0.0
  %v202 = vadd.f32 %v200, %v201
  %v203 = vsel %vm109, %v197, 0.0
  %v204 = vadd.f32 %v202, %v203
  %205 = vst.msk [vmem:[%s4] sm:$0xff] %vm109, %v204
  // Predicated region
  $region10: #{resnet_body_forward.24} parent=0 // pred_check
    _
  $region11: #{resnet_body_forward.24} parent=0 // pred_check_branch
    %207 = sbr.rel (0) target = $region13
  $region12: #{resnet_body_forward.24} parent=0 // pred_region
    _
  $region13: #{resnet_body_forward.24} parent=0 // pred_fallthru
    _
  // Predicated region
  $region14: #{resnet_body_forward.24} parent=0 // pred_check
    _
  $region15: #{resnet_body_forward.24} parent=0 // pred_check_branch
    %209 = sbr.rel (0) target = $region17
  $region16: #{resnet_body_forward.24} parent=0 // pred_region
    _
  $region17: #{resnet_body_forward.24} parent=0 // pred_fallthru
    _
  // Predicated region
  $region18: #{resnet_body_forward.24} parent=0 // pred_check
    _
  $region19: #{resnet_body_forward.24} parent=0 // pred_check_branch
    %211 = sbr.rel (0) target = $region21
  $region20: #{resnet_body_forward.24} parent=0 // pred_region
    _
  $region21: #{resnet_body_forward.24} parent=0 // pred_fallthru
    _
  // Predicated region
  $region22: #{resnet_body_forward.24} parent=0 // pred_check
    _
  $region23: #{resnet_body_forward.24} parent=0 // pred_check_branch
    %213 = sbr.rel (0) target = $region25
  $region24: #{resnet_body_forward.24} parent=0 // pred_region
    _
  $region25: #{resnet_body_forward.24} parent=0 // pred_fallthru
    _
  // Predicated region
  $region26: #{resnet_body_forward.24} parent=0 // pred_check
    _
  $region27: #{resnet_body_forward.24} parent=0 // pred_check_branch
    %215 = sbr.rel (0) target = $region29
  $region28: #{resnet_body_forward.24} parent=0 // pred_region
    _
  $region29: #{resnet_body_forward.24} parent=0 // pred_fallthru
    _
  // Predicated region
  $region30: #{resnet_body_forward.24} parent=0 // pred_check
    _
  $region31: #{resnet_body_forward.24} parent=0 // pred_check_branch
    %217 = sbr.rel (0) target = $region33
  $region32: #{resnet_body_forward.24} parent=0 // pred_region
    _
  $region33: #{resnet_body_forward.24} parent=0 // pred_fallthru
    _

// kernel: resnet_body_forward.25
$region0: #{resnet_body_forward.25}
  #allocation0 [shape = 'u32[]', space=smem, size = 0x4, offset = 0x4, fixed_abs, tag = 'smem constant byte address 0x4 - core index']
  #allocation1 [shape = 'u32[144,128]{1,0:T(1,128)}', space=vmem, size = 0x12000, scoped, tag = 'internal scratch']
  %s0 = inlined_call_operand.vmem [shape: bf16[2,256], index: 0, kind: input, shape index: {}]
  %s1 = inlined_call_operand.vmem [shape: f32[1,256], index: 1, kind: input, shape index: {}]
  %s2 = inlined_call_operand.vmem [shape: f32[1,256], index: 2, kind: input, shape index: {}]
  %s3 = inlined_call_operand.vmem [shape: bf16[2,256], index: 3, kind: input, shape index: {}]
  %s4 = inlined_call_operand.vmem [shape: f32[1,256], index: 4, kind: input, shape index: {}]
  %s5 = inlined_call_operand.vmem [shape: f32[1,256], index: 5, kind: input, shape index: {}]
  %s6 = inlined_call_operand.vmem [shape: bf16[2,256], index: 6, kind: output, shape index: {}]
  %s7 = sld [smem:[#allocation0]]
  $region34: #{resnet_body_forward.25} parent=0
    _
  %s9 = ssub.s32 1, %s7
  %s10 = scalar_select 0, %s9, %s7
  // Predicated region
  $region2: #{resnet_body_forward.25} parent=0 // pred_check
    _
  $region3: #{resnet_body_forward.25} parent=0 // pred_check_branch
    %12 = sbr.rel (0) target = $region5
  $region4: #{resnet_body_forward.25} parent=0 // pred_region
    _
  $region5: #{resnet_body_forward.25} parent=0 // pred_fallthru
    _
  // Predicated region
  $region6: #{resnet_body_forward.25} parent=0 // pred_check
    _
  $region7: #{resnet_body_forward.25} parent=0 // pred_check_branch
    %14 = sbr.rel (0) target = $region9
  $region8: #{resnet_body_forward.25} parent=0 // pred_region
    _
  $region9: #{resnet_body_forward.25} parent=0 // pred_fallthru
    _
  // Predicated region
  $region10: #{resnet_body_forward.25} parent=0 // pred_check
    _
  $region11: #{resnet_body_forward.25} parent=0 // pred_check_branch
    %16 = sbr.rel (0) target = $region13
  $region12: #{resnet_body_forward.25} parent=0 // pred_region
    _
  $region13: #{resnet_body_forward.25} parent=0 // pred_fallthru
    _
  // Predicated region
  $region14: #{resnet_body_forward.25} parent=0 // pred_check
    _
  $region15: #{resnet_body_forward.25} parent=0 // pred_check_branch
    %18 = sbr.rel (0) target = $region17
  $region16: #{resnet_body_forward.25} parent=0 // pred_region
    _
  $region17: #{resnet_body_forward.25} parent=0 // pred_fallthru
    _
  // Predicated region
  $region18: #{resnet_body_forward.25} parent=0 // pred_check
    _
  $region19: #{resnet_body_forward.25} parent=0 // pred_check_branch
    %20 = sbr.rel (0) target = $region21
  $region20: #{resnet_body_forward.25} parent=0 // pred_region
    _
  $region21: #{resnet_body_forward.25} parent=0 // pred_fallthru
    _
  // Predicated region
  $region22: #{resnet_body_forward.25} parent=0 // pred_check
    _
  $region23: #{resnet_body_forward.25} parent=0 // pred_check_branch
    %22 = sbr.rel (0) target = $region25
  $region24: #{resnet_body_forward.25} parent=0 // pred_region
    _
  $region25: #{resnet_body_forward.25} parent=0 // pred_fallthru
    _
  %v23 = vld [vmem:[%s0] sm:$0x3]
  %v24 = vunpack.c.l.bf16 %v23
  %v25 = vld [vmem:[%s1] sm:$0x3]
  %v27 = vlaneseq
  %v28 = vshrl.u32 %v27, 7
  %v29 = vsub.s32 0, %v28
  %v30 = vrot.slane %v25, %v29
  %v31 = vlaneseq
  %v32 = vshrl.u32 %v31, 7
  %v33 = vsub.s32 1, %v32
  %v34 = vrot.slane %v25, %v33
  %v35 = vcombine.low %v30, %v34
  %v37 = vunpack.c.l.s4 1983009808
  %v38 = vunpack.c.0.s8 %v37
  %v39 = vlaneseq
  %v40 = vshrl.u32 %v39, 7
  %v41 = vsub.s32 %v38, %v40
  %v42 = vrot.slane %v35, %v41
  %v44 = vmul.f32 %v24, %v42
  %v45 = vld [vmem:[%s2] sm:$0x3]
  %v47 = vlaneseq
  %v48 = vshrl.u32 %v47, 7
  %v49 = vsub.s32 0, %v48
  %v50 = vrot.slane %v45, %v49
  %v51 = vlaneseq
  %v52 = vshrl.u32 %v51, 7
  %v53 = vsub.s32 1, %v52
  %v54 = vrot.slane %v45, %v53
  %v55 = vcombine.low %v50, %v54
  %v57 = vunpack.c.l.s4 1983009808
  %v58 = vunpack.c.0.s8 %v57
  %v59 = vlaneseq
  %v60 = vshrl.u32 %v59, 7
  %v61 = vsub.s32 %v58, %v60
  %v62 = vrot.slane %v55, %v61
  %v64 = vadd.f32 %v44, %v62
  %v65 = vmax.f32 %v64, 0.0
  %v66 = vld [vmem:[%s3] sm:$0x3]
  %v67 = vunpack.c.l.bf16 %v66
  %v68 = vld [vmem:[%s4] sm:$0x3]
  %v70 = vlaneseq
  %v71 = vshrl.u32 %v70, 7
  %v72 = vsub.s32 0, %v71
  %v73 = vrot.slane %v68, %v72
  %v74 = vlaneseq
  %v75 = vshrl.u32 %v74, 7
  %v76 = vsub.s32 1, %v75
  %v77 = vrot.slane %v68, %v76
  %v78 = vcombine.low %v73, %v77
  %v80 = vunpack.c.l.s4 1983009808
  %v81 = vunpack.c.0.s8 %v80
  %v82 = vlaneseq
  %v83 = vshrl.u32 %v82, 7
  %v84 = vsub.s32 %v81, %v83
  %v85 = vrot.slane %v78, %v84
  %v87 = vmul.f32 %v67, %v85
  %v88 = vld [vmem:[%s5] sm:$0x3]
  %v90 = vlaneseq
  %v91 = vshrl.u32 %v90, 7
  %v92 = vsub.s32 0, %v91
  %v93 = vrot.slane %v88, %v92
  %v94 = vlaneseq
  %v95 = vshrl.u32 %v94, 7
  %v96 = vsub.s32 1, %v95
  %v97 = vrot.slane %v88, %v96
  %v98 = vcombine.low %v93, %v97
  %v100 = vunpack.c.l.s4 1983009808
  %v101 = vunpack.c.0.s8 %v100
  %v102 = vlaneseq
  %v103 = vshrl.u32 %v102, 7
  %v104 = vsub.s32 %v101, %v103
  %v105 = vrot.slane %v98, %v104
  %v107 = vadd.f32 %v87, %v105
  %v108 = vadd.f32 %v65, %v107
  %v109 = vmax.f32 %v108, 0.0
  %v112 = vunpack.c.l.s4 1983009808
  %v113 = vunpack.c.0.s8 %v112
  %v114 = vlaneseq
  %v115 = vshrl.u32 %v114, 7
  %v116 = vsub.s32 %v113, %v115
  %v117 = vrot.slane %v109, %v116
  %v118 = vcombine.high %v117, %v117
  %v121 = vpack.c.bf16 %v117, %v117
  %v122 = vpack.c.bf16 %v118, %v118
  %v125 = vcombine.low %v121, %v122
  %v127 = vunpack.c.l.s4 1966171168
  %v128 = vunpack.c.0.s8 %v127
  %v129 = vlaneseq
  %v130 = vshrl.u32 %v129, 7
  %v131 = vsub.s32 %v128, %v130
  %v132 = vrot.slane %v125, %v131
  %v134 = vunpack.c.l.s4 1966171168
  %v135 = vunpack.c.0.s8 %v134
  %v136 = vlaneseq
  %v137 = vshrl.u32 %v136, 7
  %v138 = vsub.s32 %v135, %v137
  %v139 = vrot.slane %v132, %v138
  %141 = vst [vmem:[%s6] sm:$0x3] %v139
  // Predicated region
  $region26: #{resnet_body_forward.25} parent=0 // pred_check
    _
  $region27: #{resnet_body_forward.25} parent=0 // pred_check_branch
    %143 = sbr.rel (0) target = $region29
  $region28: #{resnet_body_forward.25} parent=0 // pred_region
    _
  $region29: #{resnet_body_forward.25} parent=0 // pred_fallthru
    _
  // Predicated region
  $region30: #{resnet_body_forward.25} parent=0 // pred_check
    _
  $region31: #{resnet_body_forward.25} parent=0 // pred_check_branch
    %145 = sbr.rel (0) target = $region33
  $region32: #{resnet_body_forward.25} parent=0 // pred_region
    _
  $region33: #{resnet_body_forward.25} parent=0 // pred_fallthru
    _

// kernel: resnet_body_forward.29
$region0: #{resnet_body_forward.29}
  #allocation0 [shape = 'u32[]', space=smem, size = 0x4, offset = 0x4, fixed_abs, tag = 'smem constant byte address 0x4 - core index']
  #allocation1 [shape = 'u32[144,128]{1,0:T(1,128)}', space=vmem, size = 0x12000, scoped, tag = 'internal scratch']
  %s0 = inlined_call_operand.vmem [shape: bf16[2,256], index: 0, kind: input, shape index: {}]
  %s1 = inlined_call_operand.vmem [shape: f32[1,256], index: 1, kind: input, shape index: {}]
  %s2 = inlined_call_operand.vmem [shape: f32[1,256], index: 2, kind: input, shape index: {}]
  %s3 = inlined_call_operand.vmem [shape: bf16[2,256], index: 3, kind: input, shape index: {}]
  %s4 = inlined_call_operand.vmem [shape: bf16[2,256], index: 4, kind: output, shape index: {}]
  %s5 = sld [smem:[#allocation0]]
  $region26: #{resnet_body_forward.29} parent=0
    _
  %s7 = ssub.s32 1, %s5
  %s8 = scalar_select 0, %s7, %s5
  // Predicated region
  $region2: #{resnet_body_forward.29} parent=0 // pred_check
    _
  $region3: #{resnet_body_forward.29} parent=0 // pred_check_branch
    %10 = sbr.rel (0) target = $region5
  $region4: #{resnet_body_forward.29} parent=0 // pred_region
    _
  $region5: #{resnet_body_forward.29} parent=0 // pred_fallthru
    _
  // Predicated region
  $region6: #{resnet_body_forward.29} parent=0 // pred_check
    _
  $region7: #{resnet_body_forward.29} parent=0 // pred_check_branch
    %12 = sbr.rel (0) target = $region9
  $region8: #{resnet_body_forward.29} parent=0 // pred_region
    _
  $region9: #{resnet_body_forward.29} parent=0 // pred_fallthru
    _
  // Predicated region
  $region10: #{resnet_body_forward.29} parent=0 // pred_check
    _
  $region11: #{resnet_body_forward.29} parent=0 // pred_check_branch
    %14 = sbr.rel (0) target = $region13
  $region12: #{resnet_body_forward.29} parent=0 // pred_region
    _
  $region13: #{resnet_body_forward.29} parent=0 // pred_fallthru
    _
  // Predicated region
  $region14: #{resnet_body_forward.29} parent=0 // pred_check
    _
  $region15: #{resnet_body_forward.29} parent=0 // pred_check_branch
    %16 = sbr.rel (0) target = $region17
  $region16: #{resnet_body_forward.29} parent=0 // pred_region
    _
  $region17: #{resnet_body_forward.29} parent=0 // pred_fallthru
    _
  %v17 = vld [vmem:[%s0] sm:$0x3]
  %v18 = vunpack.c.l.bf16 %v17
  %v19 = vld [vmem:[%s1] sm:$0x3]
  %v21 = vlaneseq
  %v22 = vshrl.u32 %v21, 7
  %v23 = vsub.s32 0, %v22
  %v24 = vrot.slane %v19, %v23
  %v25 = vlaneseq
  %v26 = vshrl.u32 %v25, 7
  %v27 = vsub.s32 1, %v26
  %v28 = vrot.slane %v19, %v27
  %v29 = vcombine.low %v24, %v28
  %v31 = vunpack.c.l.s4 1983009808
  %v32 = vunpack.c.0.s8 %v31
  %v33 = vlaneseq
  %v34 = vshrl.u32 %v33, 7
  %v35 = vsub.s32 %v32, %v34
  %v36 = vrot.slane %v29, %v35
  %v38 = vmul.f32 %v18, %v36
  %v39 = vld [vmem:[%s2] sm:$0x3]
  %v41 = vlaneseq
  %v42 = vshrl.u32 %v41, 7
  %v43 = vsub.s32 0, %v42
  %v44 = vrot.slane %v39, %v43
  %v45 = vlaneseq
  %v46 = vshrl.u32 %v45, 7
  %v47 = vsub.s32 1, %v46
  %v48 = vrot.slane %v39, %v47
  %v49 = vcombine.low %v44, %v48
  %v51 = vunpack.c.l.s4 1983009808
  %v52 = vunpack.c.0.s8 %v51
  %v53 = vlaneseq
  %v54 = vshrl.u32 %v53, 7
  %v55 = vsub.s32 %v52, %v54
  %v56 = vrot.slane %v49, %v55
  %v58 = vadd.f32 %v38, %v56
  %v59 = vmax.f32 %v58, 0.0
  %v60 = vld [vmem:[%s3] sm:$0x3]
  %v61 = vunpack.c.l.bf16 %v60
  %v62 = vadd.f32 %v59, %v61
  %v63 = vmax.f32 %v62, 0.0
  %v66 = vunpack.c.l.s4 1983009808
  %v67 = vunpack.c.0.s8 %v66
  %v68 = vlaneseq
  %v69 = vshrl.u32 %v68, 7
  %v70 = vsub.s32 %v67, %v69
  %v71 = vrot.slane %v63, %v70
  %v72 = vcombine.high %v71, %v71
  %v75 = vpack.c.bf16 %v71, %v71
  %v76 = vpack.c.bf16 %v72, %v72
  %v79 = vcombine.low %v75, %v76
  %v81 = vunpack.c.l.s4 1966171168
  %v82 = vunpack.c.0.s8 %v81
  %v83 = vlaneseq
  %v84 = vshrl.u32 %v83, 7
  %v85 = vsub.s32 %v82, %v84
  %v86 = vrot.slane %v79, %v85
  %v88 = vunpack.c.l.s4 1966171168
  %v89 = vunpack.c.0.s8 %v88
  %v90 = vlaneseq
  %v91 = vshrl.u32 %v90, 7
  %v92 = vsub.s32 %v89, %v91
  %v93 = vrot.slane %v86, %v92
  %95 = vst [vmem:[%s4] sm:$0x3] %v93
  // Predicated region
  $region18: #{resnet_body_forward.29} parent=0 // pred_check
    _
  $region19: #{resnet_body_forward.29} parent=0 // pred_check_branch
    %97 = sbr.rel (0) target = $region21
  $region20: #{resnet_body_forward.29} parent=0 // pred_region
    _
  $region21: #{resnet_body_forward.29} parent=0 // pred_fallthru
    _
  // Predicated region
  $region22: #{resnet_body_forward.29} parent=0 // pred_check
    _
  $region23: #{resnet_body_forward.29} parent=0 // pred_check_branch
    %99 = sbr.rel (0) target = $region25
  $region24: #{resnet_body_forward.29} parent=0 // pred_region
    _
  $region25: #{resnet_body_forward.29} parent=0 // pred_fallthru
    _

// kernel: tile.181
$region0: #{tile.181}
  #allocation0 [shape = 's32[1]{0}', space=sflag, size = 0x4, scoped, tag = 'scoped memory for tile.181']
  %s0 = inlined_call_operand.vmem [shape: f32[32], index: 0, kind: input, shape index: {}]
  %s1 = inlined_call_operand.vmem [shape: f32[4,32], index: 1, kind: output, shape index: {}]
  // Predicated region
  $region2: #{tile.181} parent=0 // pred_check
    _
  $region3: #{tile.181} parent=0 // pred_check_branch
    %3 = sbr.rel (0) target = $region5
  $region4: #{tile.181} parent=0 // pred_region
    _
  $region5: #{tile.181} parent=0 // pred_fallthru
    _
  %v4 = vld [vmem:[%s0] ss:$0 sm:$0xff]
  %5 = vst [vmem:[%s1] sm:$0xf] %v4

// kernel: tile.186
$region0: #{tile.186}
  %s0 = inlined_call_operand.vmem [shape: f32[4,32], index: 0, kind: input, shape index: {}]
  %s1 = inlined_call_operand.vmem [shape: f32[1,128], index: 1, kind: output, shape index: {}]
  $region1: #{tile.186} parent=0
    #allocation0 [shape = 'u8[4096]{0}', space=vmem, size = 0x1000, scoped, tag = 'scoped mem for output reshape']
    #allocation1 [shape = 'u8[4096]{0}', space=vmem, size = 0x1000, scoped, tag = 'scoped mem for input reshape']
    %s3 = sshll.u32 1, 4
    %s4 = ssub.s32 %s3, 1
    %v5 = vld [vmem:[%s0] sm:%s4]
    %6 = vst [vmem:[#allocation1] sm:%s4] %v5
    %v7 = vld [vmem:[#allocation1] sm:$0x1]
    %vm8 = vcmask 261120
    %9 = vst.msk [vmem:[#allocation0] sm:$0x1] %vm8, %v7
    %s10 = scalar_lea.vmem [#allocation1], 3
    %v11 = vld [vmem:[%s10] sm:$0x1]
    %12 = vrot.lane.b32.xlu0 %v11, 96
    %v13 = vpop.permute.xlu0 %12
    %vm14 = vcmask 1048320
    %15 = vst.msk [vmem:[#allocation0] sm:$0x1] %vm14, %v13
    %s16 = scalar_lea.vmem [#allocation1], 2
    %v17 = vld [vmem:[%s16] sm:$0x1]
    %18 = vrot.lane.b32.xlu0 %v17, 64
    %v19 = vpop.permute.xlu0 %18
    %vm20 = vcmask 785920
    %21 = vst.msk [vmem:[#allocation0] sm:$0x1] %vm20, %v19
    %s22 = scalar_lea.vmem [#allocation1], 1
    %v23 = vld [vmem:[%s22] sm:$0x1]
    %24 = vrot.lane.b32.xlu0 %v23, 32
    %v25 = vpop.permute.xlu0 %24
    %vm26 = vcmask 523520
    %27 = vst.msk [vmem:[#allocation0] sm:$0x1] %vm26, %v25
    %s29 = sshll.u32 1, 1
    %s30 = ssub.s32 %s29, 1
    %v32 = vld [vmem:[#allocation0] sm:%s30]
    %s33 = sshll.u32 1, 1
    %s34 = ssub.s32 %s33, 1
    %35 = vst [vmem:[%s1] sm:%s34] %v32

// kernel: resnet_body_forward.30
$region0: #{resnet_body_forward.30}
  #allocation0 [shape = 'u32[]', space=smem, size = 0x4, offset = 0x4, fixed_abs, tag = 'smem constant byte address 0x4 - core index']
  #allocation1 [shape = 'u32[144,128]{1,0:T(1,128)}', space=vmem, size = 0x12000, scoped, tag = 'internal scratch']
  %s0 = inlined_call_operand.vmem [shape: bf16[8,144], index: 0, kind: input, shape index: {}]
  %s1 = inlined_call_operand.vmem [shape: bf16[144,64], index: 1, kind: input, shape index: {}]
  %s2 = inlined_call_operand.vmem [shape: bf16[8,64], index: 2, kind: output, shape index: {0}]
  %s3 = inlined_call_operand.vmem [shape: f32[8,64], index: 3, kind: output, shape index: {1}]
  %s4 = inlined_call_operand.vmem [shape: f32[8,64], index: 4, kind: output, shape index: {2}]
  %5 = xla_tuple %s2, %s3, %s4
  %s6 = sld [smem:[#allocation0]]
  $region34: #{resnet_body_forward.30} parent=0
    _
  %s8 = ssub.s32 1, %s6
  %s9 = scalar_select 0, %s8, %s6
  // Predicated region
  $region2: #{resnet_body_forward.30} parent=0 // pred_check
    _
  $region3: #{resnet_body_forward.30} parent=0 // pred_check_branch
    %11 = sbr.rel (0) target = $region5
  $region4: #{resnet_body_forward.30} parent=0 // pred_region
    _
  $region5: #{resnet_body_forward.30} parent=0 // pred_fallthru
    _
  // Predicated region
  $region6: #{resnet_body_forward.30} parent=0 // pred_check
    _
  $region7: #{resnet_body_forward.30} parent=0 // pred_check_branch
    %13 = sbr.rel (0) target = $region9
  $region8: #{resnet_body_forward.30} parent=0 // pred_region
    _
  $region9: #{resnet_body_forward.30} parent=0 // pred_fallthru
    _
  %v15 = vld [vmem:[%s0] sm:$0xff]
  %v16 = vld [vmem:[%s1] sm:$0xf]
  %v17 = vld [vmem:[%s1 + $0x4] sm:$0xf]
  %v18 = vld [vmem:[%s1 + $0x8] sm:$0xf]
  %v19 = vld [vmem:[%s1 + $0xc] sm:$0xf]
  %v20 = vld [vmem:[%s1 + $0x10] sm:$0xf]
  %v21 = vld [vmem:[%s1 + $0x14] sm:$0xf]
  %v22 = vld [vmem:[%s1 + $0x18] sm:$0xf]
  %v23 = vld [vmem:[%s1 + $0x1c] sm:$0xf]
  %v24 = vld [vmem:[%s1 + $0x20] sm:$0xf]
  %v25 = vld [vmem:[%s1 + $0x24] sm:$0xf]
  %v26 = vld [vmem:[%s1 + $0x28] sm:$0xf]
  %v27 = vld [vmem:[%s1 + $0x2c] sm:$0xf]
  %v28 = vld [vmem:[%s1 + $0x30] sm:$0xf]
  %v29 = vld [vmem:[%s1 + $0x34] sm:$0xf]
  %v30 = vld [vmem:[%s1 + $0x38] sm:$0xf]
  %v31 = vld [vmem:[%s1 + $0x3c] sm:$0xf]
  %v32 = vld [vmem:[%s1 + $0x40] sm:$0xf]
  %v33 = vld [vmem:[%s1 + $0x44] sm:$0xf]
  %v35 = vunpack.c.l.b16 %v15
  %v36 = vunpack.c.h.b16 %v15
  %v37 = vpack.c.b16 %v35, %v35
  %v38 = vpack.c.b16 %v36, %v36
  %v58 = vunpack.c.l.b16 %v16
  %v59 = vunpack.c.l.b16 %v17
  %v60 = vunpack.c.l.b16 %v18
  %v61 = vunpack.c.l.b16 %v19
  %v62 = vunpack.c.l.b16 %v20
  %v63 = vunpack.c.l.b16 %v21
  %v64 = vunpack.c.l.b16 %v22
  %v65 = vunpack.c.l.b16 %v23
  %v66 = vunpack.c.l.b16 %v24
  %v67 = vunpack.c.l.b16 %v25
  %v68 = vunpack.c.l.b16 %v26
  %v69 = vunpack.c.l.b16 %v27
  %v70 = vunpack.c.l.b16 %v28
  %v71 = vunpack.c.l.b16 %v29
  %v72 = vunpack.c.l.b16 %v30
  %v73 = vunpack.c.l.b16 %v31
  %v74 = vunpack.c.l.b16 %v32
  %v75 = vunpack.c.l.b16 %v33
  %v76 = vpack.c.b16 %v59, %v58
  %v77 = vpack.c.b16 %v61, %v60
  %v78 = vpack.c.b16 %v63, %v62
  %v79 = vpack.c.b16 %v65, %v64
  %v80 = vpack.c.b16 %v67, %v66
  %v81 = vpack.c.b16 %v69, %v68
  %v82 = vpack.c.b16 %v71, %v70
  %v83 = vpack.c.b16 %v73, %v72
  %v84 = vpack.c.b16 %v75, %v74
  %vm94 = vcmask 130048
  %v96 = vsel %vm94, %v38, 0
  %98 = vmatprep.subr.bf16.mxu0 0
  %99 = vmatpush1.bf16.msra.mxu0 %v83
  %100 = vmatprep.subr.bf16.mxu0 0
  %101 = vmatpush1.bf16.msra.mxu0 %v82
  %102 = vmatprep.subr.bf16.mxu0 0
  %103 = vmatpush1.bf16.msra.mxu0 %v81
  %104 = vmatprep.subr.bf16.mxu0 0
  %105 = vmatpush1.bf16.msra.mxu0 %v80
  %106 = vmatprep.subr.bf16.mxu0 0
  %107 = vmatpush1.bf16.msra.mxu0 %v79
  %108 = vmatprep.subr.bf16.mxu0 0
  %109 = vmatpush1.bf16.msra.mxu0 %v78
  %110 = vmatprep.subr.bf16.mxu0 0
  %111 = vmatpush1.bf16.msra.mxu0 %v77
  %112 = vmatprep.subr.bf16.mxu0 0
  %113 = vmatpush1.bf16.msra.mxu0 %v76
  %114 = vmatprep.subr.bf16.mxu0 0
  %115 = vmatpush2.bf16.msra.mxu0 0
  %116 = vmatprep.subr.bf16.mxu0 0
  %117 = vmatpush2.bf16.msra.mxu0 0
  %118 = vmatprep.subr.bf16.mxu0 0
  %119 = vmatpush2.bf16.msra.mxu0 0
  %120 = vmatprep.subr.bf16.mxu0 0
  %121 = vmatpush2.bf16.msra.mxu0 0
  %122 = vmatprep.subr.bf16.mxu0 0
  %123 = vmatpush2.bf16.msra.mxu0 0
  %124 = vmatprep.subr.bf16.mxu0 0
  %125 = vmatpush2.bf16.msra.mxu0 0
  %126 = vmatprep.subr.bf16.mxu0 0
  %127 = vmatpush2.bf16.msra.mxu0 0
  %128 = vmatprep.subr.bf16.mxu0 0
  %129 = vmatpush2.bf16.msra.mxu0 %v84
  %130 = vmatprep.mubr.bf16.mxu0 %v96
  %131 = vmatmul.mubr.bf16.gmra.mxu0 %v37
  %v132 = vpop.f32.mrf.mxu0
  %v133 = vadd.f32 0.0, %v132
  %v134 = vpop.f32.mrf.mxu0
  %v135 = vpop.f32.mrf.mxu0
  %v136 = vpop.f32.mrf.mxu0
  %137 = vdwg.mxu0
  %v138 = vpack.c.bf16 %v133, %v133
  %vm139 = vcmask 519168
  %140 = vst.msk [vmem:[%s2] sm:$0xf] %vm139, %v138
  %v141 = vadd.f32 %v133, 0.0
  %vm142 = vcmask 523264
  %143 = vst.msk [vmem:[%s3] sm:$0xff] %vm142, %v141
  %v144 = vmul.f32 %v133, %v133
  %v145 = vadd.f32 %v144, 0.0
  %146 = vst.msk [vmem:[%s4] sm:$0xff] %vm142, %v145
  // Predicated region
  $region10: #{resnet_body_forward.30} parent=0 // pred_check
    _
  $region11: #{resnet_body_forward.30} parent=0 // pred_check_branch
    %148 = sbr.rel (0) target = $region13
  $region12: #{resnet_body_forward.30} parent=0 // pred_region
    _
  $region13: #{resnet_body_forward.30} parent=0 // pred_fallthru
    _
  // Predicated region
  $region14: #{resnet_body_forward.30} parent=0 // pred_check
    _
  $region15: #{resnet_body_forward.30} parent=0 // pred_check_branch
    %150 = sbr.rel (0) target = $region17
  $region16: #{resnet_body_forward.30} parent=0 // pred_region
    _
  $region17: #{resnet_body_forward.30} parent=0 // pred_fallthru
    _
  // Predicated region
  $region18: #{resnet_body_forward.30} parent=0 // pred_check
    _
  $region19: #{resnet_body_forward.30} parent=0 // pred_check_branch
    %152 = sbr.rel (0) target = $region21
  $region20: #{resnet_body_forward.30} parent=0 // pred_region
    _
  $region21: #{resnet_body_forward.30} parent=0 // pred_fallthru
    _
  // Predicated region
  $region22: #{resnet_body_forward.30} parent=0 // pred_check
    _
  $region23: #{resnet_body_forward.30} parent=0 // pred_check_branch
    %154 = sbr.rel (0) target = $region25
  $region24: #{resnet_body_forward.30} parent=0 // pred_region
    _
  $region25: #{resnet_body_forward.30} parent=0 // pred_fallthru
    _
  // Predicated region
  $region26: #{resnet_body_forward.30} parent=0 // pred_check
    _
  $region27: #{resnet_body_forward.30} parent=0 // pred_check_branch
    %156 = sbr.rel (0) target = $region29
  $region28: #{resnet_body_forward.30} parent=0 // pred_region
    _
  $region29: #{resnet_body_forward.30} parent=0 // pred_fallthru
    _
  // Predicated region
  $region30: #{resnet_body_forward.30} parent=0 // pred_check
    _
  $region31: #{resnet_body_forward.30} parent=0 // pred_check_branch
    %158 = sbr.rel (0) target = $region33
  $region32: #{resnet_body_forward.30} parent=0 // pred_region
    _
  $region33: #{resnet_body_forward.30} parent=0 // pred_fallthru
    _

// kernel: resnet_body_forward.31
$region0: #{resnet_body_forward.31}
  #allocation0 [shape = 'u32[]', space=smem, size = 0x4, offset = 0x4, fixed_abs, tag = 'smem constant byte address 0x4 - core index']
  #allocation1 [shape = 'u32[144,128]{1,0:T(1,128)}', space=vmem, size = 0x12000, scoped, tag = 'internal scratch']
  %s0 = inlined_call_operand.vmem [shape: bf16[2,128], index: 0, kind: input, shape index: {}]
  %s1 = inlined_call_operand.vmem [shape: f32[1,128], index: 1, kind: input, shape index: {}]
  %s2 = inlined_call_operand.vmem [shape: f32[1,128], index: 2, kind: input, shape index: {}]
  %s3 = inlined_call_operand.vmem [shape: bf16[2,128], index: 3, kind: output, shape index: {}]
  %s4 = sld [smem:[#allocation0]]
  $region22: #{resnet_body_forward.31} parent=0
    _
  %s6 = ssub.s32 1, %s4
  %s7 = scalar_select 0, %s6, %s4
  // Predicated region
  $region2: #{resnet_body_forward.31} parent=0 // pred_check
    _
  $region3: #{resnet_body_forward.31} parent=0 // pred_check_branch
    %9 = sbr.rel (0) target = $region5
  $region4: #{resnet_body_forward.31} parent=0 // pred_region
    _
  $region5: #{resnet_body_forward.31} parent=0 // pred_fallthru
    _
  // Predicated region
  $region6: #{resnet_body_forward.31} parent=0 // pred_check
    _
  $region7: #{resnet_body_forward.31} parent=0 // pred_check_branch
    %11 = sbr.rel (0) target = $region9
  $region8: #{resnet_body_forward.31} parent=0 // pred_region
    _
  $region9: #{resnet_body_forward.31} parent=0 // pred_fallthru
    _
  // Predicated region
  $region10: #{resnet_body_forward.31} parent=0 // pred_check
    _
  $region11: #{resnet_body_forward.31} parent=0 // pred_check_branch
    %13 = sbr.rel (0) target = $region13
  $region12: #{resnet_body_forward.31} parent=0 // pred_region
    _
  $region13: #{resnet_body_forward.31} parent=0 // pred_fallthru
    _
  %v14 = vld [vmem:[%s0] sm:$0x1]
  %v15 = vunpack.c.l.bf16 %v14
  %v16 = vld [vmem:[%s1] sm:$0x1]
  %v18 = vlaneseq
  %v19 = vshrl.u32 %v18, 7
  %v20 = vsub.s32 0, %v19
  %v21 = vrot.slane %v16, %v20
  %v23 = vmul.f32 %v15, %v21
  %v24 = vld [vmem:[%s2] sm:$0x1]
  %v26 = vlaneseq
  %v27 = vshrl.u32 %v26, 7
  %v28 = vsub.s32 0, %v27
  %v29 = vrot.slane %v24, %v28
  %v31 = vadd.f32 %v23, %v29
  %v32 = vmax.f32 %v31, 0.0
  %v33 = vpack.c.bf16 %v32, %v32
  %34 = vst [vmem:[%s3] sm:$0x1] %v33
  // Predicated region
  $region14: #{resnet_body_forward.31} parent=0 // pred_check
    _
  $region15: #{resnet_body_forward.31} parent=0 // pred_check_branch
    %36 = sbr.rel (0) target = $region17
  $region16: #{resnet_body_forward.31} parent=0 // pred_region
    _
  $region17: #{resnet_body_forward.31} parent=0 // pred_fallthru
    _
  // Predicated region
  $region18: #{resnet_body_forward.31} parent=0 // pred_check
    _
  $region19: #{resnet_body_forward.31} parent=0 // pred_check_branch
    %38 = sbr.rel (0) target = $region21
  $region20: #{resnet_body_forward.31} parent=0 // pred_region
    _
  $region21: #{resnet_body_forward.31} parent=0 // pred_fallthru
    _

// kernel: squeeze.8
$region0: #{squeeze.8}
  %s0 = inlined_call_operand.vmem [shape: f32[128], index: 0, kind: input, shape index: {}]
  %s1 = inlined_call_operand.vmem [shape: f32[4,32], index: 1, kind: output, shape index: {}]
  $region1: #{squeeze.8} parent=0
    #allocation0 [shape = 'u8[4096]{0}', space=vmem, size = 0x1000, scoped, tag = 'scoped mem for output reshape']
    #allocation1 [shape = 'u8[4096]{0}', space=vmem, size = 0x1000, scoped, tag = 'scoped mem for input reshape']
    %s3 = sshll.u32 1, 1
    %s4 = ssub.s32 %s3, 1
    %v5 = vld [vmem:[%s0] sm:%s4]
    %6 = vst [vmem:[#allocation1] sm:%s4] %v5
    %v7 = vld [vmem:[#allocation1] sm:$0x1]
    %vm8 = vcmask 261120
    %9 = vst.msk [vmem:[#allocation0] sm:$0x1] %vm8, %v7
    %v10 = vld [vmem:[#allocation1] sm:$0x1]
    %11 = vrot.lane.b32.xlu0 %v10, 96
    %v12 = vpop.permute.xlu0 %11
    %vm13 = vcmask 261120
    %s14 = scalar_lea.vmem [#allocation0], 1
    %15 = vst.msk [vmem:[%s14] sm:$0x1] %vm13, %v12
    %v16 = vld [vmem:[#allocation1] sm:$0x1]
    %17 = vrot.lane.b32.xlu0 %v16, 64
    %v18 = vpop.permute.xlu0 %17
    %vm19 = vcmask 261120
    %s20 = scalar_lea.vmem [#allocation0], 2
    %21 = vst.msk [vmem:[%s20] sm:$0x1] %vm19, %v18
    %v22 = vld [vmem:[#allocation1] sm:$0x1]
    %23 = vrot.lane.b32.xlu0 %v22, 32
    %v24 = vpop.permute.xlu0 %23
    %vm25 = vcmask 261120
    %s26 = scalar_lea.vmem [#allocation0], 3
    %27 = vst.msk [vmem:[%s26] sm:$0x1] %vm25, %v24
    %s29 = sshll.u32 1, 4
    %s30 = ssub.s32 %s29, 1
    %v32 = vld [vmem:[#allocation0] sm:%s30]
    %s33 = sshll.u32 1, 4
    %s34 = ssub.s32 %s33, 1
    %35 = vst [vmem:[%s1] sm:%s34] %v32

// kernel: resnet_body_forward.32
$region0: #{resnet_body_forward.32}
  #allocation0 [shape = 'u32[]', space=smem, size = 0x4, offset = 0x4, fixed_abs, tag = 'smem constant byte address 0x4 - core index']
  #allocation1 [shape = 'u32[144,128]{1,0:T(1,128)}', space=vmem, size = 0x12000, scoped, tag = 'internal scratch']
  %s0 = inlined_call_operand.vmem [shape: bf16[8,288], index: 0, kind: input, shape index: {}]
  %s1 = inlined_call_operand.vmem [shape: bf16[288,32], index: 1, kind: input, shape index: {}]
  %s2 = inlined_call_operand.vmem [shape: bf16[8,32], index: 2, kind: output, shape index: {0}]
  %s3 = inlined_call_operand.vmem [shape: f32[8,32], index: 3, kind: output, shape index: {1}]
  %s4 = inlined_call_operand.vmem [shape: f32[8,32], index: 4, kind: output, shape index: {2}]
  %5 = xla_tuple %s2, %s3, %s4
  %s6 = sld [smem:[#allocation0]]
  $region34: #{resnet_body_forward.32} parent=0
    _
  %s8 = ssub.s32 1, %s6
  %s9 = scalar_select 0, %s8, %s6
  // Predicated region
  $region2: #{resnet_body_forward.32} parent=0 // pred_check
    _
  $region3: #{resnet_body_forward.32} parent=0 // pred_check_branch
    %11 = sbr.rel (0) target = $region5
  $region4: #{resnet_body_forward.32} parent=0 // pred_region
    _
  $region5: #{resnet_body_forward.32} parent=0 // pred_fallthru
    _
  // Predicated region
  $region6: #{resnet_body_forward.32} parent=0 // pred_check
    _
  $region7: #{resnet_body_forward.32} parent=0 // pred_check_branch
    %13 = sbr.rel (0) target = $region9
  $region8: #{resnet_body_forward.32} parent=0 // pred_region
    _
  $region9: #{resnet_body_forward.32} parent=0 // pred_fallthru
    _
  %v15 = vld [vmem:[%s0] sm:$0xff]
  %v16 = vld [vmem:[%s0 + $0x8] sm:$0xf]
  %v17 = vld [vmem:[%s1] sm:$0xf]
  %v18 = vld [vmem:[%s1 + $0x4] sm:$0xf]
  %v19 = vld [vmem:[%s1 + $0x8] sm:$0xf]
  %v20 = vld [vmem:[%s1 + $0xc] sm:$0xf]
  %v21 = vld [vmem:[%s1 + $0x10] sm:$0xf]
  %v22 = vld [vmem:[%s1 + $0x14] sm:$0xf]
  %v23 = vld [vmem:[%s1 + $0x18] sm:$0xf]
  %v24 = vld [vmem:[%s1 + $0x1c] sm:$0xf]
  %v25 = vld [vmem:[%s1 + $0x20] sm:$0xf]
  %v26 = vld [vmem:[%s1 + $0x24] sm:$0xf]
  %v27 = vld [vmem:[%s1 + $0x28] sm:$0xf]
  %v28 = vld [vmem:[%s1 + $0x2c] sm:$0xf]
  %v29 = vld [vmem:[%s1 + $0x30] sm:$0xf]
  %v30 = vld [vmem:[%s1 + $0x34] sm:$0xf]
  %v31 = vld [vmem:[%s1 + $0x38] sm:$0xf]
  %v32 = vld [vmem:[%s1 + $0x3c] sm:$0xf]
  %v33 = vld [vmem:[%s1 + $0x40] sm:$0xf]
  %v34 = vld [vmem:[%s1 + $0x44] sm:$0xf]
  %v35 = vld [vmem:[%s1 + $0x48] sm:$0xf]
  %v36 = vld [vmem:[%s1 + $0x4c] sm:$0xf]
  %v37 = vld [vmem:[%s1 + $0x50] sm:$0xf]
  %v38 = vld [vmem:[%s1 + $0x54] sm:$0xf]
  %v39 = vld [vmem:[%s1 + $0x58] sm:$0xf]
  %v40 = vld [vmem:[%s1 + $0x5c] sm:$0xf]
  %v41 = vld [vmem:[%s1 + $0x60] sm:$0xf]
  %v42 = vld [vmem:[%s1 + $0x64] sm:$0xf]
  %v43 = vld [vmem:[%s1 + $0x68] sm:$0xf]
  %v44 = vld [vmem:[%s1 + $0x6c] sm:$0xf]
  %v45 = vld [vmem:[%s1 + $0x70] sm:$0xf]
  %v46 = vld [vmem:[%s1 + $0x74] sm:$0xf]
  %v47 = vld [vmem:[%s1 + $0x78] sm:$0xf]
  %v48 = vld [vmem:[%s1 + $0x7c] sm:$0xf]
  %v49 = vld [vmem:[%s1 + $0x80] sm:$0xf]
  %v50 = vld [vmem:[%s1 + $0x84] sm:$0xf]
  %v51 = vld [vmem:[%s1 + $0x88] sm:$0xf]
  %v52 = vld [vmem:[%s1 + $0x8c] sm:$0xf]
  %v55 = vunpack.c.l.b16 %v15
  %v56 = vunpack.c.h.b16 %v15
  %v57 = vunpack.c.l.b16 %v16
  %v58 = vpack.c.b16 %v55, %v55
  %v59 = vpack.c.b16 %v56, %v56
  %v60 = vpack.c.b16 %v57, %v57
  %v99 = vunpack.c.l.b16 %v17
  %v100 = vunpack.c.l.b16 %v18
  %v101 = vunpack.c.l.b16 %v19
  %v102 = vunpack.c.l.b16 %v20
  %v103 = vunpack.c.l.b16 %v21
  %v104 = vunpack.c.l.b16 %v22
  %v105 = vunpack.c.l.b16 %v23
  %v106 = vunpack.c.l.b16 %v24
  %v107 = vunpack.c.l.b16 %v25
  %v108 = vunpack.c.l.b16 %v26
  %v109 = vunpack.c.l.b16 %v27
  %v110 = vunpack.c.l.b16 %v28
  %v111 = vunpack.c.l.b16 %v29
  %v112 = vunpack.c.l.b16 %v30
  %v113 = vunpack.c.l.b16 %v31
  %v114 = vunpack.c.l.b16 %v32
  %v115 = vunpack.c.l.b16 %v33
  %v116 = vunpack.c.l.b16 %v34
  %v117 = vunpack.c.l.b16 %v35
  %v118 = vunpack.c.l.b16 %v36
  %v119 = vunpack.c.l.b16 %v37
  %v120 = vunpack.c.l.b16 %v38
  %v121 = vunpack.c.l.b16 %v39
  %v122 = vunpack.c.l.b16 %v40
  %v123 = vunpack.c.l.b16 %v41
  %v124 = vunpack.c.l.b16 %v42
  %v125 = vunpack.c.l.b16 %v43
  %v126 = vunpack.c.l.b16 %v44
  %v127 = vunpack.c.l.b16 %v45
  %v128 = vunpack.c.l.b16 %v46
  %v129 = vunpack.c.l.b16 %v47
  %v130 = vunpack.c.l.b16 %v48
  %v131 = vunpack.c.l.b16 %v49
  %v132 = vunpack.c.l.b16 %v50
  %v133 = vunpack.c.l.b16 %v51
  %v134 = vunpack.c.l.b16 %v52
  %v135 = vpack.c.b16 %v100, %v99
  %v136 = vpack.c.b16 %v102, %v101
  %v137 = vpack.c.b16 %v104, %v103
  %v138 = vpack.c.b16 %v106, %v105
  %v139 = vpack.c.b16 %v108, %v107
  %v140 = vpack.c.b16 %v110, %v109
  %v141 = vpack.c.b16 %v112, %v111
  %v142 = vpack.c.b16 %v114, %v113
  %v143 = vpack.c.b16 %v116, %v115
  %v144 = vpack.c.b16 %v118, %v117
  %v145 = vpack.c.b16 %v120, %v119
  %v146 = vpack.c.b16 %v122, %v121
  %v147 = vpack.c.b16 %v124, %v123
  %v148 = vpack.c.b16 %v126, %v125
  %v149 = vpack.c.b16 %v128, %v127
  %v150 = vpack.c.b16 %v130, %v129
  %v151 = vpack.c.b16 %v132, %v131
  %v152 = vpack.c.b16 %v134, %v133
  %vm171 = vcmask 261120
  %v173 = vsel %vm171, %v60, 0
  %175 = vmatprep.subr.bf16.mxu0 0
  %176 = vmatpush1.bf16.msra.mxu0 %v142
  %177 = vmatprep.subr.bf16.mxu0 0
  %178 = vmatpush1.bf16.msra.mxu0 %v141
  %179 = vmatprep.subr.bf16.mxu0 0
  %180 = vmatpush1.bf16.msra.mxu0 %v140
  %181 = vmatprep.subr.bf16.mxu0 0
  %182 = vmatpush1.bf16.msra.mxu0 %v139
  %183 = vmatprep.subr.bf16.mxu0 0
  %184 = vmatpush1.bf16.msra.mxu0 %v138
  %185 = vmatprep.subr.bf16.mxu0 0
  %186 = vmatpush1.bf16.msra.mxu0 %v137
  %187 = vmatprep.subr.bf16.mxu0 0
  %188 = vmatpush1.bf16.msra.mxu0 %v136
  %189 = vmatprep.subr.bf16.mxu0 0
  %190 = vmatpush1.bf16.msra.mxu0 %v135
  %191 = vmatprep.subr.bf16.mxu0 0
  %192 = vmatpush2.bf16.msra.mxu0 %v150
  %193 = vmatprep.subr.bf16.mxu0 0
  %194 = vmatpush2.bf16.msra.mxu0 %v149
  %195 = vmatprep.subr.bf16.mxu0 0
  %196 = vmatpush2.bf16.msra.mxu0 %v148
  %197 = vmatprep.subr.bf16.mxu0 0
  %198 = vmatpush2.bf16.msra.mxu0 %v147
  %199 = vmatprep.subr.bf16.mxu0 0
  %200 = vmatpush2.bf16.msra.mxu0 %v146
  %201 = vmatprep.subr.bf16.mxu0 0
  %202 = vmatpush2.bf16.msra.mxu0 %v145
  %203 = vmatprep.subr.bf16.mxu0 0
  %204 = vmatpush2.bf16.msra.mxu0 %v144
  %205 = vmatprep.subr.bf16.mxu0 0
  %206 = vmatpush2.bf16.msra.mxu0 %v143
  %207 = vmatprep.mubr.bf16.mxu0 %v59
  %208 = vmatmul.mubr.bf16.gmra.mxu0 %v58
  %v209 = vpop.f32.mrf.mxu0
  %v210 = vadd.f32 0.0, %v209
  %v211 = vpop.f32.mrf.mxu0
  %v212 = vpop.f32.mrf.mxu0
  %v213 = vpop.f32.mrf.mxu0
  %214 = vdwg.mxu0
  %215 = vmatprep.subr.bf16.mxu0 0
  %216 = vmatpush1.bf16.msra.mxu0 0
  %217 = vmatprep.subr.bf16.mxu0 0
  %218 = vmatpush1.bf16.msra.mxu0 0
  %219 = vmatprep.subr.bf16.mxu0 0
  %220 = vmatpush1.bf16.msra.mxu0 0
  %221 = vmatprep.subr.bf16.mxu0 0
  %222 = vmatpush1.bf16.msra.mxu0 0
  %223 = vmatprep.subr.bf16.mxu0 0
  %224 = vmatpush1.bf16.msra.mxu0 0
  %225 = vmatprep.subr.bf16.mxu0 0
  %226 = vmatpush1.bf16.msra.mxu0 0
  %227 = vmatprep.subr.bf16.mxu0 0
  %228 = vmatpush1.bf16.msra.mxu0 %v152
  %229 = vmatprep.subr.bf16.mxu0 0
  %230 = vmatpush1.bf16.msra.mxu0 %v151
  %231 = vmatprep.subr.bf16.mxu0 0
  %232 = vmatpush2.bf16.msra.mxu0 0
  %233 = vmatprep.subr.bf16.mxu0 0
  %234 = vmatpush2.bf16.msra.mxu0 0
  %235 = vmatprep.subr.bf16.mxu0 0
  %236 = vmatpush2.bf16.msra.mxu0 0
  %237 = vmatprep.subr.bf16.mxu0 0
  %238 = vmatpush2.bf16.msra.mxu0 0
  %239 = vmatprep.subr.bf16.mxu0 0
  %240 = vmatpush2.bf16.msra.mxu0 0
  %241 = vmatprep.subr.bf16.mxu0 0
  %242 = vmatpush2.bf16.msra.mxu0 0
  %243 = vmatprep.subr.bf16.mxu0 0
  %244 = vmatpush2.bf16.msra.mxu0 0
  %245 = vmatprep.subr.bf16.mxu0 0
  %246 = vmatpush2.bf16.msra.mxu0 0
  %247 = vmatprep.mubr.bf16.mxu0 0
  %248 = vmatmul.mubr.bf16.gmra.mxu0 %v173
  %v249 = vpop.f32.mrf.mxu0
  %v250 = vadd.f32 %v210, %v249
  %v251 = vpop.f32.mrf.mxu0
  %v252 = vpop.f32.mrf.mxu0
  %v253 = vpop.f32.mrf.mxu0
  %254 = vdwg.mxu0
  %v255 = vpack.c.bf16 %v250, %v250
  %vm256 = vcmask 257024
  %257 = vst.msk [vmem:[%s2] sm:$0xf] %vm256, %v255
  %v258 = vadd.f32 %v250, 0.0
  %259 = vst.msk [vmem:[%s3] sm:$0xff] %vm171, %v258
  %v260 = vmul.f32 %v250, %v250
  %v261 = vadd.f32 %v260, 0.0
  %262 = vst.msk [vmem:[%s4] sm:$0xff] %vm171, %v261
  // Predicated region
  $region10: #{resnet_body_forward.32} parent=0 // pred_check
    _
  $region11: #{resnet_body_forward.32} parent=0 // pred_check_branch
    %264 = sbr.rel (0) target = $region13
  $region12: #{resnet_body_forward.32} parent=0 // pred_region
    _
  $region13: #{resnet_body_forward.32} parent=0 // pred_fallthru
    _
  // Predicated region
  $region14: #{resnet_body_forward.32} parent=0 // pred_check
    _
  $region15: #{resnet_body_forward.32} parent=0 // pred_check_branch
    %266 = sbr.rel (0) target = $region17
  $region16: #{resnet_body_forward.32} parent=0 // pred_region
    _
  $region17: #{resnet_body_forward.32} parent=0 // pred_fallthru
    _
  // Predicated region
  $region18: #{resnet_body_forward.32} parent=0 // pred_check
    _
  $region19: #{resnet_body_forward.32} parent=0 // pred_check_branch
    %268 = sbr.rel (0) target = $region21
  $region20: #{resnet_body_forward.32} parent=0 // pred_region
    _
  $region21: #{resnet_body_forward.32} parent=0 // pred_fallthru
    _
  // Predicated region
  $region22: #{resnet_body_forward.32} parent=0 // pred_check
    _
  $region23: #{resnet_body_forward.32} parent=0 // pred_check_branch
    %270 = sbr.rel (0) target = $region25
  $region24: #{resnet_body_forward.32} parent=0 // pred_region
    _
  $region25: #{resnet_body_forward.32} parent=0 // pred_fallthru
    _
  // Predicated region
  $region26: #{resnet_body_forward.32} parent=0 // pred_check
    _
  $region27: #{resnet_body_forward.32} parent=0 // pred_check_branch
    %272 = sbr.rel (0) target = $region29
  $region28: #{resnet_body_forward.32} parent=0 // pred_region
    _
  $region29: #{resnet_body_forward.32} parent=0 // pred_fallthru
    _
  // Predicated region
  $region30: #{resnet_body_forward.32} parent=0 // pred_check
    _
  $region31: #{resnet_body_forward.32} parent=0 // pred_check_branch
    %274 = sbr.rel (0) target = $region33
  $region32: #{resnet_body_forward.32} parent=0 // pred_region
    _
  $region33: #{resnet_body_forward.32} parent=0 // pred_fallthru
    _

// kernel: resnet_body_forward.33
$region0: #{resnet_body_forward.33}
  #allocation0 [shape = 'u32[]', space=smem, size = 0x4, offset = 0x4, fixed_abs, tag = 'smem constant byte address 0x4 - core index']
  #allocation1 [shape = 'u32[144,128]{1,0:T(1,128)}', space=vmem, size = 0x12000, scoped, tag = 'internal scratch']
  %s0 = inlined_call_operand.vmem [shape: bf16[2,128], index: 0, kind: input, shape index: {}]
  %s1 = inlined_call_operand.vmem [shape: f32[1,128], index: 1, kind: input, shape index: {}]
  %s2 = inlined_call_operand.vmem [shape: f32[1,128], index: 2, kind: input, shape index: {}]
  %s3 = inlined_call_operand.vmem [shape: bf16[2,128], index: 3, kind: input, shape index: {}]
  %s4 = inlined_call_operand.vmem [shape: f32[1,128], index: 4, kind: input, shape index: {}]
  %s5 = inlined_call_operand.vmem [shape: f32[1,128], index: 5, kind: input, shape index: {}]
  %s6 = inlined_call_operand.vmem [shape: bf16[2,128], index: 6, kind: output, shape index: {0}]
  %s7 = inlined_call_operand.vmem [shape: f32[1,128], index: 7, kind: output, shape index: {1}]
  %s8 = inlined_call_operand.vmem [shape: f32[1,128], index: 8, kind: output, shape index: {2}]
  %9 = xla_tuple %s6, %s7, %s8
  %s10 = sld [smem:[#allocation0]]
  $region50: #{resnet_body_forward.33} parent=0
    _
  %s12 = ssub.s32 1, %s10
  %s13 = scalar_select 0, %s12, %s10
  // Predicated region
  $region2: #{resnet_body_forward.33} parent=0 // pred_check
    _
  $region3: #{resnet_body_forward.33} parent=0 // pred_check_branch
    %15 = sbr.rel (0) target = $region5
  $region4: #{resnet_body_forward.33} parent=0 // pred_region
    _
  $region5: #{resnet_body_forward.33} parent=0 // pred_fallthru
    _
  // Predicated region
  $region6: #{resnet_body_forward.33} parent=0 // pred_check
    _
  $region7: #{resnet_body_forward.33} parent=0 // pred_check_branch
    %17 = sbr.rel (0) target = $region9
  $region8: #{resnet_body_forward.33} parent=0 // pred_region
    _
  $region9: #{resnet_body_forward.33} parent=0 // pred_fallthru
    _
  // Predicated region
  $region10: #{resnet_body_forward.33} parent=0 // pred_check
    _
  $region11: #{resnet_body_forward.33} parent=0 // pred_check_branch
    %19 = sbr.rel (0) target = $region13
  $region12: #{resnet_body_forward.33} parent=0 // pred_region
    _
  $region13: #{resnet_body_forward.33} parent=0 // pred_fallthru
    _
  // Predicated region
  $region14: #{resnet_body_forward.33} parent=0 // pred_check
    _
  $region15: #{resnet_body_forward.33} parent=0 // pred_check_branch
    %21 = sbr.rel (0) target = $region17
  $region16: #{resnet_body_forward.33} parent=0 // pred_region
    _
  $region17: #{resnet_body_forward.33} parent=0 // pred_fallthru
    _
  // Predicated region
  $region18: #{resnet_body_forward.33} parent=0 // pred_check
    _
  $region19: #{resnet_body_forward.33} parent=0 // pred_check_branch
    %23 = sbr.rel (0) target = $region21
  $region20: #{resnet_body_forward.33} parent=0 // pred_region
    _
  $region21: #{resnet_body_forward.33} parent=0 // pred_fallthru
    _
  // Predicated region
  $region22: #{resnet_body_forward.33} parent=0 // pred_check
    _
  $region23: #{resnet_body_forward.33} parent=0 // pred_check_branch
    %25 = sbr.rel (0) target = $region25
  $region24: #{resnet_body_forward.33} parent=0 // pred_region
    _
  $region25: #{resnet_body_forward.33} parent=0 // pred_fallthru
    _
  %v26 = vld [vmem:[%s0] sm:$0x1]
  %v27 = vunpack.c.l.bf16 %v26
  %v28 = vld [vmem:[%s1] sm:$0x1]
  %v30 = vlaneseq
  %v31 = vshrl.u32 %v30, 7
  %v32 = vsub.s32 0, %v31
  %v33 = vrot.slane %v28, %v32
  %v35 = vmul.f32 %v27, %v33
  %v36 = vld [vmem:[%s2] sm:$0x1]
  %v38 = vlaneseq
  %v39 = vshrl.u32 %v38, 7
  %v40 = vsub.s32 0, %v39
  %v41 = vrot.slane %v36, %v40
  %v43 = vadd.f32 %v35, %v41
  %v44 = vmax.f32 %v43, 0.0
  %v45 = vld [vmem:[%s3] sm:$0x1]
  %v46 = vunpack.c.l.bf16 %v45
  %v47 = vld [vmem:[%s4] sm:$0x1]
  %v49 = vlaneseq
  %v50 = vshrl.u32 %v49, 7
  %v51 = vsub.s32 0, %v50
  %v52 = vrot.slane %v47, %v51
  %v54 = vmul.f32 %v46, %v52
  %v55 = vld [vmem:[%s5] sm:$0x1]
  %v57 = vlaneseq
  %v58 = vshrl.u32 %v57, 7
  %v59 = vsub.s32 0, %v58
  %v60 = vrot.slane %v55, %v59
  %v62 = vadd.f32 %v54, %v60
  %v63 = vadd.f32 %v44, %v62
  %v64 = vmax.f32 %v63, 0.0
  %v65 = vpack.c.bf16 %v64, %v64
  %66 = vst [vmem:[%s6] sm:$0x1] %v65
  %vm67 = vcmask 1041408
  %v68 = vsel %vm67, %v64, 0.0
  %v69 = vrot.slane %v68, 4
  %v70 = vadd.f32 %v68, %v69
  %v71 = vrot.slane %v70, 2
  %v72 = vadd.f32 %v70, %v71
  %v73 = vrot.slane %v72, 1
  %v74 = vadd.f32 %v72, %v73
  %75 = vst [vmem:[%s7] sm:$0x1] %v74
  %v76 = vmul.f32 %v64, %v64
  %v77 = vsel %vm67, %v76, 0.0
  %v78 = vrot.slane %v77, 4
  %v79 = vadd.f32 %v77, %v78
  %v80 = vrot.slane %v79, 2
  %v81 = vadd.f32 %v79, %v80
  %v82 = vrot.slane %v81, 1
  %v83 = vadd.f32 %v81, %v82
  %84 = vst [vmem:[%s8] sm:$0x1] %v83
  // Predicated region
  $region26: #{resnet_body_forward.33} parent=0 // pred_check
    _
  $region27: #{resnet_body_forward.33} parent=0 // pred_check_branch
    %86 = sbr.rel (0) target = $region29
  $region28: #{resnet_body_forward.33} parent=0 // pred_region
    _
  $region29: #{resnet_body_forward.33} parent=0 // pred_fallthru
    _
  // Predicated region
  $region30: #{resnet_body_forward.33} parent=0 // pred_check
    _
  $region31: #{resnet_body_forward.33} parent=0 // pred_check_branch
    %88 = sbr.rel (0) target = $region33
  $region32: #{resnet_body_forward.33} parent=0 // pred_region
    _
  $region33: #{resnet_body_forward.33} parent=0 // pred_fallthru
    _
  // Predicated region
  $region34: #{resnet_body_forward.33} parent=0 // pred_check
    _
  $region35: #{resnet_body_forward.33} parent=0 // pred_check_branch
    %90 = sbr.rel (0) target = $region37
  $region36: #{resnet_body_forward.33} parent=0 // pred_region
    _
  $region37: #{resnet_body_forward.33} parent=0 // pred_fallthru
    _
  // Predicated region
  $region38: #{resnet_body_forward.33} parent=0 // pred_check
    _
  $region39: #{resnet_body_forward.33} parent=0 // pred_check_branch
    %92 = sbr.rel (0) target = $region41
  $region40: #{resnet_body_forward.33} parent=0 // pred_region
    _
  $region41: #{resnet_body_forward.33} parent=0 // pred_fallthru
    _
  // Predicated region
  $region42: #{resnet_body_forward.33} parent=0 // pred_check
    _
  $region43: #{resnet_body_forward.33} parent=0 // pred_check_branch
    %94 = sbr.rel (0) target = $region45
  $region44: #{resnet_body_forward.33} parent=0 // pred_region
    _
  $region45: #{resnet_body_forward.33} parent=0 // pred_fallthru
    _
  // Predicated region
  $region46: #{resnet_body_forward.33} parent=0 // pred_check
    _
  $region47: #{resnet_body_forward.33} parent=0 // pred_check_branch
    %96 = sbr.rel (0) target = $region49
  $region48: #{resnet_body_forward.33} parent=0 // pred_region
    _
  $region49: #{resnet_body_forward.33} parent=0 // pred_fallthru
    _

// kernel: resnet_body_forward.38
$region0: #{resnet_body_forward.38}
  #allocation0 [shape = 'u32[]', space=smem, size = 0x4, offset = 0x4, fixed_abs, tag = 'smem constant byte address 0x4 - core index']
  #allocation1 [shape = 'u32[144,128]{1,0:T(1,128)}', space=vmem, size = 0x12000, scoped, tag = 'internal scratch']
  %s0 = inlined_call_operand.vmem [shape: bf16[2,128], index: 0, kind: input, shape index: {}]
  %s1 = inlined_call_operand.vmem [shape: f32[1,128], index: 1, kind: input, shape index: {}]
  %s2 = inlined_call_operand.vmem [shape: f32[1,128], index: 2, kind: input, shape index: {}]
  %s3 = inlined_call_operand.vmem [shape: bf16[2,128], index: 3, kind: input, shape index: {}]
  %s4 = inlined_call_operand.vmem [shape: bf16[2,128], index: 4, kind: output, shape index: {0}]
  %s5 = inlined_call_operand.vmem [shape: f32[1,128], index: 5, kind: output, shape index: {1}]
  %s6 = inlined_call_operand.vmem [shape: f32[1,128], index: 6, kind: output, shape index: {2}]
  %7 = xla_tuple %s4, %s5, %s6
  %s8 = sld [smem:[#allocation0]]
  $region42: #{resnet_body_forward.38} parent=0
    _
  %s10 = ssub.s32 1, %s8
  %s11 = scalar_select 0, %s10, %s8
  // Predicated region
  $region2: #{resnet_body_forward.38} parent=0 // pred_check
    _
  $region3: #{resnet_body_forward.38} parent=0 // pred_check_branch
    %13 = sbr.rel (0) target = $region5
  $region4: #{resnet_body_forward.38} parent=0 // pred_region
    _
  $region5: #{resnet_body_forward.38} parent=0 // pred_fallthru
    _
  // Predicated region
  $region6: #{resnet_body_forward.38} parent=0 // pred_check
    _
  $region7: #{resnet_body_forward.38} parent=0 // pred_check_branch
    %15 = sbr.rel (0) target = $region9
  $region8: #{resnet_body_forward.38} parent=0 // pred_region
    _
  $region9: #{resnet_body_forward.38} parent=0 // pred_fallthru
    _
  // Predicated region
  $region10: #{resnet_body_forward.38} parent=0 // pred_check
    _
  $region11: #{resnet_body_forward.38} parent=0 // pred_check_branch
    %17 = sbr.rel (0) target = $region13
  $region12: #{resnet_body_forward.38} parent=0 // pred_region
    _
  $region13: #{resnet_body_forward.38} parent=0 // pred_fallthru
    _
  // Predicated region
  $region14: #{resnet_body_forward.38} parent=0 // pred_check
    _
  $region15: #{resnet_body_forward.38} parent=0 // pred_check_branch
    %19 = sbr.rel (0) target = $region17
  $region16: #{resnet_body_forward.38} parent=0 // pred_region
    _
  $region17: #{resnet_body_forward.38} parent=0 // pred_fallthru
    _
  %v20 = vld [vmem:[%s0] sm:$0x1]
  %v21 = vunpack.c.l.bf16 %v20
  %v22 = vld [vmem:[%s1] sm:$0x1]
  %v24 = vlaneseq
  %v25 = vshrl.u32 %v24, 7
  %v26 = vsub.s32 0, %v25
  %v27 = vrot.slane %v22, %v26
  %v29 = vmul.f32 %v21, %v27
  %v30 = vld [vmem:[%s2] sm:$0x1]
  %v32 = vlaneseq
  %v33 = vshrl.u32 %v32, 7
  %v34 = vsub.s32 0, %v33
  %v35 = vrot.slane %v30, %v34
  %v37 = vadd.f32 %v29, %v35
  %v38 = vmax.f32 %v37, 0.0
  %v39 = vld [vmem:[%s3] sm:$0x1]
  %v40 = vunpack.c.l.bf16 %v39
  %v41 = vadd.f32 %v38, %v40
  %v42 = vmax.f32 %v41, 0.0
  %v43 = vpack.c.bf16 %v42, %v42
  %44 = vst [vmem:[%s4] sm:$0x1] %v43
  %vm45 = vcmask 1041408
  %v46 = vsel %vm45, %v42, 0.0
  %v47 = vrot.slane %v46, 4
  %v48 = vadd.f32 %v46, %v47
  %v49 = vrot.slane %v48, 2
  %v50 = vadd.f32 %v48, %v49
  %v51 = vrot.slane %v50, 1
  %v52 = vadd.f32 %v50, %v51
  %53 = vst [vmem:[%s5] sm:$0x1] %v52
  %v54 = vmul.f32 %v42, %v42
  %v55 = vsel %vm45, %v54, 0.0
  %v56 = vrot.slane %v55, 4
  %v57 = vadd.f32 %v55, %v56
  %v58 = vrot.slane %v57, 2
  %v59 = vadd.f32 %v57, %v58
  %v60 = vrot.slane %v59, 1
  %v61 = vadd.f32 %v59, %v60
  %62 = vst [vmem:[%s6] sm:$0x1] %v61
  // Predicated region
  $region18: #{resnet_body_forward.38} parent=0 // pred_check
    _
  $region19: #{resnet_body_forward.38} parent=0 // pred_check_branch
    %64 = sbr.rel (0) target = $region21
  $region20: #{resnet_body_forward.38} parent=0 // pred_region
    _
  $region21: #{resnet_body_forward.38} parent=0 // pred_fallthru
    _
  // Predicated region
  $region22: #{resnet_body_forward.38} parent=0 // pred_check
    _
  $region23: #{resnet_body_forward.38} parent=0 // pred_check_branch
    %66 = sbr.rel (0) target = $region25
  $region24: #{resnet_body_forward.38} parent=0 // pred_region
    _
  $region25: #{resnet_body_forward.38} parent=0 // pred_fallthru
    _
  // Predicated region
  $region26: #{resnet_body_forward.38} parent=0 // pred_check
    _
  $region27: #{resnet_body_forward.38} parent=0 // pred_check_branch
    %68 = sbr.rel (0) target = $region29
  $region28: #{resnet_body_forward.38} parent=0 // pred_region
    _
  $region29: #{resnet_body_forward.38} parent=0 // pred_fallthru
    _
  // Predicated region
  $region30: #{resnet_body_forward.38} parent=0 // pred_check
    _
  $region31: #{resnet_body_forward.38} parent=0 // pred_check_branch
    %70 = sbr.rel (0) target = $region33
  $region32: #{resnet_body_forward.38} parent=0 // pred_region
    _
  $region33: #{resnet_body_forward.38} parent=0 // pred_fallthru
    _
  // Predicated region
  $region34: #{resnet_body_forward.38} parent=0 // pred_check
    _
  $region35: #{resnet_body_forward.38} parent=0 // pred_check_branch
    %72 = sbr.rel (0) target = $region37
  $region36: #{resnet_body_forward.38} parent=0 // pred_region
    _
  $region37: #{resnet_body_forward.38} parent=0 // pred_fallthru
    _
  // Predicated region
  $region38: #{resnet_body_forward.38} parent=0 // pred_check
    _
  $region39: #{resnet_body_forward.38} parent=0 // pred_check_branch
    %74 = sbr.rel (0) target = $region41
  $region40: #{resnet_body_forward.38} parent=0 // pred_region
    _
  $region41: #{resnet_body_forward.38} parent=0 // pred_fallthru
    _

// kernel: resnet_body_forward.34
$region0: #{resnet_body_forward.34}
  #allocation0 [shape = 'u32[]', space=smem, size = 0x4, offset = 0x4, fixed_abs, tag = 'smem constant byte address 0x4 - core index']
  #allocation1 [shape = 'u32[144,128]{1,0:T(1,128)}', space=vmem, size = 0x12000, scoped, tag = 'internal scratch']
  %s0 = inlined_call_operand.vmem [shape: bf16[2,4,32], index: 0, kind: input, shape index: {}]
  %s1 = inlined_call_operand.vmem [shape: f32[1,32], index: 1, kind: input, shape index: {}]
  %s2 = inlined_call_operand.vmem [shape: f32[1,32], index: 2, kind: input, shape index: {}]
  %s3 = inlined_call_operand.vmem [shape: bf16[32,96], index: 3, kind: input, shape index: {}]
  %s4 = inlined_call_operand.vmem [shape: bf16[32,32], index: 4, kind: input, shape index: {}]
  %s5 = inlined_call_operand.vmem [shape: f32[1,32], index: 5, kind: input, shape index: {}]
  %s6 = inlined_call_operand.vmem [shape: bf16[2,4,32], index: 6, kind: output, shape index: {}]
  %s7 = sld [smem:[#allocation0]]
  $region57: #{resnet_body_forward.34} parent=0
    _
  %s9 = ssub.s32 1, %s7
  %s10 = scalar_select 0, %s9, %s7
  loop: start=0, step=1, limit=4
  $region2: #{resnet_body_forward.34} parent=0 // loop_pre_header
    _
  $region3: #{resnet_body_forward.34} parent=0 // loop_header
    %s12 = sphi 0, %s16
    %p13 = scmp.ge.s32.totalorder %s12, 4
    %s22 = sphi 0, %s24
    %s25 = sphi 0, %s22
    %s26 = sphi 0, %s25
    %s42 = sphi 0, %s26
    %s46 = sphi 0, %s46
    %s48 = sphi 0, %s46
    %s49 = sphi 0, %s48
    %s63 = sphi 0, %s49
    %s67 = sphi 0, %s67
    %s69 = sphi 0, %s67
    %s70 = sphi 0, %s69
    %s84 = sphi 0, %s70
    %s88 = sphi 0, %s88
    %s90 = sphi 0, %s88
    %s91 = sphi 0, %s90
    %s105 = sphi 0, %s91
    %s109 = sphi 0, %s109
    %s111 = sphi 0, %s109
    %s112 = sphi 0, %s111
    %s126 = sphi 0, %s112
    %s130 = sphi 0, %s130
    %s132 = sphi 0, %s130
    %s133 = sphi 0, %s132
    %s147 = sphi 0, %s133
    %s153 = sphi 0, %s155
    %s156 = sphi 0, %s153
    %s157 = sphi 0, %s156
    %s173 = sphi 0, %s157
  $region4: #{resnet_body_forward.34} parent=0 // loop_header_branch
    %15 = sbr.rel (%p13) target = $region8
  $region5: #{resnet_body_forward.34} parent=0 // loop_body
    %s17 = ssub.s32 %s12, 1
    %s18 = ssub.s32 %s12, 2
    %s19 = sadd.s32 %s12, 1
    %s20 = ssub.s32 %s12, %s19
    %p21 = scmp.eq.s32.totalorder %s20, 0
    %s23 = sadd.s32 %s22, 1
    %s24 = scalar_select %p21, %s22, %s23
    %p27 = pneg %p21
    %p28 = scmp.eq.s32.totalorder %s12, 1
    %p29 = por %p27, %p28
    %p30 = scmp.ne.s32.totalorder %s22, %s25
    %p31 = scmp.eq.s32.totalorder %s12, 0
    %p32 = por %p30, %p31
    %p33 = scmp.ne.s32.totalorder %s22, %s25
    %p34 = scmp.eq.s32.totalorder %s17, 1
    %p35 = por %p33, %p34
    %p36 = scmp.ne.s32.totalorder %s25, %s26
    %p37 = scmp.eq.s32.totalorder %s17, 0
    %p38 = por %p36, %p37
    %p39 = scmp.ne.s32.totalorder %s25, %s26
    %p40 = scmp.eq.s32.totalorder %s18, 1
    %p41 = por %p39, %p40
    %p43 = scmp.ne.s32.totalorder %s26, %s42
    %p44 = scmp.eq.s32.totalorder %s18, 0
    %p45 = por %p43, %p44
    %s47 = sadd.s32 %s46, 1
    %p50 = scmp.eq.s32.totalorder %s12, 1
    %p51 = scmp.ne.s32.totalorder %s46, %s48
    %p52 = scmp.eq.s32.totalorder %s12, 0
    %p53 = por %p51, %p52
    %p54 = scmp.ne.s32.totalorder %s46, %s48
    %p55 = scmp.eq.s32.totalorder %s17, 1
    %p56 = por %p54, %p55
    %p57 = scmp.ne.s32.totalorder %s48, %s49
    %p58 = scmp.eq.s32.totalorder %s17, 0
    %p59 = por %p57, %p58
    %p60 = scmp.ne.s32.totalorder %s48, %s49
    %p61 = scmp.eq.s32.totalorder %s18, 1
    %p62 = por %p60, %p61
    %p64 = scmp.ne.s32.totalorder %s49, %s63
    %p65 = scmp.eq.s32.totalorder %s18, 0
    %p66 = por %p64, %p65
    %s68 = sadd.s32 %s67, 1
    %p71 = scmp.eq.s32.totalorder %s12, 1
    %p72 = scmp.ne.s32.totalorder %s67, %s69
    %p73 = scmp.eq.s32.totalorder %s12, 0
    %p74 = por %p72, %p73
    %p75 = scmp.ne.s32.totalorder %s67, %s69
    %p76 = scmp.eq.s32.totalorder %s17, 1
    %p77 = por %p75, %p76
    %p78 = scmp.ne.s32.totalorder %s69, %s70
    %p79 = scmp.eq.s32.totalorder %s17, 0
    %p80 = por %p78, %p79
    %p81 = scmp.ne.s32.totalorder %s69, %s70
    %p82 = scmp.eq.s32.totalorder %s18, 1
    %p83 = por %p81, %p82
    %p85 = scmp.ne.s32.totalorder %s70, %s84
    %p86 = scmp.eq.s32.totalorder %s18, 0
    %p87 = por %p85, %p86
    %s89 = sadd.s32 %s88, 1
    %p92 = scmp.eq.s32.totalorder %s12, 1
    %p93 = scmp.ne.s32.totalorder %s88, %s90
    %p94 = scmp.eq.s32.totalorder %s12, 0
    %p95 = por %p93, %p94
    %p96 = scmp.ne.s32.totalorder %s88, %s90
    %p97 = scmp.eq.s32.totalorder %s17, 1
    %p98 = por %p96, %p97
    %p99 = scmp.ne.s32.totalorder %s90, %s91
    %p100 = scmp.eq.s32.totalorder %s17, 0
    %p101 = por %p99, %p100
    %p102 = scmp.ne.s32.totalorder %s90, %s91
    %p103 = scmp.eq.s32.totalorder %s18, 1
    %p104 = por %p102, %p103
    %p106 = scmp.ne.s32.totalorder %s91, %s105
    %p107 = scmp.eq.s32.totalorder %s18, 0
    %p108 = por %p106, %p107
    %s110 = sadd.s32 %s109, 1
    %p113 = scmp.eq.s32.totalorder %s12, 1
    %p114 = scmp.ne.s32.totalorder %s109, %s111
    %p115 = scmp.eq.s32.totalorder %s12, 0
    %p116 = por %p114, %p115
    %p117 = scmp.ne.s32.totalorder %s109, %s111
    %p118 = scmp.eq.s32.totalorder %s17, 1
    %p119 = por %p117, %p118
    %p120 = scmp.ne.s32.totalorder %s111, %s112
    %p121 = scmp.eq.s32.totalorder %s17, 0
    %p122 = por %p120, %p121
    %p123 = scmp.ne.s32.totalorder %s111, %s112
    %p124 = scmp.eq.s32.totalorder %s18, 1
    %p125 = por %p123, %p124
    %p127 = scmp.ne.s32.totalorder %s112, %s126
    %p128 = scmp.eq.s32.totalorder %s18, 0
    %p129 = por %p127, %p128
    %s131 = sadd.s32 %s130, 1
    %p134 = scmp.eq.s32.totalorder %s12, 1
    %p135 = scmp.ne.s32.totalorder %s130, %s132
    %p136 = scmp.eq.s32.totalorder %s12, 0
    %p137 = por %p135, %p136
    %p138 = scmp.ne.s32.totalorder %s130, %s132
    %p139 = scmp.eq.s32.totalorder %s17, 1
    %p140 = por %p138, %p139
    %p141 = scmp.ne.s32.totalorder %s132, %s133
    %p142 = scmp.eq.s32.totalorder %s17, 0
    %p143 = por %p141, %p142
    %p144 = scmp.ne.s32.totalorder %s132, %s133
    %p145 = scmp.eq.s32.totalorder %s18, 1
    %p146 = por %p144, %p145
    %p148 = scmp.ne.s32.totalorder %s133, %s147
    %p149 = scmp.eq.s32.totalorder %s18, 0
    %p150 = por %p148, %p149
    %s151 = ssub.s32 %s12, %s19
    %p152 = scmp.eq.s32.totalorder %s151, 0
    %s154 = sadd.s32 %s153, 1
    %s155 = scalar_select %p152, %s153, %s154
    %p158 = pneg %p152
    %p159 = scmp.eq.s32.totalorder %s12, 1
    %p160 = por %p158, %p159
    %p161 = scmp.ne.s32.totalorder %s153, %s156
    %p162 = scmp.eq.s32.totalorder %s12, 0
    %p163 = por %p161, %p162
    %p164 = scmp.ne.s32.totalorder %s153, %s156
    %p165 = scmp.eq.s32.totalorder %s17, 1
    %p166 = por %p164, %p165
    %p167 = scmp.ne.s32.totalorder %s156, %s157
    %p168 = scmp.eq.s32.totalorder %s17, 0
    %p169 = por %p167, %p168
    %p170 = scmp.ne.s32.totalorder %s156, %s157
    %p171 = scmp.eq.s32.totalorder %s18, 1
    %p172 = por %p170, %p171
    %p174 = scmp.ne.s32.totalorder %s157, %s173
    %p175 = scmp.eq.s32.totalorder %s18, 0
    %p176 = por %p174, %p175
    %p177 = scmp.le.s32.totalorder 1, %s12
    %p178 = scmp.lt.s32.totalorder %s12, 3
    %p179 = pnand %p177, %p178
    %p180 = pneg %p179
    // Predicated region
    $region9: #{resnet_body_forward.34} parent=5 // pred_check
      _
    $region10: #{resnet_body_forward.34} parent=5 // pred_check_branch
      %182 = sbr.rel (%p179) target = $region12
    $region11: #{resnet_body_forward.34} parent=5 // pred_region
      %s183 = ssub.s32 %s12, 1
      // Predicated region
      $region13: #{resnet_body_forward.34} parent=11 // pred_check
        %p184 = pneg %p59
      $region14: #{resnet_body_forward.34} parent=11 // pred_check_branch
        %186 = sbr.rel (%p184) target = $region16
      $region15: #{resnet_body_forward.34} parent=11 // pred_region
        _
      $region16: #{resnet_body_forward.34} parent=11 // pred_fallthru
        _
      // Predicated region
      $region17: #{resnet_body_forward.34} parent=11 // pred_check
        %p187 = pneg %p80
      $region18: #{resnet_body_forward.34} parent=11 // pred_check_branch
        %189 = sbr.rel (%p187) target = $region20
      $region19: #{resnet_body_forward.34} parent=11 // pred_region
        _
      $region20: #{resnet_body_forward.34} parent=11 // pred_fallthru
        _
      // Predicated region
      $region21: #{resnet_body_forward.34} parent=11 // pred_check
        %p190 = pneg %p101
      $region22: #{resnet_body_forward.34} parent=11 // pred_check_branch
        %192 = sbr.rel (%p190) target = $region24
      $region23: #{resnet_body_forward.34} parent=11 // pred_region
        _
      $region24: #{resnet_body_forward.34} parent=11 // pred_fallthru
        _
      // Predicated region
      $region25: #{resnet_body_forward.34} parent=11 // pred_check
        %p193 = pneg %p122
      $region26: #{resnet_body_forward.34} parent=11 // pred_check_branch
        %195 = sbr.rel (%p193) target = $region28
      $region27: #{resnet_body_forward.34} parent=11 // pred_region
        _
      $region28: #{resnet_body_forward.34} parent=11 // pred_fallthru
        _
      // Predicated region
      $region29: #{resnet_body_forward.34} parent=11 // pred_check
        %p196 = pneg %p143
      $region30: #{resnet_body_forward.34} parent=11 // pred_check_branch
        %198 = sbr.rel (%p196) target = $region32
      $region31: #{resnet_body_forward.34} parent=11 // pred_region
        _
      $region32: #{resnet_body_forward.34} parent=11 // pred_fallthru
        _
    $region12: #{resnet_body_forward.34} parent=5 // pred_fallthru
      _
    %p199 = scmp.lt.s32.totalorder %s12, 2
    // Predicated region
    $region33: #{resnet_body_forward.34} parent=5 // pred_check
      %p200 = pneg %p199
    $region34: #{resnet_body_forward.34} parent=5 // pred_check_branch
      %202 = sbr.rel (%p200) target = $region36
    $region35: #{resnet_body_forward.34} parent=5 // pred_region
      // Predicated region
      $region37: #{resnet_body_forward.34} parent=35 // pred_check
        %p203 = pneg %p32
      $region38: #{resnet_body_forward.34} parent=35 // pred_check_branch
        %205 = sbr.rel (%p203) target = $region40
      $region39: #{resnet_body_forward.34} parent=35 // pred_region
        %p206 = scmp.lt.s32.totalorder %s12, 1
        %s207 = scalar_select %p206, %s12, 1
        %s208 = smul.addr %s207, 2
        %s209 = scalar_lea.vmem %s0, %s208
      $region40: #{resnet_body_forward.34} parent=35 // pred_fallthru
        _
    $region36: #{resnet_body_forward.34} parent=5 // pred_fallthru
      _
    %p210 = scmp.le.s32.totalorder 1, %s12
    %p211 = scmp.lt.s32.totalorder %s12, 3
    %p212 = pnand %p210, %p211
    %p213 = pneg %p212
    // Predicated region
    $region41: #{resnet_body_forward.34} parent=5 // pred_check
      _
    $region42: #{resnet_body_forward.34} parent=5 // pred_check_branch
      %215 = sbr.rel (%p212) target = $region44
    $region43: #{resnet_body_forward.34} parent=5 // pred_region
      %s216 = ssub.s32 %s12, 1
      %p217 = scmp.lt.s32.totalorder %s17, 1
      %s218 = scalar_select %p217, %s17, 1
      %s219 = smul.addr %s218, 2
      %s220 = scalar_lea.vmem %s0, %s219
      %p221 = pneg %p38
      %p222 = pneg %p35
      %p223 = pneg %p59
      %p224 = pneg %p56
      %p225 = pneg %p80
      %p226 = pneg %p77
      %p227 = pneg %p101
      %p228 = pneg %p98
      %p229 = pneg %p122
      %p230 = pneg %p119
      %p231 = pneg %p143
      %p232 = pneg %p140
      %p233 = pneg %p169
      %p234 = pneg %p166
      %p235 = scmp.lt.s32.totalorder %s17, 1
      %s236 = scalar_select %p235, %s17, 1
      %s237 = smul.addr %s236, 2
      %s238 = scalar_lea.vmem %s6, %s237
      %p239 = scmp.lt.s32.totalorder %s17, 1
      %s240 = scalar_select %p239, %s17, 1
      %s241 = smul.addr %s240, 2
      %s242 = scalar_lea.vmem %s0, %s241
      %p243 = scmp.lt.s32.totalorder %s17, 1
      %s244 = scalar_select %p243, %s17, 1
      %s245 = smul.addr %s244, 2
      %s246 = scalar_lea.vmem %s6, %s245
      %v248 = vld [vmem:[%s242] sm:$0x3]
      %v249 = vunpack.c.l.bf16 %v248
      %v250 = vld [vmem:[%s1] sm:$0x1]
      %v252 = vlaneseq
      %v253 = vshrl.u32 %v252, 7
      %v254 = vsub.s32 0, %v253
      %v255 = vrot.slane %v250, %v254
      %v257 = vmul.f32 %v249, %v255
      %v258 = vld [vmem:[%s2] sm:$0x1]
      %v260 = vlaneseq
      %v261 = vshrl.u32 %v260, 7
      %v262 = vsub.s32 0, %v261
      %v263 = vrot.slane %v258, %v262
      %v265 = vadd.f32 %v257, %v263
      %v266 = vpack.c.bf16 %v265, %v265
      %v267 = vld [vmem:[%s3] sm:$0xf]
      %v268 = vld [vmem:[%s3 + $0x4] sm:$0xf]
      %v269 = vld [vmem:[%s3 + $0x8] sm:$0xf]
      %v270 = vld [vmem:[%s3 + $0xc] sm:$0xf]
      %v275 = vunpack.c.l.b16 %v267
      %v276 = vunpack.c.l.b16 %v268
      %v277 = vunpack.c.l.b16 %v269
      %v278 = vunpack.c.l.b16 %v270
      %v279 = vpack.c.b16 %v276, %v275
      %v280 = vpack.c.b16 %v278, %v277
      %vm283 = vcmask 261120
      %v285 = vsel %vm283, %v266, 0
      %287 = vmatprep.subr.bf16.mxu0 0
      %288 = vmatpush1.bf16.msra.mxu0 0
      %289 = vmatprep.subr.bf16.mxu0 0
      %290 = vmatpush1.bf16.msra.mxu0 0
      %291 = vmatprep.subr.bf16.mxu0 0
      %292 = vmatpush1.bf16.msra.mxu0 0
      %293 = vmatprep.subr.bf16.mxu0 0
      %294 = vmatpush1.bf16.msra.mxu0 0
      %295 = vmatprep.subr.bf16.mxu0 0
      %296 = vmatpush1.bf16.msra.mxu0 0
      %297 = vmatprep.subr.bf16.mxu0 0
      %298 = vmatpush1.bf16.msra.mxu0 0
      %299 = vmatprep.subr.bf16.mxu0 0
      %300 = vmatpush1.bf16.msra.mxu0 %v280
      %301 = vmatprep.subr.bf16.mxu0 0
      %302 = vmatpush1.bf16.msra.mxu0 %v279
      %303 = vmatprep.subr.bf16.mxu0 0
      %304 = vmatpush2.bf16.msra.mxu0 0
      %305 = vmatprep.subr.bf16.mxu0 0
      %306 = vmatpush2.bf16.msra.mxu0 0
      %307 = vmatprep.subr.bf16.mxu0 0
      %308 = vmatpush2.bf16.msra.mxu0 0
      %309 = vmatprep.subr.bf16.mxu0 0
      %310 = vmatpush2.bf16.msra.mxu0 0
      %311 = vmatprep.subr.bf16.mxu0 0
      %312 = vmatpush2.bf16.msra.mxu0 0
      %313 = vmatprep.subr.bf16.mxu0 0
      %314 = vmatpush2.bf16.msra.mxu0 0
      %315 = vmatprep.subr.bf16.mxu0 0
      %316 = vmatpush2.bf16.msra.mxu0 0
      %317 = vmatprep.subr.bf16.mxu0 0
      %318 = vmatpush2.bf16.msra.mxu0 0
      %319 = vmatprep.mubr.bf16.mxu0 0
      %320 = vmatmul.mubr.bf16.gmra.mxu0 %v285
      %v321 = vpop.f32.mrf.mxu0
      %v322 = vadd.f32 0.0, %v321
      %v323 = vpop.f32.mrf.mxu0
      %v324 = vpop.f32.mrf.mxu0
      %v325 = vpop.f32.mrf.mxu0
      %326 = vdwg.mxu0
      %v327 = vpack.c.bf16 %v322, %v322
      %329 = vrot.lane.b32.xlu0 %v327, 96
      %v330 = vpop.permute.xlu0 %329
      %v332 = vsel %vm283, %v327, 0
      %v335 = vsel %vm283, %v330, 0
      %337 = vmatprep.subr.bf16.mxu0 0
      %338 = vmatpush1.bf16.xpose.msra.mxu0 0
      %339 = vmatprep.subr.bf16.mxu0 0
      %340 = vmatpush1.bf16.xpose.msra.mxu0 0
      %341 = vmatprep.subr.bf16.mxu0 0
      %342 = vmatpush1.bf16.xpose.msra.mxu0 0
      %343 = vmatprep.subr.bf16.mxu0 0
      %344 = vmatpush1.bf16.xpose.msra.mxu0 0
      %345 = vmatprep.subr.bf16.mxu0 0
      %346 = vmatpush1.bf16.xpose.msra.mxu0 0
      %347 = vmatprep.subr.bf16.mxu0 0
      %348 = vmatpush1.bf16.xpose.msra.mxu0 0
      %349 = vmatprep.subr.bf16.mxu0 0
      %350 = vmatpush1.bf16.xpose.msra.mxu0 0
      %351 = vmatprep.subr.bf16.mxu0 0
      %352 = vmatpush1.bf16.xpose.msra.mxu0 %v335
      %353 = vmatprep.subr.bf16.mxu0 0
      %354 = vmatpush2.bf16.xpose.msra.mxu0 0
      %355 = vmatprep.subr.bf16.mxu0 0
      %356 = vmatpush2.bf16.xpose.msra.mxu0 0
      %357 = vmatprep.subr.bf16.mxu0 0
      %358 = vmatpush2.bf16.xpose.msra.mxu0 0
      %359 = vmatprep.subr.bf16.mxu0 0
      %360 = vmatpush2.bf16.xpose.msra.mxu0 0
      %361 = vmatprep.subr.bf16.mxu0 0
      %362 = vmatpush2.bf16.xpose.msra.mxu0 0
      %363 = vmatprep.subr.bf16.mxu0 0
      %364 = vmatpush2.bf16.xpose.msra.mxu0 0
      %365 = vmatprep.subr.bf16.mxu0 0
      %366 = vmatpush2.bf16.xpose.msra.mxu0 0
      %367 = vmatprep.subr.bf16.mxu0 0
      %368 = vmatpush2.bf16.xpose.msra.mxu0 0
      %369 = vmatprep.mubr.bf16.mxu0 0
      %370 = vmatmul.mubr.bf16.gmra.mxu0 %v332
      %v371 = vpop.f32.mrf.mxu0
      %v372 = vadd.f32 0.0, %v371
      %v373 = vpop.f32.mrf.mxu0
      %v374 = vpop.f32.mrf.mxu0
      %v375 = vpop.f32.mrf.mxu0
      %376 = vdwg.mxu0
      %v377 = vmul.f32 %v372, 0.17677669
      %vm378 = vcmask 27648
      %v379 = vsel %vm378, %v377, -inf
      %380 = vmax.xlane.f32.xlu0 %v379
      %v381 = vpop.xlane.xlu0 %380
      %v382 = vsub.f32 %v377, %v381
      %v383 = vmul.f32 %v382, 1.442695
      %v384 = vpow.pop %v383
      %v385 = vsel %vm378, %v384, 0.0
      %386 = vadd.xlane.f32.xlu0 %v385
      %v387 = vpop.xlane.xlu0 %386
      %v388 = vrcp.pop %v387
      %v389 = vmul.f32 %v384, %v388
      %v390 = vpack.c.bf16 %v389, %v389
      %391 = vrot.lane.b32.xlu0 %v327, 64
      %v392 = vpop.permute.xlu0 %391
      %vm393 = vcmask 31744
      %v395 = vsel %vm393, %v390, 0
      %vm397 = vcmask 1041408
      %v399 = vsel %vm397, %v392, 0
      %401 = vmatprep.subr.bf16.mxu0 0
      %402 = vmatpush1.bf16.msra.mxu0 0
      %403 = vmatprep.subr.bf16.mxu0 0
      %404 = vmatpush1.bf16.msra.mxu0 0
      %405 = vmatprep.subr.bf16.mxu0 0
      %406 = vmatpush1.bf16.msra.mxu0 0
      %407 = vmatprep.subr.bf16.mxu0 0
      %408 = vmatpush1.bf16.msra.mxu0 0
      %409 = vmatprep.subr.bf16.mxu0 0
      %410 = vmatpush1.bf16.msra.mxu0 0
      %411 = vmatprep.subr.bf16.mxu0 0
      %412 = vmatpush1.bf16.msra.mxu0 0
      %413 = vmatprep.subr.bf16.mxu0 0
      %414 = vmatpush1.bf16.msra.mxu0 0
      %415 = vmatprep.subr.bf16.mxu0 0
      %416 = vmatpush1.bf16.msra.mxu0 %v399
      %417 = vmatprep.subr.bf16.mxu0 0
      %418 = vmatpush2.bf16.msra.mxu0 0
      %419 = vmatprep.subr.bf16.mxu0 0
      %420 = vmatpush2.bf16.msra.mxu0 0
      %421 = vmatprep.subr.bf16.mxu0 0
      %422 = vmatpush2.bf16.msra.mxu0 0
      %423 = vmatprep.subr.bf16.mxu0 0
      %424 = vmatpush2.bf16.msra.mxu0 0
      %425 = vmatprep.subr.bf16.mxu0 0
      %426 = vmatpush2.bf16.msra.mxu0 0
      %427 = vmatprep.subr.bf16.mxu0 0
      %428 = vmatpush2.bf16.msra.mxu0 0
      %429 = vmatprep.subr.bf16.mxu0 0
      %430 = vmatpush2.bf16.msra.mxu0 0
      %431 = vmatprep.subr.bf16.mxu0 0
      %432 = vmatpush2.bf16.msra.mxu0 0
      %433 = vmatprep.mubr.bf16.mxu0 0
      %434 = vmatmul.mubr.bf16.gmra.mxu0 %v395
      %v435 = vpop.f32.mrf.mxu0
      %v436 = vadd.f32 0.0, %v435
      %v437 = vpop.f32.mrf.mxu0
      %v438 = vpop.f32.mrf.mxu0
      %v439 = vpop.f32.mrf.mxu0
      %440 = vdwg.mxu0
      %v441 = vpack.c.bf16 %v436, %v436
      %v442 = vld [vmem:[%s4] sm:$0xf]
      %v443 = vld [vmem:[%s4 + $0x4] sm:$0xf]
      %v444 = vld [vmem:[%s4 + $0x8] sm:$0xf]
      %v445 = vld [vmem:[%s4 + $0xc] sm:$0xf]
      %v450 = vunpack.c.l.b16 %v442
      %v451 = vunpack.c.l.b16 %v443
      %v452 = vunpack.c.l.b16 %v444
      %v453 = vunpack.c.l.b16 %v445
      %v454 = vpack.c.b16 %v451, %v450
      %v455 = vpack.c.b16 %v453, %v452
      %v459 = vsel %vm283, %v441, 0
      %461 = vmatprep.subr.bf16.mxu0 0
      %462 = vmatpush1.bf16.msra.mxu0 0
      %463 = vmatprep.subr.bf16.mxu0 0
      %464 = vmatpush1.bf16.msra.mxu0 0
      %465 = vmatprep.subr.bf16.mxu0 0
      %466 = vmatpush1.bf16.msra.mxu0 0
      %467 = vmatprep.subr.bf16.mxu0 0
      %468 = vmatpush1.bf16.msra.mxu0 0
      %469 = vmatprep.subr.bf16.mxu0 0
      %470 = vmatpush1.bf16.msra.mxu0 0
      %471 = vmatprep.subr.bf16.mxu0 0
      %472 = vmatpush1.bf16.msra.mxu0 0
      %473 = vmatprep.subr.bf16.mxu0 0
      %474 = vmatpush1.bf16.msra.mxu0 %v455
      %475 = vmatprep.subr.bf16.mxu0 0
      %476 = vmatpush1.bf16.msra.mxu0 %v454
      %477 = vmatprep.subr.bf16.mxu0 0
      %478 = vmatpush2.bf16.msra.mxu0 0
      %479 = vmatprep.subr.bf16.mxu0 0
      %480 = vmatpush2.bf16.msra.mxu0 0
      %481 = vmatprep.subr.bf16.mxu0 0
      %482 = vmatpush2.bf16.msra.mxu0 0
      %483 = vmatprep.subr.bf16.mxu0 0
      %484 = vmatpush2.bf16.msra.mxu0 0
      %485 = vmatprep.subr.bf16.mxu0 0
      %486 = vmatpush2.bf16.msra.mxu0 0
      %487 = vmatprep.subr.bf16.mxu0 0
      %488 = vmatpush2.bf16.msra.mxu0 0
      %489 = vmatprep.subr.bf16.mxu0 0
      %490 = vmatpush2.bf16.msra.mxu0 0
      %491 = vmatprep.subr.bf16.mxu0 0
      %492 = vmatpush2.bf16.msra.mxu0 0
      %493 = vmatprep.mubr.bf16.mxu0 0
      %494 = vmatmul.mubr.bf16.gmra.mxu0 %v459
      %v495 = vpop.f32.mrf.mxu0
      %v496 = vadd.f32 0.0, %v495
      %v497 = vpop.f32.mrf.mxu0
      %v498 = vpop.f32.mrf.mxu0
      %v499 = vpop.f32.mrf.mxu0
      %500 = vdwg.mxu0
      %v501 = vadd.f32 %v249, %v496
      %v502 = vld [vmem:[%s5] sm:$0x1]
      %v504 = vlaneseq
      %v505 = vshrl.u32 %v504, 7
      %v506 = vsub.s32 0, %v505
      %v507 = vrot.slane %v502, %v506
      %v509 = vadd.f32 %v501, %v507
      %v510 = vpack.c.bf16 %v509, %v509
      %vm511 = vcmask 254976
      %512 = vst.msk [vmem:[%s246] sm:$0x3] %vm511, %v510
      %p513 = scmp.lt.s32.totalorder %s17, 1
      %s514 = scalar_select %p513, %s17, 1
      %s515 = smul.addr %s514, 2
      %s516 = scalar_lea.vmem %s6, %s515
      // Predicated region
      $region45: #{resnet_body_forward.34} parent=43 // pred_check
        %p517 = pneg %p166
      $region46: #{resnet_body_forward.34} parent=43 // pred_check_branch
        %519 = sbr.rel (%p517) target = $region48
      $region47: #{resnet_body_forward.34} parent=43 // pred_region
        _
      $region48: #{resnet_body_forward.34} parent=43 // pred_fallthru
        _
    $region44: #{resnet_body_forward.34} parent=5 // pred_fallthru
      _
    %p520 = scmp.le.s32.totalorder 2, %s12
    // Predicated region
    $region49: #{resnet_body_forward.34} parent=5 // pred_check
      %p521 = pneg %p520
    $region50: #{resnet_body_forward.34} parent=5 // pred_check_branch
      %523 = sbr.rel (%p521) target = $region52
    $region51: #{resnet_body_forward.34} parent=5 // pred_region
      %s524 = ssub.s32 %s12, 2
      // Predicated region
      $region53: #{resnet_body_forward.34} parent=51 // pred_check
        %p525 = pneg %p172
      $region54: #{resnet_body_forward.34} parent=51 // pred_check_branch
        %527 = sbr.rel (%p525) target = $region56
      $region55: #{resnet_body_forward.34} parent=51 // pred_region
        %p528 = scmp.lt.s32.totalorder %s18, 1
        %s529 = scalar_select %p528, %s18, 1
        %s530 = smul.addr %s529, 2
        %s531 = scalar_lea.vmem %s6, %s530
      $region56: #{resnet_body_forward.34} parent=51 // pred_fallthru
        _
    $region52: #{resnet_body_forward.34} parent=5 // pred_fallthru
      _
  $region6: #{resnet_body_forward.34} parent=0 // loop_footer
    %s16 = sadd.s32 1, %s12
  $region7: #{resnet_body_forward.34} parent=0 // loop_footer_branch
    %11 = sbr.rel target = $region3
  $region8: #{resnet_body_forward.34} parent=0 // loop_exit
    _

</llo_original>
